<compile_context>
chip_gen: v7x
topology: tpu7x:2x2x1
jax: 0.10.0
libtpu: 0.0.40
codegen_flags: <defaults>
</compile_context>

<pallas_src>
import functools

import jax
import jax.numpy as jnp
import numpy as np
from jax.experimental import pallas as pl
from jax.experimental.pallas import tpu as pltpu


def _pool_matrix(h_in, w_in, in_stride, in_len, out_stride, out_len, out_off):
    """Constant matrix: per-sample wide-flat image (row stride `in_stride`) ->
    2x2-average-pooled wide-flat image (row stride `out_stride`) written at
    offset (out_off, out_off).  out_off=1 rebuilds the zero border needed by a
    padding=1 conv (unreferenced output columns stay exactly zero)."""
    m = np.zeros((in_len, out_len), np.float32)
    for i in range(h_in // 2):
        for j in range(w_in // 2):
            q = (out_off + i) * out_stride + (out_off + j)
            for di in (0, 1):
                for dj in (0, 1):
                    m[(2 * i + di) * in_stride + (2 * j + dj), q] = 0.25
    return jnp.asarray(m)


def motion_kernel(x_ref, m1_ref, m2_ref, w_ref, b_ref, p1_ref, p2_ref, out_ref,
                  patch_ref, a1_ref, g1_ref, a3_ref, a5_ref, g2_ref,
                  *, NB, Cp, Wp1, SEG1, Wp2, SEG2, L1, L2, L3, L4, LP1, LP2):
    """One grid step = NB lane-concatenated samples.

    Wide-flat layout: channels on sublanes (padded to Cp), per-sample padded
    image flattened on lanes with row stride Wp* and per-sample segment SEG*.
    A conv output at lane q corresponds to the 3x3 window whose top-left corner
    sits at lane q of the source buffer; junk lanes (pad columns / cross-sample
    windows) are finite and are discarded by the masks / pool matrices."""

    def conv3x3_tanh(src_ref, idx, stride, lout):
        # im2col: 9 sublane-aligned tap copies into the shared patch scratch,
        # then one (Cp, 9*Cp) x (9*Cp, lout) MXU matmul.  Weights/bias sliced
        # once per conv from the consolidated slabs.
        for t in range(9):
            kh, kw = divmod(t, 3)
            patch_ref[pl.ds(t * Cp, Cp), pl.ds(0, lout)] = (
                src_ref[:, pl.ds(kh * stride + kw, lout)])
        w = w_ref[pl.ds(idx * Cp, Cp), :]           # (Cp, 9*Cp)
        b = b_ref[pl.ds(idx * Cp, Cp), :]           # (Cp, 1)
        y = jnp.dot(w, patch_ref[:, pl.ds(0, lout)],
                    preferred_element_type=jnp.float32) + b
        return jnp.tanh(y)

    # ---- stage 1: conv1 (pad=1) -> conv2 (valid) -> *mask1 -> AvgPool2d(2) ----
    a1_ref[...] = conv3x3_tanh(x_ref, 0, Wp1, L1)                      # M1
    g1_ref[...] = conv3x3_tanh(a1_ref, 1, Wp1, L2) * m1_ref[:, pl.ds(0, L2)]
    p1 = p1_ref[...]
    for n in range(NB):                                                # M3 (+ re-pad)
        a3_ref[:, pl.ds(n * SEG2, SEG2)] = jnp.dot(
            g1_ref[:, pl.ds(n * SEG1, LP1)], p1,
            preferred_element_type=jnp.float32)
    # Dropout2d(0.5) is identity at inference.

    # ---- stage 2: conv3 (pad=1) -> conv4 (valid) -> *mask2 -> AvgPool2d(2) ----
    a5_ref[...] = conv3x3_tanh(a3_ref, 2, Wp2, L3)                     # M5
    g2_ref[...] = conv3x3_tanh(a5_ref, 3, Wp2, L4) * m2_ref[:, pl.ds(0, L4)]
    p2 = p2_ref[...]
    out_ref[...] = jnp.concatenate(                                    # M7 (= M8)
        [jnp.dot(g2_ref[:, pl.ds(n * SEG2, LP2)], p2,
                 preferred_element_type=jnp.float32)
         for n in range(NB)], axis=-1)


def motion_model_forward(x_nchw, mask1_nchw, mask2_nchw, params, *, nb=None):
    """PyTorch-layout entry: x (N,Cin,H,W), mask1 (N,1,H-2,W-2),
    mask2 (N,1,(H-2)//2-2,(W-2)//2-2).  Weights are HWIO, biases 1-D."""
    w1, b1, w2, b2, w3, b3, w4, b4 = params
    x = x_nchw.astype(jnp.float32)
    m1 = mask1_nchw.astype(jnp.float32)
    m2 = mask2_nchw.astype(jnp.float32)

    N, Cin, H, W = x.shape
    C = w1.shape[-1]
    C2 = w3.shape[-1]
    H2, W2 = H - 2, W - 2
    assert H2 % 2 == 0 and W2 % 2 == 0, "conv2 output must be even for AvgPool2d(2)"
    Hq, Wq = H2 // 2, W2 // 2
    assert (Hq - 2) % 2 == 0 and (Wq - 2) % 2 == 0, "conv4 output must be even for AvgPool2d(2)"
    Hout, Wout = (Hq - 2) // 2, (Wq - 2) // 2
    HWout = Hout * Wout

    # Batch tiling: NB samples per grid step (>=2 grid steps keeps both v7x TCs busy).
    if nb is None:
        nb = max(1, min(8, N // 2 if N >= 2 else N))
    nb = min(nb, N)
    while N % nb:
        nb -= 1
    G = N // nb

    # Uniform channel padding to a multiple of 8 -> every im2col tap copy is a
    # clean 8-sublane-aligned block copy and every conv shares one weight-slab shape.
    Cp = ((max(Cin, C, C2) + 7) // 8) * 8

    Wp1 = W + 2
    SEG1 = (H + 2) * Wp1                 # per-sample segment, stage 1 (padded image)
    Wp2 = Wq + 2
    SEG2 = (Hq + 2) * Wp2                # per-sample segment, stage 2 (padded pooled image)
    L1 = nb * SEG1 - (2 * Wp1 + 2)       # conv1 output length (batched, wide-flat)
    L2 = L1 - (2 * Wp1 + 2)              # conv2 output length
    L3 = nb * SEG2 - (2 * Wp2 + 2)       # conv3 output length
    L4 = L3 - (2 * Wp2 + 2)              # conv4 output length
    LP1 = (H2 - 1) * Wp1 + W2            # pool1 per-sample input length
    LP2 = (Hq - 3) * Wp2 + (Wq - 2)      # pool2 per-sample input length

    # ---- wrapper-side layout plumbing (pure pad/reshape/transpose, fused by XLA) ----
    def to_wide(a, c_pad, row_pad, col_pad, seg):
        n_, c_, h_, w_ = a.shape
        a = jnp.pad(a, ((0, 0), (0, c_pad - c_), row_pad, col_pad))
        a = a.reshape(N, c_pad, seg)
        return a.reshape(G, nb, c_pad, seg).transpose(0, 2, 1, 3).reshape(G, c_pad, nb * seg)

    x_wide = to_wide(x, Cp, (1, 1), (1, 1), SEG1)     # zero-padded conv1 input
    m1_wide = to_wide(m1, 1, (0, 4), (0, 4), SEG1)    # mask1 at conv2-output lanes
    m2_wide = to_wide(m2, 1, (0, 4), (0, 4), SEG2)    # mask2 at conv4-output lanes

    # Weight repack: HWIO (3,3,Ci,Co) -> (Cp, 9*Cp), row order (kh,kw,ci), padded
    # rows/cols zero (so padded output channels are exactly tanh(0)=0, which keeps
    # the padded input channels of the next conv consistent).  Biases -> (Cp,1).
    def wpack(w):
        ci, co = int(w.shape[2]), int(w.shape[3])
        wp = jnp.zeros((9, Cp, Cp), jnp.float32)
        wp = wp.at[:, :ci, :co].set(jnp.asarray(w, jnp.float32).reshape(9, ci, co))
        return wp.transpose(2, 0, 1).reshape(Cp, 9 * Cp)

    def bpack(b):
        bp = jnp.zeros((Cp,), jnp.float32).at[:b.shape[0]].set(jnp.asarray(b, jnp.float32))
        return bp.reshape(Cp, 1)

    w_all = jnp.concatenate([wpack(w1), wpack(w2), wpack(w3), wpack(w4)], axis=0)  # (4*Cp, 9*Cp)
    b_all = jnp.concatenate([bpack(b1), bpack(b2), bpack(b3), bpack(b4)], axis=0)  # (4*Cp, 1)

    p1 = _pool_matrix(H2, W2, Wp1, LP1, Wp2, SEG2, 1)          # pool1 + conv3 re-pad
    p2 = _pool_matrix(Hq - 2, Wq - 2, Wp2, LP2, Wout, HWout, 0)  # pool2 -> dense output

    def bcast_spec(shape):
        zeros = (0,) * len(shape)
        return pl.BlockSpec(shape, lambda n: zeros)

    kernel = functools.partial(
        motion_kernel, NB=nb, Cp=Cp, Wp1=Wp1, SEG1=SEG1, Wp2=Wp2, SEG2=SEG2,
        L1=L1, L2=L2, L3=L3, L4=L4, LP1=LP1, LP2=LP2)

    out_wide = pl.pallas_call(
        kernel,
        grid=(G,),
        in_specs=[
            pl.BlockSpec((None, Cp, nb * SEG1), lambda n: (n, 0, 0)),
            pl.BlockSpec((None, 1, nb * SEG1), lambda n: (n, 0, 0)),
            pl.BlockSpec((None, 1, nb * SEG2), lambda n: (n, 0, 0)),
            bcast_spec((4 * Cp, 9 * Cp)),
            bcast_spec((4 * Cp, 1)),
            bcast_spec((LP1, SEG2)),
            bcast_spec((LP2, HWout)),
        ],
        out_specs=pl.BlockSpec((None, Cp, nb * HWout), lambda n: (n, 0, 0)),
        out_shape=jax.ShapeDtypeStruct((G, Cp, nb * HWout), jnp.float32),
        scratch_shapes=[
            pltpu.VMEM((9 * Cp, L1), jnp.float32),      # shared im2col patch matrix
            pltpu.VMEM((Cp, L1), jnp.float32),          # M1
            pltpu.VMEM((Cp, L2), jnp.float32),          # g1 = M2 * mask1
            pltpu.VMEM((Cp, nb * SEG2), jnp.float32),   # M3 pooled + re-padded
            pltpu.VMEM((Cp, L3), jnp.float32),          # M5
            pltpu.VMEM((Cp, L4), jnp.float32),          # g2 = M6 * mask2
        ],
        compiler_params=pltpu.CompilerParams(dimension_semantics=("parallel",)),
    )(x_wide, m1_wide, m2_wide, w_all, b_all, p1, p2)

    # (G, Cp, nb*Hout*Wout) -> PyTorch NCHW (N, C2, Hout, Wout): wrapper-side plumbing.
    out = out_wide.reshape(G, Cp, nb, Hout, Wout).transpose(0, 2, 1, 3, 4)
    return out.reshape(N, Cp, Hout, Wout)[:, :C2]


def forward_ref(x_nchw, mask1_nchw, mask2_nchw, params):
    """Pure-JAX reference (XLA convs) for correctness checking."""
    w1, b1, w2, b2, w3, b3, w4, b4 = params
    x = jnp.transpose(x_nchw, (0, 2, 3, 1))
    m1 = jnp.transpose(mask1_nchw, (0, 2, 3, 1))
    m2 = jnp.transpose(mask2_nchw, (0, 2, 3, 1))

    def conv(a, w, b, pad):
        y = jax.lax.conv_general_dilated(
            a, w, (1, 1), pad, dimension_numbers=('NHWC', 'HWIO', 'NHWC'),
            precision=jax.lax.Precision.HIGHEST)
        return y + b.reshape(1, 1, 1, -1)

    def pool(a):
        n, h, w, c = a.shape
        return a.reshape(n, h // 2, 2, w // 2, 2, c).mean(axis=(2, 4))

    M1 = jnp.tanh(conv(x, w1, b1, 'SAME'))
    M2 = jnp.tanh(conv(M1, w2, b2, 'VALID'))
    M3 = pool(M2 * m1)
    M5 = jnp.tanh(conv(M3, w3, b3, 'SAME'))
    M6 = jnp.tanh(conv(M5, w4, b4, 'VALID'))
    out = pool(M6 * m2)
    return jnp.transpose(out, (0, 3, 1, 2))


if __name__ == "__main__":
    key = jax.random.PRNGKey(0)
    ks = jax.random.split(key, 11)

    N, Cin, H, W = 8, 3, 18, 18      # conv2 out 16x16 -> pool 8x8 -> conv4 out 6x6 -> pool 3x3
    Cout = 4                          # out_channels; conv3/conv4 use 2*Cout = 8
    NB = 4                            # 4 samples per grid step -> 2 grid steps (both v7x TCs)

    x = jax.random.normal(ks[0], (N, Cin, H, W), jnp.float32)
    mask1 = jax.random.uniform(ks[1], (N, 1, H - 2, W - 2), jnp.float32)
    mask2 = jax.random.uniform(ks[2], (N, 1, (H - 2) // 2 - 2, (W - 2) // 2 - 2), jnp.float32)

    def winit(k, shape):
        return 0.2 * jax.random.normal(k, shape, jnp.float32)

    params = (
        winit(ks[3], (3, 3, Cin, Cout)),          winit(ks[4], (Cout,)),
        winit(ks[5], (3, 3, Cout, Cout)),         winit(ks[6], (Cout,)),
        winit(ks[7], (3, 3, Cout, 2 * Cout)),     winit(ks[8], (2 * Cout,)),
        winit(ks[9], (3, 3, 2 * Cout, 2 * Cout)), winit(ks[10], (2 * Cout,)),
    )

    fwd = jax.jit(functools.partial(motion_model_forward, nb=NB))
    out = jax.block_until_ready(fwd(x, mask1, mask2, params))
    ref = jax.block_until_ready(forward_ref(x, mask1, mask2, params))

    assert out.shape == (N, 2 * Cout, 3, 3), out.shape
    max_err = float(jnp.max(jnp.abs(out - ref)))
    assert jnp.allclose(out, ref, atol=1e-3, rtol=1e-3), max_err
    print("KERNEL_OK")
</pallas_src>

<mosaic_0001>
module attributes {stable_mosaic.version = 11 : i64} {
  func.func @motion_kernel(%arg0: i32, %arg1: memref<1x8x1600xf32, #tpu.memory_space<vmem>>, %arg2: memref<1x1x1600xf32, #tpu.memory_space<vmem>>, %arg3: memref<1x1x400xf32, #tpu.memory_space<vmem>>, %arg4: memref<32x72xf32, #tpu.memory_space<vmem>>, %arg5: memref<32x1xf32, #tpu.memory_space<vmem>>, %arg6: memref<316x100xf32, #tpu.memory_space<vmem>>, %arg7: memref<56x9xf32, #tpu.memory_space<vmem>>, %arg8: memref<1x8x36xf32, #tpu.memory_space<vmem>>, %arg9: memref<72x1558xf32, #tpu.memory_space<vmem>>, %arg10: memref<8x1558xf32, #tpu.memory_space<vmem>>, %arg11: memref<8x1516xf32, #tpu.memory_space<vmem>>, %arg12: memref<8x400xf32, #tpu.memory_space<vmem>>, %arg13: memref<8x378xf32, #tpu.memory_space<vmem>>, %arg14: memref<8x356xf32, #tpu.memory_space<vmem>>) attributes {dimension_semantics = [#tpu.dimension_semantics<parallel>], iteration_bounds = array<i64: 2>, scalar_prefetch = 0 : i64, scratch_operands = 6 : i64, tpu.core_type = #tpu.core_type<tc>, window_params = [{transform_indices = @transform_0, window_bounds = array<i64: 1, 8, 1600>}, {transform_indices = @transform_1, window_bounds = array<i64: 1, 1, 1600>}, {transform_indices = @transform_2, window_bounds = array<i64: 1, 1, 400>}, {pipeline_mode = #tpu.pipeline_mode<synchronous>, transform_indices = @transform_3, window_bounds = array<i64: 32, 72>}, {pipeline_mode = #tpu.pipeline_mode<synchronous>, transform_indices = @transform_4, window_bounds = array<i64: 32, 1>}, {pipeline_mode = #tpu.pipeline_mode<synchronous>, transform_indices = @transform_5, window_bounds = array<i64: 316, 100>}, {pipeline_mode = #tpu.pipeline_mode<synchronous>, transform_indices = @transform_6, window_bounds = array<i64: 56, 9>}, {transform_indices = @transform_7, window_bounds = array<i64: 1, 8, 36>}]} {
    %c0 = arith.constant 0 : index
    %c0_0 = arith.constant 0 : index
    %c0_1 = arith.constant 0 : index
    %0 = vector.load %arg1[%c0, %c0_0, %c0_1] : memref<1x8x1600xf32, #tpu.memory_space<vmem>>, vector<1x8x1558xf32>
    %1 = vector.shape_cast %0 : vector<1x8x1558xf32> to vector<8x1558xf32>
    %c0_2 = arith.constant 0 : index
    %c0_3 = arith.constant 0 : index
    %2 = vector.load %arg9[%c0_2, %c0_3] : memref<72x1558xf32, #tpu.memory_space<vmem>>, vector<8x1558xf32>
    tpu.vector_store %arg9[%c0_2, %c0_3], %1 {strides = array<i32>} : memref<72x1558xf32, #tpu.memory_space<vmem>>, vector<8x1558xf32>,
    %c0_4 = arith.constant 0 : index
    %c0_5 = arith.constant 0 : index
    %c1 = arith.constant 1 : index
    %3 = vector.load %arg1[%c0_4, %c0_5, %c1] : memref<1x8x1600xf32, #tpu.memory_space<vmem>>, vector<1x8x1558xf32>
    %4 = vector.shape_cast %3 : vector<1x8x1558xf32> to vector<8x1558xf32>
    %c8 = arith.constant 8 : index
    %c0_6 = arith.constant 0 : index
    %5 = vector.load %arg9[%c8, %c0_6] : memref<72x1558xf32, #tpu.memory_space<vmem>>, vector<8x1558xf32>
    tpu.vector_store %arg9[%c8, %c0_6], %4 {strides = array<i32>} : memref<72x1558xf32, #tpu.memory_space<vmem>>, vector<8x1558xf32>,
    %c0_7 = arith.constant 0 : index
    %c0_8 = arith.constant 0 : index
    %c2 = arith.constant 2 : index
    %6 = vector.load %arg1[%c0_7, %c0_8, %c2] : memref<1x8x1600xf32, #tpu.memory_space<vmem>>, vector<1x8x1558xf32>
    %7 = vector.shape_cast %6 : vector<1x8x1558xf32> to vector<8x1558xf32>
    %c16 = arith.constant 16 : index
    %c0_9 = arith.constant 0 : index
    %8 = vector.load %arg9[%c16, %c0_9] : memref<72x1558xf32, #tpu.memory_space<vmem>>, vector<8x1558xf32>
    tpu.vector_store %arg9[%c16, %c0_9], %7 {strides = array<i32>} : memref<72x1558xf32, #tpu.memory_space<vmem>>, vector<8x1558xf32>,
    %c0_10 = arith.constant 0 : index
    %c0_11 = arith.constant 0 : index
    %c20 = arith.constant 20 : index
    %9 = vector.load %arg1[%c0_10, %c0_11, %c20] : memref<1x8x1600xf32, #tpu.memory_space<vmem>>, vector<1x8x1558xf32>
    %10 = vector.shape_cast %9 : vector<1x8x1558xf32> to vector<8x1558xf32>
    %c24 = arith.constant 24 : index
    %c0_12 = arith.constant 0 : index
    %11 = vector.load %arg9[%c24, %c0_12] : memref<72x1558xf32, #tpu.memory_space<vmem>>, vector<8x1558xf32>
    tpu.vector_store %arg9[%c24, %c0_12], %10 {strides = array<i32>} : memref<72x1558xf32, #tpu.memory_space<vmem>>, vector<8x1558xf32>,
    %c0_13 = arith.constant 0 : index
    %c0_14 = arith.constant 0 : index
    %c21 = arith.constant 21 : index
    %12 = vector.load %arg1[%c0_13, %c0_14, %c21] : memref<1x8x1600xf32, #tpu.memory_space<vmem>>, vector<1x8x1558xf32>
    %13 = vector.shape_cast %12 : vector<1x8x1558xf32> to vector<8x1558xf32>
    %c32 = arith.constant 32 : index
    %c0_15 = arith.constant 0 : index
    %14 = vector.load %arg9[%c32, %c0_15] : memref<72x1558xf32, #tpu.memory_space<vmem>>, vector<8x1558xf32>
    tpu.vector_store %arg9[%c32, %c0_15], %13 {strides = array<i32>} : memref<72x1558xf32, #tpu.memory_space<vmem>>, vector<8x1558xf32>,
    %c0_16 = arith.constant 0 : index
    %c0_17 = arith.constant 0 : index
    %c22 = arith.constant 22 : index
    %15 = vector.load %arg1[%c0_16, %c0_17, %c22] : memref<1x8x1600xf32, #tpu.memory_space<vmem>>, vector<1x8x1558xf32>
    %16 = vector.shape_cast %15 : vector<1x8x1558xf32> to vector<8x1558xf32>
    %c40 = arith.constant 40 : index
    %c0_18 = arith.constant 0 : index
    %17 = vector.load %arg9[%c40, %c0_18] : memref<72x1558xf32, #tpu.memory_space<vmem>>, vector<8x1558xf32>
    tpu.vector_store %arg9[%c40, %c0_18], %16 {strides = array<i32>} : memref<72x1558xf32, #tpu.memory_space<vmem>>, vector<8x1558xf32>,
    %c0_19 = arith.constant 0 : index
    %c0_20 = arith.constant 0 : index
    %c40_21 = arith.constant 40 : index
    %18 = vector.load %arg1[%c0_19, %c0_20, %c40_21] : memref<1x8x1600xf32, #tpu.memory_space<vmem>>, vector<1x8x1558xf32>
    %19 = vector.shape_cast %18 : vector<1x8x1558xf32> to vector<8x1558xf32>
    %c48 = arith.constant 48 : index
    %c0_22 = arith.constant 0 : index
    %20 = vector.load %arg9[%c48, %c0_22] : memref<72x1558xf32, #tpu.memory_space<vmem>>, vector<8x1558xf32>
    tpu.vector_store %arg9[%c48, %c0_22], %19 {strides = array<i32>} : memref<72x1558xf32, #tpu.memory_space<vmem>>, vector<8x1558xf32>,
    %c0_23 = arith.constant 0 : index
    %c0_24 = arith.constant 0 : index
    %c41 = arith.constant 41 : index
    %21 = vector.load %arg1[%c0_23, %c0_24, %c41] : memref<1x8x1600xf32, #tpu.memory_space<vmem>>, vector<1x8x1558xf32>
    %22 = vector.shape_cast %21 : vector<1x8x1558xf32> to vector<8x1558xf32>
    %c56 = arith.constant 56 : index
    %c0_25 = arith.constant 0 : index
    %23 = vector.load %arg9[%c56, %c0_25] : memref<72x1558xf32, #tpu.memory_space<vmem>>, vector<8x1558xf32>
    tpu.vector_store %arg9[%c56, %c0_25], %22 {strides = array<i32>} : memref<72x1558xf32, #tpu.memory_space<vmem>>, vector<8x1558xf32>,
    %c0_26 = arith.constant 0 : index
    %c0_27 = arith.constant 0 : index
    %c42 = arith.constant 42 : index
    %24 = vector.load %arg1[%c0_26, %c0_27, %c42] : memref<1x8x1600xf32, #tpu.memory_space<vmem>>, vector<1x8x1558xf32>
    %25 = vector.shape_cast %24 : vector<1x8x1558xf32> to vector<8x1558xf32>
    %c64 = arith.constant 64 : index
    %c0_28 = arith.constant 0 : index
    %26 = vector.load %arg9[%c64, %c0_28] : memref<72x1558xf32, #tpu.memory_space<vmem>>, vector<8x1558xf32>
    tpu.vector_store %arg9[%c64, %c0_28], %25 {strides = array<i32>} : memref<72x1558xf32, #tpu.memory_space<vmem>>, vector<8x1558xf32>,
    %c0_29 = arith.constant 0 : index
    %c0_30 = arith.constant 0 : index
    %27 = vector.load %arg4[%c0_29, %c0_30] : memref<32x72xf32, #tpu.memory_space<vmem>>, vector<8x72xf32>
    %c0_31 = arith.constant 0 : index
    %c0_32 = arith.constant 0 : index
    %28 = vector.load %arg5[%c0_31, %c0_32] : memref<32x1xf32, #tpu.memory_space<vmem>>, vector<8x1xf32>
    %c0_33 = arith.constant 0 : index
    %c0_34 = arith.constant 0 : index
    %29 = vector.load %arg9[%c0_33, %c0_34] : memref<72x1558xf32, #tpu.memory_space<vmem>>, vector<72x1558xf32>
    %cst = arith.constant dense<0.000000e+00> : vector<8x1558xf32>
    %30 = tpu.matmul %27, %29, %cst {dimension_numbers = #tpu.dot_dimension_numbers<[1], [0], [0], [1], [0, 0, 1, 1], [], []>} : vector<8x72xf32>, vector<72x1558xf32>, vector<8x1558xf32> -> vector<8x1558xf32>
    %31 = vector.broadcast %28 : vector<8x1xf32> to vector<8x1558xf32>
    %32 = arith.addf %30, %31 : vector<8x1558xf32>
    %33 = math.tanh %32 : vector<8x1558xf32>
    %c0_35 = arith.constant 0 : index
    %c0_36 = arith.constant 0 : index
    %34 = vector.load %arg10[%c0_35, %c0_36] : memref<8x1558xf32, #tpu.memory_space<vmem>>, vector<8x1558xf32>
    tpu.vector_store %arg10[%c0_35, %c0_36], %33 {strides = array<i32>} : memref<8x1558xf32, #tpu.memory_space<vmem>>, vector<8x1558xf32>,
    %c0_37 = arith.constant 0 : index
    %c0_38 = arith.constant 0 : index
    %35 = vector.load %arg10[%c0_37, %c0_38] : memref<8x1558xf32, #tpu.memory_space<vmem>>, vector<8x1516xf32>
    %c0_39 = arith.constant 0 : index
    %c0_40 = arith.constant 0 : index
    %36 = vector.load %arg9[%c0_39, %c0_40] : memref<72x1558xf32, #tpu.memory_space<vmem>>, vector<8x1516xf32>
    tpu.vector_store %arg9[%c0_39, %c0_40], %35 {strides = array<i32>} : memref<72x1558xf32, #tpu.memory_space<vmem>>, vector<8x1516xf32>,
    %c0_41 = arith.constant 0 : index
    %c1_42 = arith.constant 1 : index
    %37 = vector.load %arg10[%c0_41, %c1_42] : memref<8x1558xf32, #tpu.memory_space<vmem>>, vector<8x1516xf32>
    %c8_43 = arith.constant 8 : index
    %c0_44 = arith.constant 0 : index
    %38 = vector.load %arg9[%c8_43, %c0_44] : memref<72x1558xf32, #tpu.memory_space<vmem>>, vector<8x1516xf32>
    tpu.vector_store %arg9[%c8_43, %c0_44], %37 {strides = array<i32>} : memref<72x1558xf32, #tpu.memory_space<vmem>>, vector<8x1516xf32>,
    %c0_45 = arith.constant 0 : index
    %c2_46 = arith.constant 2 : index
    %39 = vector.load %arg10[%c0_45, %c2_46] : memref<8x1558xf32, #tpu.memory_space<vmem>>, vector<8x1516xf32>
    %c16_47 = arith.constant 16 : index
    %c0_48 = arith.constant 0 : index
    %40 = vector.load %arg9[%c16_47, %c0_48] : memref<72x1558xf32, #tpu.memory_space<vmem>>, vector<8x1516xf32>
    tpu.vector_store %arg9[%c16_47, %c0_48], %39 {strides = array<i32>} : memref<72x1558xf32, #tpu.memory_space<vmem>>, vector<8x1516xf32>,
    %c0_49 = arith.constant 0 : index
    %c20_50 = arith.constant 20 : index
    %41 = vector.load %arg10[%c0_49, %c20_50] : memref<8x1558xf32, #tpu.memory_space<vmem>>, vector<8x1516xf32>
    %c24_51 = arith.constant 24 : index
    %c0_52 = arith.constant 0 : index
    %42 = vector.load %arg9[%c24_51, %c0_52] : memref<72x1558xf32, #tpu.memory_space<vmem>>, vector<8x1516xf32>
    tpu.vector_store %arg9[%c24_51, %c0_52], %41 {strides = array<i32>} : memref<72x1558xf32, #tpu.memory_space<vmem>>, vector<8x1516xf32>,
    %c0_53 = arith.constant 0 : index
    %c21_54 = arith.constant 21 : index
    %43 = vector.load %arg10[%c0_53, %c21_54] : memref<8x1558xf32, #tpu.memory_space<vmem>>, vector<8x1516xf32>
    %c32_55 = arith.constant 32 : index
    %c0_56 = arith.constant 0 : index
    %44 = vector.load %arg9[%c32_55, %c0_56] : memref<72x1558xf32, #tpu.memory_space<vmem>>, vector<8x1516xf32>
    tpu.vector_store %arg9[%c32_55, %c0_56], %43 {strides = array<i32>} : memref<72x1558xf32, #tpu.memory_space<vmem>>, vector<8x1516xf32>,
    %c0_57 = arith.constant 0 : index
    %c22_58 = arith.constant 22 : index
    %45 = vector.load %arg10[%c0_57, %c22_58] : memref<8x1558xf32, #tpu.memory_space<vmem>>, vector<8x1516xf32>
    %c40_59 = arith.constant 40 : index
    %c0_60 = arith.constant 0 : index
    %46 = vector.load %arg9[%c40_59, %c0_60] : memref<72x1558xf32, #tpu.memory_space<vmem>>, vector<8x1516xf32>
    tpu.vector_store %arg9[%c40_59, %c0_60], %45 {strides = array<i32>} : memref<72x1558xf32, #tpu.memory_space<vmem>>, vector<8x1516xf32>,
    %c0_61 = arith.constant 0 : index
    %c40_62 = arith.constant 40 : index
    %47 = vector.load %arg10[%c0_61, %c40_62] : memref<8x1558xf32, #tpu.memory_space<vmem>>, vector<8x1516xf32>
    %c48_63 = arith.constant 48 : index
    %c0_64 = arith.constant 0 : index
    %48 = vector.load %arg9[%c48_63, %c0_64] : memref<72x1558xf32, #tpu.memory_space<vmem>>, vector<8x1516xf32>
    tpu.vector_store %arg9[%c48_63, %c0_64], %47 {strides = array<i32>} : memref<72x1558xf32, #tpu.memory_space<vmem>>, vector<8x1516xf32>,
    %c0_65 = arith.constant 0 : index
    %c41_66 = arith.constant 41 : index
    %49 = vector.load %arg10[%c0_65, %c41_66] : memref<8x1558xf32, #tpu.memory_space<vmem>>, vector<8x1516xf32>
    %c56_67 = arith.constant 56 : index
    %c0_68 = arith.constant 0 : index
    %50 = vector.load %arg9[%c56_67, %c0_68] : memref<72x1558xf32, #tpu.memory_space<vmem>>, vector<8x1516xf32>
    tpu.vector_store %arg9[%c56_67, %c0_68], %49 {strides = array<i32>} : memref<72x1558xf32, #tpu.memory_space<vmem>>, vector<8x1516xf32>,
    %c0_69 = arith.constant 0 : index
    %c42_70 = arith.constant 42 : index
    %51 = vector.load %arg10[%c0_69, %c42_70] : memref<8x1558xf32, #tpu.memory_space<vmem>>, vector<8x1516xf32>
    %c64_71 = arith.constant 64 : index
    %c0_72 = arith.constant 0 : index
    %52 = vector.load %arg9[%c64_71, %c0_72] : memref<72x1558xf32, #tpu.memory_space<vmem>>, vector<8x1516xf32>
    tpu.vector_store %arg9[%c64_71, %c0_72], %51 {strides = array<i32>} : memref<72x1558xf32, #tpu.memory_space<vmem>>, vector<8x1516xf32>,
    %c8_73 = arith.constant 8 : index
    %c0_74 = arith.constant 0 : index
    %53 = vector.load %arg4[%c8_73, %c0_74] : memref<32x72xf32, #tpu.memory_space<vmem>>, vector<8x72xf32>
    %c8_75 = arith.constant 8 : index
    %c0_76 = arith.constant 0 : index
    %54 = vector.load %arg5[%c8_75, %c0_76] : memref<32x1xf32, #tpu.memory_space<vmem>>, vector<8x1xf32>
    %c0_77 = arith.constant 0 : index
    %c0_78 = arith.constant 0 : index
    %55 = vector.load %arg9[%c0_77, %c0_78] : memref<72x1558xf32, #tpu.memory_space<vmem>>, vector<72x1516xf32>
    %cst_79 = arith.constant dense<0.000000e+00> : vector<8x1516xf32>
    %56 = tpu.matmul %53, %55, %cst_79 {dimension_numbers = #tpu.dot_dimension_numbers<[1], [0], [0], [1], [0, 0, 1, 1], [], []>} : vector<8x72xf32>, vector<72x1516xf32>, vector<8x1516xf32> -> vector<8x1516xf32>
    %57 = vector.broadcast %54 : vector<8x1xf32> to vector<8x1516xf32>
    %58 = arith.addf %56, %57 : vector<8x1516xf32>
    %59 = math.tanh %58 : vector<8x1516xf32>
    %c0_80 = arith.constant 0 : index
    %c0_81 = arith.constant 0 : index
    %c0_82 = arith.constant 0 : index
    %60 = vector.load %arg2[%c0_80, %c0_81, %c0_82] : memref<1x1x1600xf32, #tpu.memory_space<vmem>>, vector<1x1x1516xf32>
    %61 = vector.shape_cast %60 : vector<1x1x1516xf32> to vector<1x1516xf32>
    %62 = vector.broadcast %61 : vector<1x1516xf32> to vector<8x1516xf32>
    %63 = arith.mulf %59, %62 : vector<8x1516xf32>
    %c0_83 = arith.constant 0 : index
    %c0_84 = arith.constant 0 : index
    %64 = vector.load %arg11[%c0_83, %c0_84] : memref<8x1516xf32, #tpu.memory_space<vmem>>, vector<8x1516xf32>
    tpu.vector_store %arg11[%c0_83, %c0_84], %63 {strides = array<i32>} : memref<8x1516xf32, #tpu.memory_space<vmem>>, vector<8x1516xf32>,
    %c0_85 = arith.constant 0 : index
    %c0_86 = arith.constant 0 : index
    %65 = vector.load %arg6[%c0_85, %c0_86] : memref<316x100xf32, #tpu.memory_space<vmem>>, vector<316x100xf32>
    %c0_87 = arith.constant 0 : index
    %c0_88 = arith.constant 0 : index
    %66 = vector.load %arg11[%c0_87, %c0_88] : memref<8x1516xf32, #tpu.memory_space<vmem>>, vector<8x316xf32>
    %cst_89 = arith.constant dense<0.000000e+00> : vector<8x100xf32>
    %67 = tpu.matmul %66, %65, %cst_89 {dimension_numbers = #tpu.dot_dimension_numbers<[1], [0], [0], [1], [0, 0, 1, 1], [], []>} : vector<8x316xf32>, vector<316x100xf32>, vector<8x100xf32> -> vector<8x100xf32>
    %c0_90 = arith.constant 0 : index
    %c0_91 = arith.constant 0 : index
    %68 = vector.load %arg12[%c0_90, %c0_91] : memref<8x400xf32, #tpu.memory_space<vmem>>, vector<8x100xf32>
    tpu.vector_store %arg12[%c0_90, %c0_91], %67 {strides = array<i32>} : memref<8x400xf32, #tpu.memory_space<vmem>>, vector<8x100xf32>,
    %c0_92 = arith.constant 0 : index
    %c400 = arith.constant 400 : index
    %69 = vector.load %arg11[%c0_92, %c400] : memref<8x1516xf32, #tpu.memory_space<vmem>>, vector<8x316xf32>
    %cst_93 = arith.constant dense<0.000000e+00> : vector<8x100xf32>
    %70 = tpu.matmul %69, %65, %cst_93 {dimension_numbers = #tpu.dot_dimension_numbers<[1], [0], [0], [1], [0, 0, 1, 1], [], []>} : vector<8x316xf32>, vector<316x100xf32>, vector<8x100xf32> -> vector<8x100xf32>
    %c0_94 = arith.constant 0 : index
    %c100 = arith.constant 100 : index
    %71 = vector.load %arg12[%c0_94, %c100] : memref<8x400xf32, #tpu.memory_space<vmem>>, vector<8x100xf32>
    tpu.vector_store %arg12[%c0_94, %c100], %70 {strides = array<i32>} : memref<8x400xf32, #tpu.memory_space<vmem>>, vector<8x100xf32>,
    %c0_95 = arith.constant 0 : index
    %c800 = arith.constant 800 : index
    %72 = vector.load %arg11[%c0_95, %c800] : memref<8x1516xf32, #tpu.memory_space<vmem>>, vector<8x316xf32>
    %cst_96 = arith.constant dense<0.000000e+00> : vector<8x100xf32>
    %73 = tpu.matmul %72, %65, %cst_96 {dimension_numbers = #tpu.dot_dimension_numbers<[1], [0], [0], [1], [0, 0, 1, 1], [], []>} : vector<8x316xf32>, vector<316x100xf32>, vector<8x100xf32> -> vector<8x100xf32>
    %c0_97 = arith.constant 0 : index
    %c200 = arith.constant 200 : index
    %74 = vector.load %arg12[%c0_97, %c200] : memref<8x400xf32, #tpu.memory_space<vmem>>, vector<8x100xf32>
    tpu.vector_store %arg12[%c0_97, %c200], %73 {strides = array<i32>} : memref<8x400xf32, #tpu.memory_space<vmem>>, vector<8x100xf32>,
    %c0_98 = arith.constant 0 : index
    %c1200 = arith.constant 1200 : index
    %75 = vector.load %arg11[%c0_98, %c1200] : memref<8x1516xf32, #tpu.memory_space<vmem>>, vector<8x316xf32>
    %cst_99 = arith.constant dense<0.000000e+00> : vector<8x100xf32>
    %76 = tpu.matmul %75, %65, %cst_99 {dimension_numbers = #tpu.dot_dimension_numbers<[1], [0], [0], [1], [0, 0, 1, 1], [], []>} : vector<8x316xf32>, vector<316x100xf32>, vector<8x100xf32> -> vector<8x100xf32>
    %c0_100 = arith.constant 0 : index
    %c300 = arith.constant 300 : index
    %77 = vector.load %arg12[%c0_100, %c300] : memref<8x400xf32, #tpu.memory_space<vmem>>, vector<8x100xf32>
    tpu.vector_store %arg12[%c0_100, %c300], %76 {strides = array<i32>} : memref<8x400xf32, #tpu.memory_space<vmem>>, vector<8x100xf32>,
    %c0_101 = arith.constant 0 : index
    %c0_102 = arith.constant 0 : index
    %78 = vector.load %arg12[%c0_101, %c0_102] : memref<8x400xf32, #tpu.memory_space<vmem>>, vector<8x378xf32>
    %c0_103 = arith.constant 0 : index
    %c0_104 = arith.constant 0 : index
    %79 = vector.load %arg9[%c0_103, %c0_104] : memref<72x1558xf32, #tpu.memory_space<vmem>>, vector<8x378xf32>
    tpu.vector_store %arg9[%c0_103, %c0_104], %78 {strides = array<i32>} : memref<72x1558xf32, #tpu.memory_space<vmem>>, vector<8x378xf32>,
    %c0_105 = arith.constant 0 : index
    %c1_106 = arith.constant 1 : index
    %80 = vector.load %arg12[%c0_105, %c1_106] : memref<8x400xf32, #tpu.memory_space<vmem>>, vector<8x378xf32>
    %c8_107 = arith.constant 8 : index
    %c0_108 = arith.constant 0 : index
    %81 = vector.load %arg9[%c8_107, %c0_108] : memref<72x1558xf32, #tpu.memory_space<vmem>>, vector<8x378xf32>
    tpu.vector_store %arg9[%c8_107, %c0_108], %80 {strides = array<i32>} : memref<72x1558xf32, #tpu.memory_space<vmem>>, vector<8x378xf32>,
    %c0_109 = arith.constant 0 : index
    %c2_110 = arith.constant 2 : index
    %82 = vector.load %arg12[%c0_109, %c2_110] : memref<8x400xf32, #tpu.memory_space<vmem>>, vector<8x378xf32>
    %c16_111 = arith.constant 16 : index
    %c0_112 = arith.constant 0 : index
    %83 = vector.load %arg9[%c16_111, %c0_112] : memref<72x1558xf32, #tpu.memory_space<vmem>>, vector<8x378xf32>
    tpu.vector_store %arg9[%c16_111, %c0_112], %82 {strides = array<i32>} : memref<72x1558xf32, #tpu.memory_space<vmem>>, vector<8x378xf32>,
    %c0_113 = arith.constant 0 : index
    %c10 = arith.constant 10 : index
    %84 = vector.load %arg12[%c0_113, %c10] : memref<8x400xf32, #tpu.memory_space<vmem>>, vector<8x378xf32>
    %c24_114 = arith.constant 24 : index
    %c0_115 = arith.constant 0 : index
    %85 = vector.load %arg9[%c24_114, %c0_115] : memref<72x1558xf32, #tpu.memory_space<vmem>>, vector<8x378xf32>
    tpu.vector_store %arg9[%c24_114, %c0_115], %84 {strides = array<i32>} : memref<72x1558xf32, #tpu.memory_space<vmem>>, vector<8x378xf32>,
    %c0_116 = arith.constant 0 : index
    %c11 = arith.constant 11 : index
    %86 = vector.load %arg12[%c0_116, %c11] : memref<8x400xf32, #tpu.memory_space<vmem>>, vector<8x378xf32>
    %c32_117 = arith.constant 32 : index
    %c0_118 = arith.constant 0 : index
    %87 = vector.load %arg9[%c32_117, %c0_118] : memref<72x1558xf32, #tpu.memory_space<vmem>>, vector<8x378xf32>
    tpu.vector_store %arg9[%c32_117, %c0_118], %86 {strides = array<i32>} : memref<72x1558xf32, #tpu.memory_space<vmem>>, vector<8x378xf32>,
    %c0_119 = arith.constant 0 : index
    %c12 = arith.constant 12 : index
    %88 = vector.load %arg12[%c0_119, %c12] : memref<8x400xf32, #tpu.memory_space<vmem>>, vector<8x378xf32>
    %c40_120 = arith.constant 40 : index
    %c0_121 = arith.constant 0 : index
    %89 = vector.load %arg9[%c40_120, %c0_121] : memref<72x1558xf32, #tpu.memory_space<vmem>>, vector<8x378xf32>
    tpu.vector_store %arg9[%c40_120, %c0_121], %88 {strides = array<i32>} : memref<72x1558xf32, #tpu.memory_space<vmem>>, vector<8x378xf32>,
    %c0_122 = arith.constant 0 : index
    %c20_123 = arith.constant 20 : index
    %90 = vector.load %arg12[%c0_122, %c20_123] : memref<8x400xf32, #tpu.memory_space<vmem>>, vector<8x378xf32>
    %c48_124 = arith.constant 48 : index
    %c0_125 = arith.constant 0 : index
    %91 = vector.load %arg9[%c48_124, %c0_125] : memref<72x1558xf32, #tpu.memory_space<vmem>>, vector<8x378xf32>
    tpu.vector_store %arg9[%c48_124, %c0_125], %90 {strides = array<i32>} : memref<72x1558xf32, #tpu.memory_space<vmem>>, vector<8x378xf32>,
    %c0_126 = arith.constant 0 : index
    %c21_127 = arith.constant 21 : index
    %92 = vector.load %arg12[%c0_126, %c21_127] : memref<8x400xf32, #tpu.memory_space<vmem>>, vector<8x378xf32>
    %c56_128 = arith.constant 56 : index
    %c0_129 = arith.constant 0 : index
    %93 = vector.load %arg9[%c56_128, %c0_129] : memref<72x1558xf32, #tpu.memory_space<vmem>>, vector<8x378xf32>
    tpu.vector_store %arg9[%c56_128, %c0_129], %92 {strides = array<i32>} : memref<72x1558xf32, #tpu.memory_space<vmem>>, vector<8x378xf32>,
    %c0_130 = arith.constant 0 : index
    %c22_131 = arith.constant 22 : index
    %94 = vector.load %arg12[%c0_130, %c22_131] : memref<8x400xf32, #tpu.memory_space<vmem>>, vector<8x378xf32>
    %c64_132 = arith.constant 64 : index
    %c0_133 = arith.constant 0 : index
    %95 = vector.load %arg9[%c64_132, %c0_133] : memref<72x1558xf32, #tpu.memory_space<vmem>>, vector<8x378xf32>
    tpu.vector_store %arg9[%c64_132, %c0_133], %94 {strides = array<i32>} : memref<72x1558xf32, #tpu.memory_space<vmem>>, vector<8x378xf32>,
    %c16_134 = arith.constant 16 : index
    %c0_135 = arith.constant 0 : index
    %96 = vector.load %arg4[%c16_134, %c0_135] : memref<32x72xf32, #tpu.memory_space<vmem>>, vector<8x72xf32>
    %c16_136 = arith.constant 16 : index
    %c0_137 = arith.constant 0 : index
    %97 = vector.load %arg5[%c16_136, %c0_137] : memref<32x1xf32, #tpu.memory_space<vmem>>, vector<8x1xf32>
    %c0_138 = arith.constant 0 : index
    %c0_139 = arith.constant 0 : index
    %98 = vector.load %arg9[%c0_138, %c0_139] : memref<72x1558xf32, #tpu.memory_space<vmem>>, vector<72x378xf32>
    %cst_140 = arith.constant dense<0.000000e+00> : vector<8x378xf32>
    %99 = tpu.matmul %96, %98, %cst_140 {dimension_numbers = #tpu.dot_dimension_numbers<[1], [0], [0], [1], [0, 0, 1, 1], [], []>} : vector<8x72xf32>, vector<72x378xf32>, vector<8x378xf32> -> vector<8x378xf32>
    %100 = vector.broadcast %97 : vector<8x1xf32> to vector<8x378xf32>
    %101 = arith.addf %99, %100 : vector<8x378xf32>
    %102 = math.tanh %101 : vector<8x378xf32>
    %c0_141 = arith.constant 0 : index
    %c0_142 = arith.constant 0 : index
    %103 = vector.load %arg13[%c0_141, %c0_142] : memref<8x378xf32, #tpu.memory_space<vmem>>, vector<8x378xf32>
    tpu.vector_store %arg13[%c0_141, %c0_142], %102 {strides = array<i32>} : memref<8x378xf32, #tpu.memory_space<vmem>>, vector<8x378xf32>,
    %c0_143 = arith.constant 0 : index
    %c0_144 = arith.constant 0 : index
    %104 = vector.load %arg13[%c0_143, %c0_144] : memref<8x378xf32, #tpu.memory_space<vmem>>, vector<8x356xf32>
    %c0_145 = arith.constant 0 : index
    %c0_146 = arith.constant 0 : index
    %105 = vector.load %arg9[%c0_145, %c0_146] : memref<72x1558xf32, #tpu.memory_space<vmem>>, vector<8x356xf32>
    tpu.vector_store %arg9[%c0_145, %c0_146], %104 {strides = array<i32>} : memref<72x1558xf32, #tpu.memory_space<vmem>>, vector<8x356xf32>,
    %c0_147 = arith.constant 0 : index
    %c1_148 = arith.constant 1 : index
    %106 = vector.load %arg13[%c0_147, %c1_148] : memref<8x378xf32, #tpu.memory_space<vmem>>, vector<8x356xf32>
    %c8_149 = arith.constant 8 : index
    %c0_150 = arith.constant 0 : index
    %107 = vector.load %arg9[%c8_149, %c0_150] : memref<72x1558xf32, #tpu.memory_space<vmem>>, vector<8x356xf32>
    tpu.vector_store %arg9[%c8_149, %c0_150], %106 {strides = array<i32>} : memref<72x1558xf32, #tpu.memory_space<vmem>>, vector<8x356xf32>,
    %c0_151 = arith.constant 0 : index
    %c2_152 = arith.constant 2 : index
    %108 = vector.load %arg13[%c0_151, %c2_152] : memref<8x378xf32, #tpu.memory_space<vmem>>, vector<8x356xf32>
    %c16_153 = arith.constant 16 : index
    %c0_154 = arith.constant 0 : index
    %109 = vector.load %arg9[%c16_153, %c0_154] : memref<72x1558xf32, #tpu.memory_space<vmem>>, vector<8x356xf32>
    tpu.vector_store %arg9[%c16_153, %c0_154], %108 {strides = array<i32>} : memref<72x1558xf32, #tpu.memory_space<vmem>>, vector<8x356xf32>,
    %c0_155 = arith.constant 0 : index
    %c10_156 = arith.constant 10 : index
    %110 = vector.load %arg13[%c0_155, %c10_156] : memref<8x378xf32, #tpu.memory_space<vmem>>, vector<8x356xf32>
    %c24_157 = arith.constant 24 : index
    %c0_158 = arith.constant 0 : index
    %111 = vector.load %arg9[%c24_157, %c0_158] : memref<72x1558xf32, #tpu.memory_space<vmem>>, vector<8x356xf32>
    tpu.vector_store %arg9[%c24_157, %c0_158], %110 {strides = array<i32>} : memref<72x1558xf32, #tpu.memory_space<vmem>>, vector<8x356xf32>,
    %c0_159 = arith.constant 0 : index
    %c11_160 = arith.constant 11 : index
    %112 = vector.load %arg13[%c0_159, %c11_160] : memref<8x378xf32, #tpu.memory_space<vmem>>, vector<8x356xf32>
    %c32_161 = arith.constant 32 : index
    %c0_162 = arith.constant 0 : index
    %113 = vector.load %arg9[%c32_161, %c0_162] : memref<72x1558xf32, #tpu.memory_space<vmem>>, vector<8x356xf32>
    tpu.vector_store %arg9[%c32_161, %c0_162], %112 {strides = array<i32>} : memref<72x1558xf32, #tpu.memory_space<vmem>>, vector<8x356xf32>,
    %c0_163 = arith.constant 0 : index
    %c12_164 = arith.constant 12 : index
    %114 = vector.load %arg13[%c0_163, %c12_164] : memref<8x378xf32, #tpu.memory_space<vmem>>, vector<8x356xf32>
    %c40_165 = arith.constant 40 : index
    %c0_166 = arith.constant 0 : index
    %115 = vector.load %arg9[%c40_165, %c0_166] : memref<72x1558xf32, #tpu.memory_space<vmem>>, vector<8x356xf32>
    tpu.vector_store %arg9[%c40_165, %c0_166], %114 {strides = array<i32>} : memref<72x1558xf32, #tpu.memory_space<vmem>>, vector<8x356xf32>,
    %c0_167 = arith.constant 0 : index
    %c20_168 = arith.constant 20 : index
    %116 = vector.load %arg13[%c0_167, %c20_168] : memref<8x378xf32, #tpu.memory_space<vmem>>, vector<8x356xf32>
    %c48_169 = arith.constant 48 : index
    %c0_170 = arith.constant 0 : index
    %117 = vector.load %arg9[%c48_169, %c0_170] : memref<72x1558xf32, #tpu.memory_space<vmem>>, vector<8x356xf32>
    tpu.vector_store %arg9[%c48_169, %c0_170], %116 {strides = array<i32>} : memref<72x1558xf32, #tpu.memory_space<vmem>>, vector<8x356xf32>,
    %c0_171 = arith.constant 0 : index
    %c21_172 = arith.constant 21 : index
    %118 = vector.load %arg13[%c0_171, %c21_172] : memref<8x378xf32, #tpu.memory_space<vmem>>, vector<8x356xf32>
    %c56_173 = arith.constant 56 : index
    %c0_174 = arith.constant 0 : index
    %119 = vector.load %arg9[%c56_173, %c0_174] : memref<72x1558xf32, #tpu.memory_space<vmem>>, vector<8x356xf32>
    tpu.vector_store %arg9[%c56_173, %c0_174], %118 {strides = array<i32>} : memref<72x1558xf32, #tpu.memory_space<vmem>>, vector<8x356xf32>,
    %c0_175 = arith.constant 0 : index
    %c22_176 = arith.constant 22 : index
    %120 = vector.load %arg13[%c0_175, %c22_176] : memref<8x378xf32, #tpu.memory_space<vmem>>, vector<8x356xf32>
    %c64_177 = arith.constant 64 : index
    %c0_178 = arith.constant 0 : index
    %121 = vector.load %arg9[%c64_177, %c0_178] : memref<72x1558xf32, #tpu.memory_space<vmem>>, vector<8x356xf32>
    tpu.vector_store %arg9[%c64_177, %c0_178], %120 {strides = array<i32>} : memref<72x1558xf32, #tpu.memory_space<vmem>>, vector<8x356xf32>,
    %c24_179 = arith.constant 24 : index
    %c0_180 = arith.constant 0 : index
    %122 = vector.load %arg4[%c24_179, %c0_180] : memref<32x72xf32, #tpu.memory_space<vmem>>, vector<8x72xf32>
    %c24_181 = arith.constant 24 : index
    %c0_182 = arith.constant 0 : index
    %123 = vector.load %arg5[%c24_181, %c0_182] : memref<32x1xf32, #tpu.memory_space<vmem>>, vector<8x1xf32>
    %c0_183 = arith.constant 0 : index
    %c0_184 = arith.constant 0 : index
    %124 = vector.load %arg9[%c0_183, %c0_184] : memref<72x1558xf32, #tpu.memory_space<vmem>>, vector<72x356xf32>
    %cst_185 = arith.constant dense<0.000000e+00> : vector<8x356xf32>
    %125 = tpu.matmul %122, %124, %cst_185 {dimension_numbers = #tpu.dot_dimension_numbers<[1], [0], [0], [1], [0, 0, 1, 1], [], []>} : vector<8x72xf32>, vector<72x356xf32>, vector<8x356xf32> -> vector<8x356xf32>
    %126 = vector.broadcast %123 : vector<8x1xf32> to vector<8x356xf32>
    %127 = arith.addf %125, %126 : vector<8x356xf32>
    %128 = math.tanh %127 : vector<8x356xf32>
    %c0_186 = arith.constant 0 : index
    %c0_187 = arith.constant 0 : index
    %c0_188 = arith.constant 0 : index
    %129 = vector.load %arg3[%c0_186, %c0_187, %c0_188] : memref<1x1x400xf32, #tpu.memory_space<vmem>>, vector<1x1x356xf32>
    %130 = vector.shape_cast %129 : vector<1x1x356xf32> to vector<1x356xf32>
    %131 = vector.broadcast %130 : vector<1x356xf32> to vector<8x356xf32>
    %132 = arith.mulf %128, %131 : vector<8x356xf32>
    %c0_189 = arith.constant 0 : index
    %c0_190 = arith.constant 0 : index
    %133 = vector.load %arg14[%c0_189, %c0_190] : memref<8x356xf32, #tpu.memory_space<vmem>>, vector<8x356xf32>
    tpu.vector_store %arg14[%c0_189, %c0_190], %132 {strides = array<i32>} : memref<8x356xf32, #tpu.memory_space<vmem>>, vector<8x356xf32>,
    %c0_191 = arith.constant 0 : index
    %c0_192 = arith.constant 0 : index
    %134 = vector.load %arg7[%c0_191, %c0_192] : memref<56x9xf32, #tpu.memory_space<vmem>>, vector<56x9xf32>
    %c0_193 = arith.constant 0 : index
    %c0_194 = arith.constant 0 : index
    %135 = vector.load %arg14[%c0_193, %c0_194] : memref<8x356xf32, #tpu.memory_space<vmem>>, vector<8x56xf32>
    %cst_195 = arith.constant dense<0.000000e+00> : vector<8x9xf32>
    %136 = tpu.matmul %135, %134, %cst_195 {dimension_numbers = #tpu.dot_dimension_numbers<[1], [0], [0], [1], [0, 0, 1, 1], [], []>} : vector<8x56xf32>, vector<56x9xf32>, vector<8x9xf32> -> vector<8x9xf32>
    %c0_196 = arith.constant 0 : index
    %c100_197 = arith.constant 100 : index
    %137 = vector.load %arg14[%c0_196, %c100_197] : memref<8x356xf32, #tpu.memory_space<vmem>>, vector<8x56xf32>
    %cst_198 = arith.constant dense<0.000000e+00> : vector<8x9xf32>
    %138 = tpu.matmul %137, %134, %cst_198 {dimension_numbers = #tpu.dot_dimension_numbers<[1], [0], [0], [1], [0, 0, 1, 1], [], []>} : vector<8x56xf32>, vector<56x9xf32>, vector<8x9xf32> -> vector<8x9xf32>
    %c0_199 = arith.constant 0 : index
    %c200_200 = arith.constant 200 : index
    %139 = vector.load %arg14[%c0_199, %c200_200] : memref<8x356xf32, #tpu.memory_space<vmem>>, vector<8x56xf32>
    %cst_201 = arith.constant dense<0.000000e+00> : vector<8x9xf32>
    %140 = tpu.matmul %139, %134, %cst_201 {dimension_numbers = #tpu.dot_dimension_numbers<[1], [0], [0], [1], [0, 0, 1, 1], [], []>} : vector<8x56xf32>, vector<56x9xf32>, vector<8x9xf32> -> vector<8x9xf32>
    %c0_202 = arith.constant 0 : index
    %c300_203 = arith.constant 300 : index
    %141 = vector.load %arg14[%c0_202, %c300_203] : memref<8x356xf32, #tpu.memory_space<vmem>>, vector<8x56xf32>
    %cst_204 = arith.constant dense<0.000000e+00> : vector<8x9xf32>
    %142 = tpu.matmul %141, %134, %cst_204 {dimension_numbers = #tpu.dot_dimension_numbers<[1], [0], [0], [1], [0, 0, 1, 1], [], []>} : vector<8x56xf32>, vector<56x9xf32>, vector<8x9xf32> -> vector<8x9xf32>
    %143 = tpu.concatenate %136, %138, %140, %142 in 1 : vector<8x9xf32>, vector<8x9xf32>, vector<8x9xf32>, vector<8x9xf32> -> vector<8x36xf32>
    %c0_205 = arith.constant 0 : index
    %c0_206 = arith.constant 0 : index
    %c0_207 = arith.constant 0 : index
    %144 = vector.load %arg8[%c0_205, %c0_206, %c0_207] : memref<1x8x36xf32, #tpu.memory_space<vmem>>, vector<1x8x36xf32>
    %145 = vector.shape_cast %144 : vector<1x8x36xf32> to vector<8x36xf32>
    %146 = vector.shape_cast %143 : vector<8x36xf32> to vector<1x8x36xf32>
    tpu.vector_store %arg8[%c0_205, %c0_206, %c0_207], %146 {strides = array<i32>} : memref<1x8x36xf32, #tpu.memory_space<vmem>>, vector<1x8x36xf32>,
    return
  }
  func.func @transform_0(%arg0: i32) -> (i32, i32, i32) {
    %c0_i32 = arith.constant 0 : i32
    %c0_i32_0 = arith.constant 0 : i32
    %c0_i32_1 = arith.constant 0 : i32
    return %arg0, %c0_i32, %c0_i32_0 : i32, i32, i32
  }
  func.func @transform_1(%arg0: i32) -> (i32, i32, i32) {
    %c0_i32 = arith.constant 0 : i32
    %c0_i32_0 = arith.constant 0 : i32
    %c0_i32_1 = arith.constant 0 : i32
    return %arg0, %c0_i32, %c0_i32_0 : i32, i32, i32
  }
  func.func @transform_2(%arg0: i32) -> (i32, i32, i32) {
    %c0_i32 = arith.constant 0 : i32
    %c0_i32_0 = arith.constant 0 : i32
    %c0_i32_1 = arith.constant 0 : i32
    return %arg0, %c0_i32, %c0_i32_0 : i32, i32, i32
  }
  func.func @transform_3(%arg0: i32) -> (i32, i32) {
    %c0_i32 = arith.constant 0 : i32
    %c0_i32_0 = arith.constant 0 : i32
    %c0_i32_1 = arith.constant 0 : i32
    return %c0_i32, %c0_i32_0 : i32, i32
  }
  func.func @transform_4(%arg0: i32) -> (i32, i32) {
    %c0_i32 = arith.constant 0 : i32
    %c0_i32_0 = arith.constant 0 : i32
    %c0_i32_1 = arith.constant 0 : i32
    return %c0_i32, %c0_i32_0 : i32, i32
  }
  func.func @transform_5(%arg0: i32) -> (i32, i32) {
    %c0_i32 = arith.constant 0 : i32
    %c0_i32_0 = arith.constant 0 : i32
    %c0_i32_1 = arith.constant 0 : i32
    return %c0_i32, %c0_i32_0 : i32, i32
  }
  func.func @transform_6(%arg0: i32) -> (i32, i32) {
    %c0_i32 = arith.constant 0 : i32
    %c0_i32_0 = arith.constant 0 : i32
    %c0_i32_1 = arith.constant 0 : i32
    return %c0_i32, %c0_i32_0 : i32, i32
  }
  func.func @transform_7(%arg0: i32) -> (i32, i32, i32) {
    %c0_i32 = arith.constant 0 : i32
    %c0_i32_0 = arith.constant 0 : i32
    %c0_i32_1 = arith.constant 0 : i32
    return %arg0, %c0_i32, %c0_i32_0 : i32, i32, i32
  }
}

</mosaic_0001>

<llo_original>
// kernel: motion_model_forward.1
$region0: #{motion_model_forward.1}
  #allocation0 [shape = 'u32[]', space=smem, size = 0x4, offset = 0x4, fixed_abs, tag = 'smem constant byte address 0x4 - core index']
  #allocation1 [shape = 'u32[144,128]{1,0:T(1,128)}', space=vmem, size = 0x12000, scoped, tag = 'internal scratch']
  #allocation2 [shape = 'f32[72,1558]{1,0:T(8,128)}', space=vmem, size = 0x75000, scoped, tag = 'scratch operand']
  #allocation3 [shape = 'f32[8,1558]{1,0:T(8,128)}', space=vmem, size = 0xd000, scoped, tag = 'scratch operand']
  #allocation4 [shape = 'f32[8,1516]{1,0:T(8,128)}', space=vmem, size = 0xc000, scoped, tag = 'scratch operand']
  #allocation5 [shape = 'f32[8,400]{1,0:T(8,128)}', space=vmem, size = 0x4000, scoped, tag = 'scratch operand']
  #allocation6 [shape = 'f32[8,378]{1,0:T(8,128)}', space=vmem, size = 0x3000, scoped, tag = 'scratch operand']
  #allocation7 [shape = 'f32[8,356]{1,0:T(8,128)}', space=vmem, size = 0x3000, scoped, tag = 'scratch operand']
  %s0 = inlined_call_operand.vmem [shape: f32[2,8,1600], index: 0, kind: input, shape index: {}]
  %s1 = inlined_call_operand.vmem [shape: f32[2,1,1600], index: 1, kind: input, shape index: {}]
  %s2 = inlined_call_operand.vmem [shape: f32[2,1,400], index: 2, kind: input, shape index: {}]
  %s3 = inlined_call_operand.vmem [shape: f32[32,72], index: 3, kind: input, shape index: {}]
  %s4 = inlined_call_operand.vmem [shape: f32[32,1], index: 4, kind: input, shape index: {}]
  %s5 = inlined_call_operand.vmem [shape: f32[316,100], index: 5, kind: input, shape index: {}]
  %s6 = inlined_call_operand.vmem [shape: f32[56,9], index: 6, kind: input, shape index: {}]
  %s7 = inlined_call_operand.vmem [shape: f32[2,8,36], index: 7, kind: output, shape index: {}]
  %s8 = sld [smem:[#allocation0]]
  $region61: #{motion_model_forward.1} parent=0
    _
  %s10 = ssub.s32 1, %s8
  %s11 = scalar_select 0, %s10, %s8
  loop: start=0, step=1, limit=4
  $region2: #{motion_model_forward.1} parent=0 // loop_pre_header
    _
  $region3: #{motion_model_forward.1} parent=0 // loop_header
    %s13 = sphi 0, %s17
    %p14 = scmp.ge.s32.totalorder %s13, 4
    %s23 = sphi 0, %s25
    %s26 = sphi 0, %s23
    %s27 = sphi 0, %s26
    %s43 = sphi 0, %s27
    %s49 = sphi 0, %s51
    %s52 = sphi 0, %s49
    %s53 = sphi 0, %s52
    %s69 = sphi 0, %s53
    %s75 = sphi 0, %s77
    %s78 = sphi 0, %s75
    %s79 = sphi 0, %s78
    %s95 = sphi 0, %s79
    %s99 = sphi 0, %s99
    %s101 = sphi 0, %s99
    %s102 = sphi 0, %s101
    %s116 = sphi 0, %s102
    %s120 = sphi 0, %s120
    %s122 = sphi 0, %s120
    %s123 = sphi 0, %s122
    %s137 = sphi 0, %s123
    %s141 = sphi 0, %s141
    %s143 = sphi 0, %s141
    %s144 = sphi 0, %s143
    %s158 = sphi 0, %s144
    %s162 = sphi 0, %s162
    %s164 = sphi 0, %s162
    %s165 = sphi 0, %s164
    %s179 = sphi 0, %s165
    %s185 = sphi 0, %s187
    %s188 = sphi 0, %s185
    %s189 = sphi 0, %s188
    %s205 = sphi 0, %s189
  $region4: #{motion_model_forward.1} parent=0 // loop_header_branch
    %16 = sbr.rel (%p14) target = $region8
  $region5: #{motion_model_forward.1} parent=0 // loop_body
    %s18 = ssub.s32 %s13, 1
    %s19 = ssub.s32 %s13, 2
    %s20 = sadd.s32 %s13, 1
    %s21 = ssub.s32 %s13, %s20
    %p22 = scmp.eq.s32.totalorder %s21, 0
    %s24 = sadd.s32 %s23, 1
    %s25 = scalar_select %p22, %s23, %s24
    %p28 = pneg %p22
    %p29 = scmp.eq.s32.totalorder %s13, 1
    %p30 = por %p28, %p29
    %p31 = scmp.ne.s32.totalorder %s23, %s26
    %p32 = scmp.eq.s32.totalorder %s13, 0
    %p33 = por %p31, %p32
    %p34 = scmp.ne.s32.totalorder %s23, %s26
    %p35 = scmp.eq.s32.totalorder %s18, 1
    %p36 = por %p34, %p35
    %p37 = scmp.ne.s32.totalorder %s26, %s27
    %p38 = scmp.eq.s32.totalorder %s18, 0
    %p39 = por %p37, %p38
    %p40 = scmp.ne.s32.totalorder %s26, %s27
    %p41 = scmp.eq.s32.totalorder %s19, 1
    %p42 = por %p40, %p41
    %p44 = scmp.ne.s32.totalorder %s27, %s43
    %p45 = scmp.eq.s32.totalorder %s19, 0
    %p46 = por %p44, %p45
    %s47 = ssub.s32 %s13, %s20
    %p48 = scmp.eq.s32.totalorder %s47, 0
    %s50 = sadd.s32 %s49, 1
    %s51 = scalar_select %p48, %s49, %s50
    %p54 = pneg %p48
    %p55 = scmp.eq.s32.totalorder %s13, 1
    %p56 = por %p54, %p55
    %p57 = scmp.ne.s32.totalorder %s49, %s52
    %p58 = scmp.eq.s32.totalorder %s13, 0
    %p59 = por %p57, %p58
    %p60 = scmp.ne.s32.totalorder %s49, %s52
    %p61 = scmp.eq.s32.totalorder %s18, 1
    %p62 = por %p60, %p61
    %p63 = scmp.ne.s32.totalorder %s52, %s53
    %p64 = scmp.eq.s32.totalorder %s18, 0
    %p65 = por %p63, %p64
    %p66 = scmp.ne.s32.totalorder %s52, %s53
    %p67 = scmp.eq.s32.totalorder %s19, 1
    %p68 = por %p66, %p67
    %p70 = scmp.ne.s32.totalorder %s53, %s69
    %p71 = scmp.eq.s32.totalorder %s19, 0
    %p72 = por %p70, %p71
    %s73 = ssub.s32 %s13, %s20
    %p74 = scmp.eq.s32.totalorder %s73, 0
    %s76 = sadd.s32 %s75, 1
    %s77 = scalar_select %p74, %s75, %s76
    %p80 = pneg %p74
    %p81 = scmp.eq.s32.totalorder %s13, 1
    %p82 = por %p80, %p81
    %p83 = scmp.ne.s32.totalorder %s75, %s78
    %p84 = scmp.eq.s32.totalorder %s13, 0
    %p85 = por %p83, %p84
    %p86 = scmp.ne.s32.totalorder %s75, %s78
    %p87 = scmp.eq.s32.totalorder %s18, 1
    %p88 = por %p86, %p87
    %p89 = scmp.ne.s32.totalorder %s78, %s79
    %p90 = scmp.eq.s32.totalorder %s18, 0
    %p91 = por %p89, %p90
    %p92 = scmp.ne.s32.totalorder %s78, %s79
    %p93 = scmp.eq.s32.totalorder %s19, 1
    %p94 = por %p92, %p93
    %p96 = scmp.ne.s32.totalorder %s79, %s95
    %p97 = scmp.eq.s32.totalorder %s19, 0
    %p98 = por %p96, %p97
    %s100 = sadd.s32 %s99, 1
    %p103 = scmp.eq.s32.totalorder %s13, 1
    %p104 = scmp.ne.s32.totalorder %s99, %s101
    %p105 = scmp.eq.s32.totalorder %s13, 0
    %p106 = por %p104, %p105
    %p107 = scmp.ne.s32.totalorder %s99, %s101
    %p108 = scmp.eq.s32.totalorder %s18, 1
    %p109 = por %p107, %p108
    %p110 = scmp.ne.s32.totalorder %s101, %s102
    %p111 = scmp.eq.s32.totalorder %s18, 0
    %p112 = por %p110, %p111
    %p113 = scmp.ne.s32.totalorder %s101, %s102
    %p114 = scmp.eq.s32.totalorder %s19, 1
    %p115 = por %p113, %p114
    %p117 = scmp.ne.s32.totalorder %s102, %s116
    %p118 = scmp.eq.s32.totalorder %s19, 0
    %p119 = por %p117, %p118
    %s121 = sadd.s32 %s120, 1
    %p124 = scmp.eq.s32.totalorder %s13, 1
    %p125 = scmp.ne.s32.totalorder %s120, %s122
    %p126 = scmp.eq.s32.totalorder %s13, 0
    %p127 = por %p125, %p126
    %p128 = scmp.ne.s32.totalorder %s120, %s122
    %p129 = scmp.eq.s32.totalorder %s18, 1
    %p130 = por %p128, %p129
    %p131 = scmp.ne.s32.totalorder %s122, %s123
    %p132 = scmp.eq.s32.totalorder %s18, 0
    %p133 = por %p131, %p132
    %p134 = scmp.ne.s32.totalorder %s122, %s123
    %p135 = scmp.eq.s32.totalorder %s19, 1
    %p136 = por %p134, %p135
    %p138 = scmp.ne.s32.totalorder %s123, %s137
    %p139 = scmp.eq.s32.totalorder %s19, 0
    %p140 = por %p138, %p139
    %s142 = sadd.s32 %s141, 1
    %p145 = scmp.eq.s32.totalorder %s13, 1
    %p146 = scmp.ne.s32.totalorder %s141, %s143
    %p147 = scmp.eq.s32.totalorder %s13, 0
    %p148 = por %p146, %p147
    %p149 = scmp.ne.s32.totalorder %s141, %s143
    %p150 = scmp.eq.s32.totalorder %s18, 1
    %p151 = por %p149, %p150
    %p152 = scmp.ne.s32.totalorder %s143, %s144
    %p153 = scmp.eq.s32.totalorder %s18, 0
    %p154 = por %p152, %p153
    %p155 = scmp.ne.s32.totalorder %s143, %s144
    %p156 = scmp.eq.s32.totalorder %s19, 1
    %p157 = por %p155, %p156
    %p159 = scmp.ne.s32.totalorder %s144, %s158
    %p160 = scmp.eq.s32.totalorder %s19, 0
    %p161 = por %p159, %p160
    %s163 = sadd.s32 %s162, 1
    %p166 = scmp.eq.s32.totalorder %s13, 1
    %p167 = scmp.ne.s32.totalorder %s162, %s164
    %p168 = scmp.eq.s32.totalorder %s13, 0
    %p169 = por %p167, %p168
    %p170 = scmp.ne.s32.totalorder %s162, %s164
    %p171 = scmp.eq.s32.totalorder %s18, 1
    %p172 = por %p170, %p171
    %p173 = scmp.ne.s32.totalorder %s164, %s165
    %p174 = scmp.eq.s32.totalorder %s18, 0
    %p175 = por %p173, %p174
    %p176 = scmp.ne.s32.totalorder %s164, %s165
    %p177 = scmp.eq.s32.totalorder %s19, 1
    %p178 = por %p176, %p177
    %p180 = scmp.ne.s32.totalorder %s165, %s179
    %p181 = scmp.eq.s32.totalorder %s19, 0
    %p182 = por %p180, %p181
    %s183 = ssub.s32 %s13, %s20
    %p184 = scmp.eq.s32.totalorder %s183, 0
    %s186 = sadd.s32 %s185, 1
    %s187 = scalar_select %p184, %s185, %s186
    %p190 = pneg %p184
    %p191 = scmp.eq.s32.totalorder %s13, 1
    %p192 = por %p190, %p191
    %p193 = scmp.ne.s32.totalorder %s185, %s188
    %p194 = scmp.eq.s32.totalorder %s13, 0
    %p195 = por %p193, %p194
    %p196 = scmp.ne.s32.totalorder %s185, %s188
    %p197 = scmp.eq.s32.totalorder %s18, 1
    %p198 = por %p196, %p197
    %p199 = scmp.ne.s32.totalorder %s188, %s189
    %p200 = scmp.eq.s32.totalorder %s18, 0
    %p201 = por %p199, %p200
    %p202 = scmp.ne.s32.totalorder %s188, %s189
    %p203 = scmp.eq.s32.totalorder %s19, 1
    %p204 = por %p202, %p203
    %p206 = scmp.ne.s32.totalorder %s189, %s205
    %p207 = scmp.eq.s32.totalorder %s19, 0
    %p208 = por %p206, %p207
    %p209 = scmp.le.s32.totalorder 1, %s13
    %p210 = scmp.lt.s32.totalorder %s13, 3
    %p211 = pnand %p209, %p210
    %p212 = pneg %p211
    // Predicated region
    $region9: #{motion_model_forward.1} parent=5 // pred_check
      _
    $region10: #{motion_model_forward.1} parent=5 // pred_check_branch
      %214 = sbr.rel (%p211) target = $region12
    $region11: #{motion_model_forward.1} parent=5 // pred_region
      %s215 = ssub.s32 %s13, 1
      // Predicated region
      $region13: #{motion_model_forward.1} parent=11 // pred_check
        %p216 = pneg %p112
      $region14: #{motion_model_forward.1} parent=11 // pred_check_branch
        %218 = sbr.rel (%p216) target = $region16
      $region15: #{motion_model_forward.1} parent=11 // pred_region
        _
      $region16: #{motion_model_forward.1} parent=11 // pred_fallthru
        _
      // Predicated region
      $region17: #{motion_model_forward.1} parent=11 // pred_check
        %p219 = pneg %p133
      $region18: #{motion_model_forward.1} parent=11 // pred_check_branch
        %221 = sbr.rel (%p219) target = $region20
      $region19: #{motion_model_forward.1} parent=11 // pred_region
        _
      $region20: #{motion_model_forward.1} parent=11 // pred_fallthru
        _
      // Predicated region
      $region21: #{motion_model_forward.1} parent=11 // pred_check
        %p222 = pneg %p154
      $region22: #{motion_model_forward.1} parent=11 // pred_check_branch
        %224 = sbr.rel (%p222) target = $region24
      $region23: #{motion_model_forward.1} parent=11 // pred_region
        _
      $region24: #{motion_model_forward.1} parent=11 // pred_fallthru
        _
      // Predicated region
      $region25: #{motion_model_forward.1} parent=11 // pred_check
        %p225 = pneg %p175
      $region26: #{motion_model_forward.1} parent=11 // pred_check_branch
        %227 = sbr.rel (%p225) target = $region28
      $region27: #{motion_model_forward.1} parent=11 // pred_region
        _
      $region28: #{motion_model_forward.1} parent=11 // pred_fallthru
        _
    $region12: #{motion_model_forward.1} parent=5 // pred_fallthru
      _
    %p228 = scmp.lt.s32.totalorder %s13, 2
    // Predicated region
    $region29: #{motion_model_forward.1} parent=5 // pred_check
      %p229 = pneg %p228
    $region30: #{motion_model_forward.1} parent=5 // pred_check_branch
      %231 = sbr.rel (%p229) target = $region32
    $region31: #{motion_model_forward.1} parent=5 // pred_region
      // Predicated region
      $region33: #{motion_model_forward.1} parent=31 // pred_check
        %p232 = pneg %p33
      $region34: #{motion_model_forward.1} parent=31 // pred_check_branch
        %234 = sbr.rel (%p232) target = $region36
      $region35: #{motion_model_forward.1} parent=31 // pred_region
        %p235 = scmp.lt.s32.totalorder %s13, 1
        %s236 = scalar_select %p235, %s13, 1
        %s237 = smul.addr %s236, 13
        %s238 = smul.addr %s237, 8
        %s239 = scalar_lea.vmem %s0, %s238
      $region36: #{motion_model_forward.1} parent=31 // pred_fallthru
        _
      // Predicated region
      $region37: #{motion_model_forward.1} parent=31 // pred_check
        %p240 = pneg %p59
      $region38: #{motion_model_forward.1} parent=31 // pred_check_branch
        %242 = sbr.rel (%p240) target = $region40
      $region39: #{motion_model_forward.1} parent=31 // pred_region
        %p243 = scmp.lt.s32.totalorder %s13, 1
        %s244 = scalar_select %p243, %s13, 1
        %s245 = smul.addr %s244, 13
        %s246 = scalar_lea.vmem %s1, %s245
      $region40: #{motion_model_forward.1} parent=31 // pred_fallthru
        _
      // Predicated region
      $region41: #{motion_model_forward.1} parent=31 // pred_check
        %p247 = pneg %p85
      $region42: #{motion_model_forward.1} parent=31 // pred_check_branch
        %249 = sbr.rel (%p247) target = $region44
      $region43: #{motion_model_forward.1} parent=31 // pred_region
        %p250 = scmp.lt.s32.totalorder %s13, 1
        %s251 = scalar_select %p250, %s13, 1
        %s252 = smul.addr %s251, 4
        %s253 = scalar_lea.vmem %s2, %s252
      $region44: #{motion_model_forward.1} parent=31 // pred_fallthru
        _
    $region32: #{motion_model_forward.1} parent=5 // pred_fallthru
      _
    %p254 = scmp.le.s32.totalorder 1, %s13
    %p255 = scmp.lt.s32.totalorder %s13, 3
    %p256 = pnand %p254, %p255
    %p257 = pneg %p256
    // Predicated region
    $region45: #{motion_model_forward.1} parent=5 // pred_check
      _
    $region46: #{motion_model_forward.1} parent=5 // pred_check_branch
      %259 = sbr.rel (%p256) target = $region48
    $region47: #{motion_model_forward.1} parent=5 // pred_region
      %s260 = ssub.s32 %s13, 1
      %p261 = scmp.lt.s32.totalorder %s18, 1
      %s262 = scalar_select %p261, %s18, 1
      %s263 = smul.addr %s262, 13
      %s264 = smul.addr %s263, 8
      %s265 = scalar_lea.vmem %s0, %s264
      %p266 = pneg %p39
      %p267 = pneg %p36
      %p268 = scmp.lt.s32.totalorder %s18, 1
      %s269 = scalar_select %p268, %s18, 1
      %s270 = smul.addr %s269, 13
      %s271 = scalar_lea.vmem %s1, %s270
      %p272 = pneg %p65
      %p273 = pneg %p62
      %p274 = scmp.lt.s32.totalorder %s18, 1
      %s275 = scalar_select %p274, %s18, 1
      %s276 = smul.addr %s275, 4
      %s277 = scalar_lea.vmem %s2, %s276
      %p278 = pneg %p91
      %p279 = pneg %p88
      %p280 = pneg %p112
      %p281 = pneg %p109
      %p282 = pneg %p133
      %p283 = pneg %p130
      %p284 = pneg %p154
      %p285 = pneg %p151
      %p286 = pneg %p175
      %p287 = pneg %p172
      %p288 = pneg %p201
      %p289 = pneg %p198
      %p290 = scmp.lt.s32.totalorder %s18, 1
      %s291 = scalar_select %p290, %s18, 1
      %s292 = smul.addr %s291, 8
      %s293 = scalar_lea.vmem %s7, %s292
      %p294 = scmp.lt.s32.totalorder %s18, 1
      %s295 = scalar_select %p294, %s18, 1
      %s296 = smul.addr %s295, 13
      %s297 = smul.addr %s296, 8
      %s298 = scalar_lea.vmem %s0, %s297
      %p299 = scmp.lt.s32.totalorder %s18, 1
      %s300 = scalar_select %p299, %s18, 1
      %s301 = smul.addr %s300, 13
      %s302 = scalar_lea.vmem %s1, %s301
      %p303 = scmp.lt.s32.totalorder %s18, 1
      %s304 = scalar_select %p303, %s18, 1
      %s305 = smul.addr %s304, 4
      %s306 = scalar_lea.vmem %s2, %s305
      %p307 = scmp.lt.s32.totalorder %s18, 1
      %s308 = scalar_select %p307, %s18, 1
      %s309 = smul.addr %s308, 8
      %s310 = scalar_lea.vmem %s7, %s309
      %v311 = vld [vmem:[%s298] sm:$0xff]
      %v312 = vld [vmem:[%s298 + $0x8] sm:$0xff]
      %v313 = vld [vmem:[%s298 + $0x10] sm:$0xff]
      %v314 = vld [vmem:[%s298 + $0x18] sm:$0xff]
      %v315 = vld [vmem:[%s298 + $0x20] sm:$0xff]
      %v316 = vld [vmem:[%s298 + $0x28] sm:$0xff]
      %v317 = vld [vmem:[%s298 + $0x30] sm:$0xff]
      %v318 = vld [vmem:[%s298 + $0x38] sm:$0xff]
      %v319 = vld [vmem:[%s298 + $0x40] sm:$0xff]
      %v320 = vld [vmem:[%s298 + $0x48] sm:$0xff]
      %v321 = vld [vmem:[%s298 + $0x50] sm:$0xff]
      %v322 = vld [vmem:[%s298 + $0x58] sm:$0xff]
      %v323 = vld [vmem:[%s298 + $0x60] sm:$0xff]
      %324 = vst [vmem:[#allocation2] sm:$0xff] %v311
      %325 = vst [vmem:[#allocation2 + $0x8] sm:$0xff] %v312
      %326 = vst [vmem:[#allocation2 + $0x10] sm:$0xff] %v313
      %327 = vst [vmem:[#allocation2 + $0x18] sm:$0xff] %v314
      %328 = vst [vmem:[#allocation2 + $0x20] sm:$0xff] %v315
      %329 = vst [vmem:[#allocation2 + $0x28] sm:$0xff] %v316
      %330 = vst [vmem:[#allocation2 + $0x30] sm:$0xff] %v317
      %331 = vst [vmem:[#allocation2 + $0x38] sm:$0xff] %v318
      %332 = vst [vmem:[#allocation2 + $0x40] sm:$0xff] %v319
      %333 = vst [vmem:[#allocation2 + $0x48] sm:$0xff] %v320
      %334 = vst [vmem:[#allocation2 + $0x50] sm:$0xff] %v321
      %335 = vst [vmem:[#allocation2 + $0x58] sm:$0xff] %v322
      %vm336 = vcmask 179200
      %337 = vst.msk [vmem:[#allocation2 + $0x60] sm:$0xff] %vm336, %v323
      %v338 = vld [vmem:[%s298] sm:$0xff]
      %v339 = vld [vmem:[%s298 + $0x8] sm:$0xff]
      %v340 = vld [vmem:[%s298 + $0x10] sm:$0xff]
      %v341 = vld [vmem:[%s298 + $0x18] sm:$0xff]
      %v342 = vld [vmem:[%s298 + $0x20] sm:$0xff]
      %v343 = vld [vmem:[%s298 + $0x28] sm:$0xff]
      %v344 = vld [vmem:[%s298 + $0x30] sm:$0xff]
      %v345 = vld [vmem:[%s298 + $0x38] sm:$0xff]
      %v346 = vld [vmem:[%s298 + $0x40] sm:$0xff]
      %v347 = vld [vmem:[%s298 + $0x48] sm:$0xff]
      %v348 = vld [vmem:[%s298 + $0x50] sm:$0xff]
      %v349 = vld [vmem:[%s298 + $0x58] sm:$0xff]
      %v350 = vld [vmem:[%s298 + $0x60] sm:$0xff]
      %364 = vrot.lane.b32.xlu0 %v338, 127
      %v365 = vpop.permute.xlu0 %364
      %366 = vrot.lane.b32.xlu0 %v339, 127
      %v367 = vpop.permute.xlu0 %366
      %368 = vrot.lane.b32.xlu0 %v340, 127
      %v369 = vpop.permute.xlu0 %368
      %370 = vrot.lane.b32.xlu0 %v341, 127
      %v371 = vpop.permute.xlu0 %370
      %372 = vrot.lane.b32.xlu0 %v342, 127
      %v373 = vpop.permute.xlu0 %372
      %374 = vrot.lane.b32.xlu0 %v343, 127
      %v375 = vpop.permute.xlu0 %374
      %376 = vrot.lane.b32.xlu0 %v344, 127
      %v377 = vpop.permute.xlu0 %376
      %378 = vrot.lane.b32.xlu0 %v345, 127
      %v379 = vpop.permute.xlu0 %378
      %380 = vrot.lane.b32.xlu0 %v346, 127
      %v381 = vpop.permute.xlu0 %380
      %382 = vrot.lane.b32.xlu0 %v347, 127
      %v383 = vpop.permute.xlu0 %382
      %384 = vrot.lane.b32.xlu0 %v348, 127
      %v385 = vpop.permute.xlu0 %384
      %386 = vrot.lane.b32.xlu0 %v349, 127
      %v387 = vpop.permute.xlu0 %386
      %388 = vrot.lane.b32.xlu0 %v350, 127
      %v389 = vpop.permute.xlu0 %388
      %vm390 = vcmask 1039360
      %v391 = vsel %vm390, %v365, %v367
      %v392 = vsel %vm390, %v367, %v369
      %v393 = vsel %vm390, %v369, %v371
      %v394 = vsel %vm390, %v371, %v373
      %v395 = vsel %vm390, %v373, %v375
      %v396 = vsel %vm390, %v375, %v377
      %v397 = vsel %vm390, %v377, %v379
      %v398 = vsel %vm390, %v379, %v381
      %v399 = vsel %vm390, %v381, %v383
      %v400 = vsel %vm390, %v383, %v385
      %v401 = vsel %vm390, %v385, %v387
      %v402 = vsel %vm390, %v387, %v389
      %416 = vst [vmem:[#allocation2 + $0x68] sm:$0xff] %v391
      %417 = vst [vmem:[#allocation2 + $0x70] sm:$0xff] %v392
      %418 = vst [vmem:[#allocation2 + $0x78] sm:$0xff] %v393
      %419 = vst [vmem:[#allocation2 + $0x80] sm:$0xff] %v394
      %420 = vst [vmem:[#allocation2 + $0x88] sm:$0xff] %v395
      %421 = vst [vmem:[#allocation2 + $0x90] sm:$0xff] %v396
      %422 = vst [vmem:[#allocation2 + $0x98] sm:$0xff] %v397
      %423 = vst [vmem:[#allocation2 + $0xa0] sm:$0xff] %v398
      %424 = vst [vmem:[#allocation2 + $0xa8] sm:$0xff] %v399
      %425 = vst [vmem:[#allocation2 + $0xb0] sm:$0xff] %v400
      %426 = vst [vmem:[#allocation2 + $0xb8] sm:$0xff] %v401
      %427 = vst [vmem:[#allocation2 + $0xc0] sm:$0xff] %v402
      %428 = vst.msk [vmem:[#allocation2 + $0xc8] sm:$0xff] %vm336, %v389
      %v429 = vld [vmem:[%s298] sm:$0xff]
      %v430 = vld [vmem:[%s298 + $0x8] sm:$0xff]
      %v431 = vld [vmem:[%s298 + $0x10] sm:$0xff]
      %v432 = vld [vmem:[%s298 + $0x18] sm:$0xff]
      %v433 = vld [vmem:[%s298 + $0x20] sm:$0xff]
      %v434 = vld [vmem:[%s298 + $0x28] sm:$0xff]
      %v435 = vld [vmem:[%s298 + $0x30] sm:$0xff]
      %v436 = vld [vmem:[%s298 + $0x38] sm:$0xff]
      %v437 = vld [vmem:[%s298 + $0x40] sm:$0xff]
      %v438 = vld [vmem:[%s298 + $0x48] sm:$0xff]
      %v439 = vld [vmem:[%s298 + $0x50] sm:$0xff]
      %v440 = vld [vmem:[%s298 + $0x58] sm:$0xff]
      %v441 = vld [vmem:[%s298 + $0x60] sm:$0xff]
      %455 = vrot.lane.b32.xlu0 %v429, 126
      %v456 = vpop.permute.xlu0 %455
      %457 = vrot.lane.b32.xlu0 %v430, 126
      %v458 = vpop.permute.xlu0 %457
      %459 = vrot.lane.b32.xlu0 %v431, 126
      %v460 = vpop.permute.xlu0 %459
      %461 = vrot.lane.b32.xlu0 %v432, 126
      %v462 = vpop.permute.xlu0 %461
      %463 = vrot.lane.b32.xlu0 %v433, 126
      %v464 = vpop.permute.xlu0 %463
      %465 = vrot.lane.b32.xlu0 %v434, 126
      %v466 = vpop.permute.xlu0 %465
      %467 = vrot.lane.b32.xlu0 %v435, 126
      %v468 = vpop.permute.xlu0 %467
      %469 = vrot.lane.b32.xlu0 %v436, 126
      %v470 = vpop.permute.xlu0 %469
      %471 = vrot.lane.b32.xlu0 %v437, 126
      %v472 = vpop.permute.xlu0 %471
      %473 = vrot.lane.b32.xlu0 %v438, 126
      %v474 = vpop.permute.xlu0 %473
      %475 = vrot.lane.b32.xlu0 %v439, 126
      %v476 = vpop.permute.xlu0 %475
      %477 = vrot.lane.b32.xlu0 %v440, 126
      %v478 = vpop.permute.xlu0 %477
      %479 = vrot.lane.b32.xlu0 %v441, 126
      %v480 = vpop.permute.xlu0 %479
      %vm481 = vcmask 1031168
      %v482 = vsel %vm481, %v456, %v458
      %v483 = vsel %vm481, %v458, %v460
      %v484 = vsel %vm481, %v460, %v462
      %v485 = vsel %vm481, %v462, %v464
      %v486 = vsel %vm481, %v464, %v466
      %v487 = vsel %vm481, %v466, %v468
      %v488 = vsel %vm481, %v468, %v470
      %v489 = vsel %vm481, %v470, %v472
      %v490 = vsel %vm481, %v472, %v474
      %v491 = vsel %vm481, %v474, %v476
      %v492 = vsel %vm481, %v476, %v478
      %v493 = vsel %vm481, %v478, %v480
      %507 = vst [vmem:[#allocation2 + $0xd0] sm:$0xff] %v482
      %508 = vst [vmem:[#allocation2 + $0xd8] sm:$0xff] %v483
      %509 = vst [vmem:[#allocation2 + $0xe0] sm:$0xff] %v484
      %510 = vst [vmem:[#allocation2 + $0xe8] sm:$0xff] %v485
      %511 = vst [vmem:[#allocation2 + $0xf0] sm:$0xff] %v486
      %512 = vst [vmem:[#allocation2 + $0xf8] sm:$0xff] %v487
      %513 = vst [vmem:[#allocation2 + $0x100] sm:$0xff] %v488
      %514 = vst [vmem:[#allocation2 + $0x108] sm:$0xff] %v489
      %515 = vst [vmem:[#allocation2 + $0x110] sm:$0xff] %v490
      %516 = vst [vmem:[#allocation2 + $0x118] sm:$0xff] %v491
      %517 = vst [vmem:[#allocation2 + $0x120] sm:$0xff] %v492
      %518 = vst [vmem:[#allocation2 + $0x128] sm:$0xff] %v493
      %519 = vst.msk [vmem:[#allocation2 + $0x130] sm:$0xff] %vm336, %v480
      %v520 = vld [vmem:[%s298] sm:$0xff]
      %v521 = vld [vmem:[%s298 + $0x8] sm:$0xff]
      %v522 = vld [vmem:[%s298 + $0x10] sm:$0xff]
      %v523 = vld [vmem:[%s298 + $0x18] sm:$0xff]
      %v524 = vld [vmem:[%s298 + $0x20] sm:$0xff]
      %v525 = vld [vmem:[%s298 + $0x28] sm:$0xff]
      %v526 = vld [vmem:[%s298 + $0x30] sm:$0xff]
      %v527 = vld [vmem:[%s298 + $0x38] sm:$0xff]
      %v528 = vld [vmem:[%s298 + $0x40] sm:$0xff]
      %v529 = vld [vmem:[%s298 + $0x48] sm:$0xff]
      %v530 = vld [vmem:[%s298 + $0x50] sm:$0xff]
      %v531 = vld [vmem:[%s298 + $0x58] sm:$0xff]
      %v532 = vld [vmem:[%s298 + $0x60] sm:$0xff]
      %546 = vrot.lane.b32.xlu0 %v520, 108
      %v547 = vpop.permute.xlu0 %546
      %548 = vrot.lane.b32.xlu0 %v521, 108
      %v549 = vpop.permute.xlu0 %548
      %550 = vrot.lane.b32.xlu0 %v522, 108
      %v551 = vpop.permute.xlu0 %550
      %552 = vrot.lane.b32.xlu0 %v523, 108
      %v553 = vpop.permute.xlu0 %552
      %554 = vrot.lane.b32.xlu0 %v524, 108
      %v555 = vpop.permute.xlu0 %554
      %556 = vrot.lane.b32.xlu0 %v525, 108
      %v557 = vpop.permute.xlu0 %556
      %558 = vrot.lane.b32.xlu0 %v526, 108
      %v559 = vpop.permute.xlu0 %558
      %560 = vrot.lane.b32.xlu0 %v527, 108
      %v561 = vpop.permute.xlu0 %560
      %562 = vrot.lane.b32.xlu0 %v528, 108
      %v563 = vpop.permute.xlu0 %562
      %564 = vrot.lane.b32.xlu0 %v529, 108
      %v565 = vpop.permute.xlu0 %564
      %566 = vrot.lane.b32.xlu0 %v530, 108
      %v567 = vpop.permute.xlu0 %566
      %568 = vrot.lane.b32.xlu0 %v531, 108
      %v569 = vpop.permute.xlu0 %568
      %570 = vrot.lane.b32.xlu0 %v532, 108
      %v571 = vpop.permute.xlu0 %570
      %vm572 = vcmask 883712
      %v573 = vsel %vm572, %v547, %v549
      %v574 = vsel %vm572, %v549, %v551
      %v575 = vsel %vm572, %v551, %v553
      %v576 = vsel %vm572, %v553, %v555
      %v577 = vsel %vm572, %v555, %v557
      %v578 = vsel %vm572, %v557, %v559
      %v579 = vsel %vm572, %v559, %v561
      %v580 = vsel %vm572, %v561, %v563
      %v581 = vsel %vm572, %v563, %v565
      %v582 = vsel %vm572, %v565, %v567
      %v583 = vsel %vm572, %v567, %v569
      %v584 = vsel %vm572, %v569, %v571
      %598 = vst [vmem:[#allocation2 + $0x138] sm:$0xff] %v573
      %599 = vst [vmem:[#allocation2 + $0x140] sm:$0xff] %v574
      %600 = vst [vmem:[#allocation2 + $0x148] sm:$0xff] %v575
      %601 = vst [vmem:[#allocation2 + $0x150] sm:$0xff] %v576
      %602 = vst [vmem:[#allocation2 + $0x158] sm:$0xff] %v577
      %603 = vst [vmem:[#allocation2 + $0x160] sm:$0xff] %v578
      %604 = vst [vmem:[#allocation2 + $0x168] sm:$0xff] %v579
      %605 = vst [vmem:[#allocation2 + $0x170] sm:$0xff] %v580
      %606 = vst [vmem:[#allocation2 + $0x178] sm:$0xff] %v581
      %607 = vst [vmem:[#allocation2 + $0x180] sm:$0xff] %v582
      %608 = vst [vmem:[#allocation2 + $0x188] sm:$0xff] %v583
      %609 = vst [vmem:[#allocation2 + $0x190] sm:$0xff] %v584
      %610 = vst.msk [vmem:[#allocation2 + $0x198] sm:$0xff] %vm336, %v571
      %v611 = vld [vmem:[%s298] sm:$0xff]
      %v612 = vld [vmem:[%s298 + $0x8] sm:$0xff]
      %v613 = vld [vmem:[%s298 + $0x10] sm:$0xff]
      %v614 = vld [vmem:[%s298 + $0x18] sm:$0xff]
      %v615 = vld [vmem:[%s298 + $0x20] sm:$0xff]
      %v616 = vld [vmem:[%s298 + $0x28] sm:$0xff]
      %v617 = vld [vmem:[%s298 + $0x30] sm:$0xff]
      %v618 = vld [vmem:[%s298 + $0x38] sm:$0xff]
      %v619 = vld [vmem:[%s298 + $0x40] sm:$0xff]
      %v620 = vld [vmem:[%s298 + $0x48] sm:$0xff]
      %v621 = vld [vmem:[%s298 + $0x50] sm:$0xff]
      %v622 = vld [vmem:[%s298 + $0x58] sm:$0xff]
      %v623 = vld [vmem:[%s298 + $0x60] sm:$0xff]
      %637 = vrot.lane.b32.xlu0 %v611, 107
      %v638 = vpop.permute.xlu0 %637
      %639 = vrot.lane.b32.xlu0 %v612, 107
      %v640 = vpop.permute.xlu0 %639
      %641 = vrot.lane.b32.xlu0 %v613, 107
      %v642 = vpop.permute.xlu0 %641
      %643 = vrot.lane.b32.xlu0 %v614, 107
      %v644 = vpop.permute.xlu0 %643
      %645 = vrot.lane.b32.xlu0 %v615, 107
      %v646 = vpop.permute.xlu0 %645
      %647 = vrot.lane.b32.xlu0 %v616, 107
      %v648 = vpop.permute.xlu0 %647
      %649 = vrot.lane.b32.xlu0 %v617, 107
      %v650 = vpop.permute.xlu0 %649
      %651 = vrot.lane.b32.xlu0 %v618, 107
      %v652 = vpop.permute.xlu0 %651
      %653 = vrot.lane.b32.xlu0 %v619, 107
      %v654 = vpop.permute.xlu0 %653
      %655 = vrot.lane.b32.xlu0 %v620, 107
      %v656 = vpop.permute.xlu0 %655
      %657 = vrot.lane.b32.xlu0 %v621, 107
      %v658 = vpop.permute.xlu0 %657
      %659 = vrot.lane.b32.xlu0 %v622, 107
      %v660 = vpop.permute.xlu0 %659
      %661 = vrot.lane.b32.xlu0 %v623, 107
      %v662 = vpop.permute.xlu0 %661
      %vm663 = vcmask 875520
      %v664 = vsel %vm663, %v638, %v640
      %v665 = vsel %vm663, %v640, %v642
      %v666 = vsel %vm663, %v642, %v644
      %v667 = vsel %vm663, %v644, %v646
      %v668 = vsel %vm663, %v646, %v648
      %v669 = vsel %vm663, %v648, %v650
      %v670 = vsel %vm663, %v650, %v652
      %v671 = vsel %vm663, %v652, %v654
      %v672 = vsel %vm663, %v654, %v656
      %v673 = vsel %vm663, %v656, %v658
      %v674 = vsel %vm663, %v658, %v660
      %v675 = vsel %vm663, %v660, %v662
      %689 = vst [vmem:[#allocation2 + $0x1a0] sm:$0xff] %v664
      %690 = vst [vmem:[#allocation2 + $0x1a8] sm:$0xff] %v665
      %691 = vst [vmem:[#allocation2 + $0x1b0] sm:$0xff] %v666
      %692 = vst [vmem:[#allocation2 + $0x1b8] sm:$0xff] %v667
      %693 = vst [vmem:[#allocation2 + $0x1c0] sm:$0xff] %v668
      %694 = vst [vmem:[#allocation2 + $0x1c8] sm:$0xff] %v669
      %695 = vst [vmem:[#allocation2 + $0x1d0] sm:$0xff] %v670
      %696 = vst [vmem:[#allocation2 + $0x1d8] sm:$0xff] %v671
      %697 = vst [vmem:[#allocation2 + $0x1e0] sm:$0xff] %v672
      %698 = vst [vmem:[#allocation2 + $0x1e8] sm:$0xff] %v673
      %699 = vst [vmem:[#allocation2 + $0x1f0] sm:$0xff] %v674
      %700 = vst [vmem:[#allocation2 + $0x1f8] sm:$0xff] %v675
      %701 = vst.msk [vmem:[#allocation2 + $0x200] sm:$0xff] %vm336, %v662
      %v702 = vld [vmem:[%s298] sm:$0xff]
      %v703 = vld [vmem:[%s298 + $0x8] sm:$0xff]
      %v704 = vld [vmem:[%s298 + $0x10] sm:$0xff]
      %v705 = vld [vmem:[%s298 + $0x18] sm:$0xff]
      %v706 = vld [vmem:[%s298 + $0x20] sm:$0xff]
      %v707 = vld [vmem:[%s298 + $0x28] sm:$0xff]
      %v708 = vld [vmem:[%s298 + $0x30] sm:$0xff]
      %v709 = vld [vmem:[%s298 + $0x38] sm:$0xff]
      %v710 = vld [vmem:[%s298 + $0x40] sm:$0xff]
      %v711 = vld [vmem:[%s298 + $0x48] sm:$0xff]
      %v712 = vld [vmem:[%s298 + $0x50] sm:$0xff]
      %v713 = vld [vmem:[%s298 + $0x58] sm:$0xff]
      %v714 = vld [vmem:[%s298 + $0x60] sm:$0xff]
      %728 = vrot.lane.b32.xlu0 %v702, 106
      %v729 = vpop.permute.xlu0 %728
      %730 = vrot.lane.b32.xlu0 %v703, 106
      %v731 = vpop.permute.xlu0 %730
      %732 = vrot.lane.b32.xlu0 %v704, 106
      %v733 = vpop.permute.xlu0 %732
      %734 = vrot.lane.b32.xlu0 %v705, 106
      %v735 = vpop.permute.xlu0 %734
      %736 = vrot.lane.b32.xlu0 %v706, 106
      %v737 = vpop.permute.xlu0 %736
      %738 = vrot.lane.b32.xlu0 %v707, 106
      %v739 = vpop.permute.xlu0 %738
      %740 = vrot.lane.b32.xlu0 %v708, 106
      %v741 = vpop.permute.xlu0 %740
      %742 = vrot.lane.b32.xlu0 %v709, 106
      %v743 = vpop.permute.xlu0 %742
      %744 = vrot.lane.b32.xlu0 %v710, 106
      %v745 = vpop.permute.xlu0 %744
      %746 = vrot.lane.b32.xlu0 %v711, 106
      %v747 = vpop.permute.xlu0 %746
      %748 = vrot.lane.b32.xlu0 %v712, 106
      %v749 = vpop.permute.xlu0 %748
      %750 = vrot.lane.b32.xlu0 %v713, 106
      %v751 = vpop.permute.xlu0 %750
      %752 = vrot.lane.b32.xlu0 %v714, 106
      %v753 = vpop.permute.xlu0 %752
      %vm754 = vcmask 867328
      %v755 = vsel %vm754, %v729, %v731
      %v756 = vsel %vm754, %v731, %v733
      %v757 = vsel %vm754, %v733, %v735
      %v758 = vsel %vm754, %v735, %v737
      %v759 = vsel %vm754, %v737, %v739
      %v760 = vsel %vm754, %v739, %v741
      %v761 = vsel %vm754, %v741, %v743
      %v762 = vsel %vm754, %v743, %v745
      %v763 = vsel %vm754, %v745, %v747
      %v764 = vsel %vm754, %v747, %v749
      %v765 = vsel %vm754, %v749, %v751
      %v766 = vsel %vm754, %v751, %v753
      %780 = vst [vmem:[#allocation2 + $0x208] sm:$0xff] %v755
      %781 = vst [vmem:[#allocation2 + $0x210] sm:$0xff] %v756
      %782 = vst [vmem:[#allocation2 + $0x218] sm:$0xff] %v757
      %783 = vst [vmem:[#allocation2 + $0x220] sm:$0xff] %v758
      %784 = vst [vmem:[#allocation2 + $0x228] sm:$0xff] %v759
      %785 = vst [vmem:[#allocation2 + $0x230] sm:$0xff] %v760
      %786 = vst [vmem:[#allocation2 + $0x238] sm:$0xff] %v761
      %787 = vst [vmem:[#allocation2 + $0x240] sm:$0xff] %v762
      %788 = vst [vmem:[#allocation2 + $0x248] sm:$0xff] %v763
      %789 = vst [vmem:[#allocation2 + $0x250] sm:$0xff] %v764
      %790 = vst [vmem:[#allocation2 + $0x258] sm:$0xff] %v765
      %791 = vst [vmem:[#allocation2 + $0x260] sm:$0xff] %v766
      %792 = vst.msk [vmem:[#allocation2 + $0x268] sm:$0xff] %vm336, %v753
      %v793 = vld [vmem:[%s298] sm:$0xff]
      %v794 = vld [vmem:[%s298 + $0x8] sm:$0xff]
      %v795 = vld [vmem:[%s298 + $0x10] sm:$0xff]
      %v796 = vld [vmem:[%s298 + $0x18] sm:$0xff]
      %v797 = vld [vmem:[%s298 + $0x20] sm:$0xff]
      %v798 = vld [vmem:[%s298 + $0x28] sm:$0xff]
      %v799 = vld [vmem:[%s298 + $0x30] sm:$0xff]
      %v800 = vld [vmem:[%s298 + $0x38] sm:$0xff]
      %v801 = vld [vmem:[%s298 + $0x40] sm:$0xff]
      %v802 = vld [vmem:[%s298 + $0x48] sm:$0xff]
      %v803 = vld [vmem:[%s298 + $0x50] sm:$0xff]
      %v804 = vld [vmem:[%s298 + $0x58] sm:$0xff]
      %v805 = vld [vmem:[%s298 + $0x60] sm:$0xff]
      %819 = vrot.lane.b32.xlu0 %v793, 88
      %v820 = vpop.permute.xlu0 %819
      %821 = vrot.lane.b32.xlu0 %v794, 88
      %v822 = vpop.permute.xlu0 %821
      %823 = vrot.lane.b32.xlu0 %v795, 88
      %v824 = vpop.permute.xlu0 %823
      %825 = vrot.lane.b32.xlu0 %v796, 88
      %v826 = vpop.permute.xlu0 %825
      %827 = vrot.lane.b32.xlu0 %v797, 88
      %v828 = vpop.permute.xlu0 %827
      %829 = vrot.lane.b32.xlu0 %v798, 88
      %v830 = vpop.permute.xlu0 %829
      %831 = vrot.lane.b32.xlu0 %v799, 88
      %v832 = vpop.permute.xlu0 %831
      %833 = vrot.lane.b32.xlu0 %v800, 88
      %v834 = vpop.permute.xlu0 %833
      %835 = vrot.lane.b32.xlu0 %v801, 88
      %v836 = vpop.permute.xlu0 %835
      %837 = vrot.lane.b32.xlu0 %v802, 88
      %v838 = vpop.permute.xlu0 %837
      %839 = vrot.lane.b32.xlu0 %v803, 88
      %v840 = vpop.permute.xlu0 %839
      %841 = vrot.lane.b32.xlu0 %v804, 88
      %v842 = vpop.permute.xlu0 %841
      %843 = vrot.lane.b32.xlu0 %v805, 88
      %v844 = vpop.permute.xlu0 %843
      %vm845 = vcmask 719872
      %v846 = vsel %vm845, %v820, %v822
      %v847 = vsel %vm845, %v822, %v824
      %v848 = vsel %vm845, %v824, %v826
      %v849 = vsel %vm845, %v826, %v828
      %v850 = vsel %vm845, %v828, %v830
      %v851 = vsel %vm845, %v830, %v832
      %v852 = vsel %vm845, %v832, %v834
      %v853 = vsel %vm845, %v834, %v836
      %v854 = vsel %vm845, %v836, %v838
      %v855 = vsel %vm845, %v838, %v840
      %v856 = vsel %vm845, %v840, %v842
      %v857 = vsel %vm845, %v842, %v844
      %871 = vst [vmem:[#allocation2 + $0x270] sm:$0xff] %v846
      %872 = vst [vmem:[#allocation2 + $0x278] sm:$0xff] %v847
      %873 = vst [vmem:[#allocation2 + $0x280] sm:$0xff] %v848
      %874 = vst [vmem:[#allocation2 + $0x288] sm:$0xff] %v849
      %875 = vst [vmem:[#allocation2 + $0x290] sm:$0xff] %v850
      %876 = vst [vmem:[#allocation2 + $0x298] sm:$0xff] %v851
      %877 = vst [vmem:[#allocation2 + $0x2a0] sm:$0xff] %v852
      %878 = vst [vmem:[#allocation2 + $0x2a8] sm:$0xff] %v853
      %879 = vst [vmem:[#allocation2 + $0x2b0] sm:$0xff] %v854
      %880 = vst [vmem:[#allocation2 + $0x2b8] sm:$0xff] %v855
      %881 = vst [vmem:[#allocation2 + $0x2c0] sm:$0xff] %v856
      %882 = vst [vmem:[#allocation2 + $0x2c8] sm:$0xff] %v857
      %883 = vst.msk [vmem:[#allocation2 + $0x2d0] sm:$0xff] %vm336, %v844
      %v884 = vld [vmem:[%s298] sm:$0xff]
      %v885 = vld [vmem:[%s298 + $0x8] sm:$0xff]
      %v886 = vld [vmem:[%s298 + $0x10] sm:$0xff]
      %v887 = vld [vmem:[%s298 + $0x18] sm:$0xff]
      %v888 = vld [vmem:[%s298 + $0x20] sm:$0xff]
      %v889 = vld [vmem:[%s298 + $0x28] sm:$0xff]
      %v890 = vld [vmem:[%s298 + $0x30] sm:$0xff]
      %v891 = vld [vmem:[%s298 + $0x38] sm:$0xff]
      %v892 = vld [vmem:[%s298 + $0x40] sm:$0xff]
      %v893 = vld [vmem:[%s298 + $0x48] sm:$0xff]
      %v894 = vld [vmem:[%s298 + $0x50] sm:$0xff]
      %v895 = vld [vmem:[%s298 + $0x58] sm:$0xff]
      %v896 = vld [vmem:[%s298 + $0x60] sm:$0xff]
      %910 = vrot.lane.b32.xlu0 %v884, 87
      %v911 = vpop.permute.xlu0 %910
      %912 = vrot.lane.b32.xlu0 %v885, 87
      %v913 = vpop.permute.xlu0 %912
      %914 = vrot.lane.b32.xlu0 %v886, 87
      %v915 = vpop.permute.xlu0 %914
      %916 = vrot.lane.b32.xlu0 %v887, 87
      %v917 = vpop.permute.xlu0 %916
      %918 = vrot.lane.b32.xlu0 %v888, 87
      %v919 = vpop.permute.xlu0 %918
      %920 = vrot.lane.b32.xlu0 %v889, 87
      %v921 = vpop.permute.xlu0 %920
      %922 = vrot.lane.b32.xlu0 %v890, 87
      %v923 = vpop.permute.xlu0 %922
      %924 = vrot.lane.b32.xlu0 %v891, 87
      %v925 = vpop.permute.xlu0 %924
      %926 = vrot.lane.b32.xlu0 %v892, 87
      %v927 = vpop.permute.xlu0 %926
      %928 = vrot.lane.b32.xlu0 %v893, 87
      %v929 = vpop.permute.xlu0 %928
      %930 = vrot.lane.b32.xlu0 %v894, 87
      %v931 = vpop.permute.xlu0 %930
      %932 = vrot.lane.b32.xlu0 %v895, 87
      %v933 = vpop.permute.xlu0 %932
      %934 = vrot.lane.b32.xlu0 %v896, 87
      %v935 = vpop.permute.xlu0 %934
      %vm936 = vcmask 711680
      %v937 = vsel %vm936, %v911, %v913
      %v938 = vsel %vm936, %v913, %v915
      %v939 = vsel %vm936, %v915, %v917
      %v940 = vsel %vm936, %v917, %v919
      %v941 = vsel %vm936, %v919, %v921
      %v942 = vsel %vm936, %v921, %v923
      %v943 = vsel %vm936, %v923, %v925
      %v944 = vsel %vm936, %v925, %v927
      %v945 = vsel %vm936, %v927, %v929
      %v946 = vsel %vm936, %v929, %v931
      %v947 = vsel %vm936, %v931, %v933
      %v948 = vsel %vm936, %v933, %v935
      %962 = vst [vmem:[#allocation2 + $0x2d8] sm:$0xff] %v937
      %963 = vst [vmem:[#allocation2 + $0x2e0] sm:$0xff] %v938
      %964 = vst [vmem:[#allocation2 + $0x2e8] sm:$0xff] %v939
      %965 = vst [vmem:[#allocation2 + $0x2f0] sm:$0xff] %v940
      %966 = vst [vmem:[#allocation2 + $0x2f8] sm:$0xff] %v941
      %967 = vst [vmem:[#allocation2 + $0x300] sm:$0xff] %v942
      %968 = vst [vmem:[#allocation2 + $0x308] sm:$0xff] %v943
      %969 = vst [vmem:[#allocation2 + $0x310] sm:$0xff] %v944
      %970 = vst [vmem:[#allocation2 + $0x318] sm:$0xff] %v945
      %971 = vst [vmem:[#allocation2 + $0x320] sm:$0xff] %v946
      %972 = vst [vmem:[#allocation2 + $0x328] sm:$0xff] %v947
      %973 = vst [vmem:[#allocation2 + $0x330] sm:$0xff] %v948
      %974 = vst.msk [vmem:[#allocation2 + $0x338] sm:$0xff] %vm336, %v935
      %v975 = vld [vmem:[%s298] sm:$0xff]
      %v976 = vld [vmem:[%s298 + $0x8] sm:$0xff]
      %v977 = vld [vmem:[%s298 + $0x10] sm:$0xff]
      %v978 = vld [vmem:[%s298 + $0x18] sm:$0xff]
      %v979 = vld [vmem:[%s298 + $0x20] sm:$0xff]
      %v980 = vld [vmem:[%s298 + $0x28] sm:$0xff]
      %v981 = vld [vmem:[%s298 + $0x30] sm:$0xff]
      %v982 = vld [vmem:[%s298 + $0x38] sm:$0xff]
      %v983 = vld [vmem:[%s298 + $0x40] sm:$0xff]
      %v984 = vld [vmem:[%s298 + $0x48] sm:$0xff]
      %v985 = vld [vmem:[%s298 + $0x50] sm:$0xff]
      %v986 = vld [vmem:[%s298 + $0x58] sm:$0xff]
      %v987 = vld [vmem:[%s298 + $0x60] sm:$0xff]
      %1001 = vrot.lane.b32.xlu0 %v975, 86
      %v1002 = vpop.permute.xlu0 %1001
      %1003 = vrot.lane.b32.xlu0 %v976, 86
      %v1004 = vpop.permute.xlu0 %1003
      %1005 = vrot.lane.b32.xlu0 %v977, 86
      %v1006 = vpop.permute.xlu0 %1005
      %1007 = vrot.lane.b32.xlu0 %v978, 86
      %v1008 = vpop.permute.xlu0 %1007
      %1009 = vrot.lane.b32.xlu0 %v979, 86
      %v1010 = vpop.permute.xlu0 %1009
      %1011 = vrot.lane.b32.xlu0 %v980, 86
      %v1012 = vpop.permute.xlu0 %1011
      %1013 = vrot.lane.b32.xlu0 %v981, 86
      %v1014 = vpop.permute.xlu0 %1013
      %1015 = vrot.lane.b32.xlu0 %v982, 86
      %v1016 = vpop.permute.xlu0 %1015
      %1017 = vrot.lane.b32.xlu0 %v983, 86
      %v1018 = vpop.permute.xlu0 %1017
      %1019 = vrot.lane.b32.xlu0 %v984, 86
      %v1020 = vpop.permute.xlu0 %1019
      %1021 = vrot.lane.b32.xlu0 %v985, 86
      %v1022 = vpop.permute.xlu0 %1021
      %1023 = vrot.lane.b32.xlu0 %v986, 86
      %v1024 = vpop.permute.xlu0 %1023
      %1025 = vrot.lane.b32.xlu0 %v987, 86
      %v1026 = vpop.permute.xlu0 %1025
      %vm1027 = vcmask 703488
      %v1028 = vsel %vm1027, %v1002, %v1004
      %v1029 = vsel %vm1027, %v1004, %v1006
      %v1030 = vsel %vm1027, %v1006, %v1008
      %v1031 = vsel %vm1027, %v1008, %v1010
      %v1032 = vsel %vm1027, %v1010, %v1012
      %v1033 = vsel %vm1027, %v1012, %v1014
      %v1034 = vsel %vm1027, %v1014, %v1016
      %v1035 = vsel %vm1027, %v1016, %v1018
      %v1036 = vsel %vm1027, %v1018, %v1020
      %v1037 = vsel %vm1027, %v1020, %v1022
      %v1038 = vsel %vm1027, %v1022, %v1024
      %v1039 = vsel %vm1027, %v1024, %v1026
      %1053 = vst [vmem:[#allocation2 + $0x340] sm:$0xff] %v1028
      %1054 = vst [vmem:[#allocation2 + $0x348] sm:$0xff] %v1029
      %1055 = vst [vmem:[#allocation2 + $0x350] sm:$0xff] %v1030
      %1056 = vst [vmem:[#allocation2 + $0x358] sm:$0xff] %v1031
      %1057 = vst [vmem:[#allocation2 + $0x360] sm:$0xff] %v1032
      %1058 = vst [vmem:[#allocation2 + $0x368] sm:$0xff] %v1033
      %1059 = vst [vmem:[#allocation2 + $0x370] sm:$0xff] %v1034
      %1060 = vst [vmem:[#allocation2 + $0x378] sm:$0xff] %v1035
      %1061 = vst [vmem:[#allocation2 + $0x380] sm:$0xff] %v1036
      %1062 = vst [vmem:[#allocation2 + $0x388] sm:$0xff] %v1037
      %1063 = vst [vmem:[#allocation2 + $0x390] sm:$0xff] %v1038
      %1064 = vst [vmem:[#allocation2 + $0x398] sm:$0xff] %v1039
      %1065 = vst.msk [vmem:[#allocation2 + $0x3a0] sm:$0xff] %vm336, %v1026
      %v1066 = vld [vmem:[%s3] sm:$0xff]
      %v1067 = vld [vmem:[%s4] sm:$0xff]
      %v1068 = vld [vmem:[#allocation2] sm:$0xff]
      %v1069 = vld [vmem:[#allocation2 + $0x8] sm:$0xff]
      %v1070 = vld [vmem:[#allocation2 + $0x10] sm:$0xff]
      %v1071 = vld [vmem:[#allocation2 + $0x18] sm:$0xff]
      %v1072 = vld [vmem:[#allocation2 + $0x20] sm:$0xff]
      %v1073 = vld [vmem:[#allocation2 + $0x28] sm:$0xff]
      %v1074 = vld [vmem:[#allocation2 + $0x30] sm:$0xff]
      %v1075 = vld [vmem:[#allocation2 + $0x38] sm:$0xff]
      %v1076 = vld [vmem:[#allocation2 + $0x40] sm:$0xff]
      %v1077 = vld [vmem:[#allocation2 + $0x48] sm:$0xff]
      %v1078 = vld [vmem:[#allocation2 + $0x50] sm:$0xff]
      %v1079 = vld [vmem:[#allocation2 + $0x58] sm:$0xff]
      %v1080 = vld [vmem:[#allocation2 + $0x60] sm:$0xff]
      %v1081 = vld [vmem:[#allocation2 + $0x68] sm:$0xff]
      %v1082 = vld [vmem:[#allocation2 + $0x70] sm:$0xff]
      %v1083 = vld [vmem:[#allocation2 + $0x78] sm:$0xff]
      %v1084 = vld [vmem:[#allocation2 + $0x80] sm:$0xff]
      %v1085 = vld [vmem:[#allocation2 + $0x88] sm:$0xff]
      %v1086 = vld [vmem:[#allocation2 + $0x90] sm:$0xff]
      %v1087 = vld [vmem:[#allocation2 + $0x98] sm:$0xff]
      %v1088 = vld [vmem:[#allocation2 + $0xa0] sm:$0xff]
      %v1089 = vld [vmem:[#allocation2 + $0xa8] sm:$0xff]
      %v1090 = vld [vmem:[#allocation2 + $0xb0] sm:$0xff]
      %v1091 = vld [vmem:[#allocation2 + $0xb8] sm:$0xff]
      %v1092 = vld [vmem:[#allocation2 + $0xc0] sm:$0xff]
      %v1093 = vld [vmem:[#allocation2 + $0xc8] sm:$0xff]
      %v1094 = vld [vmem:[#allocation2 + $0xd0] sm:$0xff]
      %v1095 = vld [vmem:[#allocation2 + $0xd8] sm:$0xff]
      %v1096 = vld [vmem:[#allocation2 + $0xe0] sm:$0xff]
      %v1097 = vld [vmem:[#allocation2 + $0xe8] sm:$0xff]
      %v1098 = vld [vmem:[#allocation2 + $0xf0] sm:$0xff]
      %v1099 = vld [vmem:[#allocation2 + $0xf8] sm:$0xff]
      %v1100 = vld [vmem:[#allocation2 + $0x100] sm:$0xff]
      %v1101 = vld [vmem:[#allocation2 + $0x108] sm:$0xff]
      %v1102 = vld [vmem:[#allocation2 + $0x110] sm:$0xff]
      %v1103 = vld [vmem:[#allocation2 + $0x118] sm:$0xff]
      %v1104 = vld [vmem:[#allocation2 + $0x120] sm:$0xff]
      %v1105 = vld [vmem:[#allocation2 + $0x128] sm:$0xff]
      %v1106 = vld [vmem:[#allocation2 + $0x130] sm:$0xff]
      %v1107 = vld [vmem:[#allocation2 + $0x138] sm:$0xff]
      %v1108 = vld [vmem:[#allocation2 + $0x140] sm:$0xff]
      %v1109 = vld [vmem:[#allocation2 + $0x148] sm:$0xff]
      %v1110 = vld [vmem:[#allocation2 + $0x150] sm:$0xff]
      %v1111 = vld [vmem:[#allocation2 + $0x158] sm:$0xff]
      %v1112 = vld [vmem:[#allocation2 + $0x160] sm:$0xff]
      %v1113 = vld [vmem:[#allocation2 + $0x168] sm:$0xff]
      %v1114 = vld [vmem:[#allocation2 + $0x170] sm:$0xff]
      %v1115 = vld [vmem:[#allocation2 + $0x178] sm:$0xff]
      %v1116 = vld [vmem:[#allocation2 + $0x180] sm:$0xff]
      %v1117 = vld [vmem:[#allocation2 + $0x188] sm:$0xff]
      %v1118 = vld [vmem:[#allocation2 + $0x190] sm:$0xff]
      %v1119 = vld [vmem:[#allocation2 + $0x198] sm:$0xff]
      %v1120 = vld [vmem:[#allocation2 + $0x1a0] sm:$0xff]
      %v1121 = vld [vmem:[#allocation2 + $0x1a8] sm:$0xff]
      %v1122 = vld [vmem:[#allocation2 + $0x1b0] sm:$0xff]
      %v1123 = vld [vmem:[#allocation2 + $0x1b8] sm:$0xff]
      %v1124 = vld [vmem:[#allocation2 + $0x1c0] sm:$0xff]
      %v1125 = vld [vmem:[#allocation2 + $0x1c8] sm:$0xff]
      %v1126 = vld [vmem:[#allocation2 + $0x1d0] sm:$0xff]
      %v1127 = vld [vmem:[#allocation2 + $0x1d8] sm:$0xff]
      %v1128 = vld [vmem:[#allocation2 + $0x1e0] sm:$0xff]
      %v1129 = vld [vmem:[#allocation2 + $0x1e8] sm:$0xff]
      %v1130 = vld [vmem:[#allocation2 + $0x1f0] sm:$0xff]
      %v1131 = vld [vmem:[#allocation2 + $0x1f8] sm:$0xff]
      %v1132 = vld [vmem:[#allocation2 + $0x200] sm:$0xff]
      %v1133 = vld [vmem:[#allocation2 + $0x208] sm:$0xff]
      %v1134 = vld [vmem:[#allocation2 + $0x210] sm:$0xff]
      %v1135 = vld [vmem:[#allocation2 + $0x218] sm:$0xff]
      %v1136 = vld [vmem:[#allocation2 + $0x220] sm:$0xff]
      %v1137 = vld [vmem:[#allocation2 + $0x228] sm:$0xff]
      %v1138 = vld [vmem:[#allocation2 + $0x230] sm:$0xff]
      %v1139 = vld [vmem:[#allocation2 + $0x238] sm:$0xff]
      %v1140 = vld [vmem:[#allocation2 + $0x240] sm:$0xff]
      %v1141 = vld [vmem:[#allocation2 + $0x248] sm:$0xff]
      %v1142 = vld [vmem:[#allocation2 + $0x250] sm:$0xff]
      %v1143 = vld [vmem:[#allocation2 + $0x258] sm:$0xff]
      %v1144 = vld [vmem:[#allocation2 + $0x260] sm:$0xff]
      %v1145 = vld [vmem:[#allocation2 + $0x268] sm:$0xff]
      %v1146 = vld [vmem:[#allocation2 + $0x270] sm:$0xff]
      %v1147 = vld [vmem:[#allocation2 + $0x278] sm:$0xff]
      %v1148 = vld [vmem:[#allocation2 + $0x280] sm:$0xff]
      %v1149 = vld [vmem:[#allocation2 + $0x288] sm:$0xff]
      %v1150 = vld [vmem:[#allocation2 + $0x290] sm:$0xff]
      %v1151 = vld [vmem:[#allocation2 + $0x298] sm:$0xff]
      %v1152 = vld [vmem:[#allocation2 + $0x2a0] sm:$0xff]
      %v1153 = vld [vmem:[#allocation2 + $0x2a8] sm:$0xff]
      %v1154 = vld [vmem:[#allocation2 + $0x2b0] sm:$0xff]
      %v1155 = vld [vmem:[#allocation2 + $0x2b8] sm:$0xff]
      %v1156 = vld [vmem:[#allocation2 + $0x2c0] sm:$0xff]
      %v1157 = vld [vmem:[#allocation2 + $0x2c8] sm:$0xff]
      %v1158 = vld [vmem:[#allocation2 + $0x2d0] sm:$0xff]
      %v1159 = vld [vmem:[#allocation2 + $0x2d8] sm:$0xff]
      %v1160 = vld [vmem:[#allocation2 + $0x2e0] sm:$0xff]
      %v1161 = vld [vmem:[#allocation2 + $0x2e8] sm:$0xff]
      %v1162 = vld [vmem:[#allocation2 + $0x2f0] sm:$0xff]
      %v1163 = vld [vmem:[#allocation2 + $0x2f8] sm:$0xff]
      %v1164 = vld [vmem:[#allocation2 + $0x300] sm:$0xff]
      %v1165 = vld [vmem:[#allocation2 + $0x308] sm:$0xff]
      %v1166 = vld [vmem:[#allocation2 + $0x310] sm:$0xff]
      %v1167 = vld [vmem:[#allocation2 + $0x318] sm:$0xff]
      %v1168 = vld [vmem:[#allocation2 + $0x320] sm:$0xff]
      %v1169 = vld [vmem:[#allocation2 + $0x328] sm:$0xff]
      %v1170 = vld [vmem:[#allocation2 + $0x330] sm:$0xff]
      %v1171 = vld [vmem:[#allocation2 + $0x338] sm:$0xff]
      %v1172 = vld [vmem:[#allocation2 + $0x340] sm:$0xff]
      %v1173 = vld [vmem:[#allocation2 + $0x348] sm:$0xff]
      %v1174 = vld [vmem:[#allocation2 + $0x350] sm:$0xff]
      %v1175 = vld [vmem:[#allocation2 + $0x358] sm:$0xff]
      %v1176 = vld [vmem:[#allocation2 + $0x360] sm:$0xff]
      %v1177 = vld [vmem:[#allocation2 + $0x368] sm:$0xff]
      %v1178 = vld [vmem:[#allocation2 + $0x370] sm:$0xff]
      %v1179 = vld [vmem:[#allocation2 + $0x378] sm:$0xff]
      %v1180 = vld [vmem:[#allocation2 + $0x380] sm:$0xff]
      %v1181 = vld [vmem:[#allocation2 + $0x388] sm:$0xff]
      %v1182 = vld [vmem:[#allocation2 + $0x390] sm:$0xff]
      %v1183 = vld [vmem:[#allocation2 + $0x398] sm:$0xff]
      %v1184 = vld [vmem:[#allocation2 + $0x3a0] sm:$0xff]
      %1186 = vset.pattern.permute.xlu0 0
      %1187 = vperm.xlu0 %1186, %v1067
      %v1188 = vpop.permute.xlu0 %1187
      %vm1190 = vcmask 588800
      %v1192 = vsel %vm1190, %v1066, 0
      %1194 = vmatprep.subr.mxu0 %v1069
      %1195 = vmatpush1.msra.mxu0 %v1068
      %1196 = vmatprep.subr.mxu0 %v1082
      %1197 = vmatpush1.msra.mxu0 %v1081
      %1198 = vmatprep.subr.mxu0 %v1095
      %1199 = vmatpush1.msra.mxu0 %v1094
      %1200 = vmatprep.subr.mxu0 %v1108
      %1201 = vmatpush1.msra.mxu0 %v1107
      %1202 = vmatprep.subr.mxu0 %v1121
      %1203 = vmatpush1.msra.mxu0 %v1120
      %1204 = vmatprep.subr.mxu0 %v1134
      %1205 = vmatpush1.msra.mxu0 %v1133
      %1206 = vmatprep.subr.mxu0 %v1147
      %1207 = vmatpush1.msra.mxu0 %v1146
      %1208 = vmatprep.subr.mxu0 %v1160
      %1209 = vmatpush1.msra.mxu0 %v1159
      %1210 = vmatprep.subr.mxu0 %v1173
      %1211 = vmatpush1.msra.mxu0 %v1172
      %1212 = vmatprep.subr.mxu0 0.0
      %1213 = vmatpush1.msra.mxu0 0.0
      %1214 = vmatprep.subr.mxu0 0.0
      %1215 = vmatpush1.msra.mxu0 0.0
      %1216 = vmatprep.subr.mxu0 0.0
      %1217 = vmatpush1.msra.mxu0 0.0
      %1218 = vmatprep.subr.mxu0 0.0
      %1219 = vmatpush1.msra.mxu0 0.0
      %1220 = vmatprep.subr.mxu0 0.0
      %1221 = vmatpush1.msra.mxu0 0.0
      %1222 = vmatprep.subr.mxu0 0.0
      %1223 = vmatpush1.msra.mxu0 0.0
      %1224 = vmatprep.subr.mxu0 0.0
      %1225 = vmatpush1.msra.mxu0 0.0
      %1226 = vmatprep.subr.mxu0 0.0
      %1227 = vmatpush1.msra.mxu0 0.0
      %1228 = vmatprep.subr.mxu0 0.0
      %1229 = vmatpush1.msra.mxu0 0.0
      %1230 = vmatprep.subr.mxu0 0.0
      %1231 = vmatpush1.msra.mxu0 0.0
      %1232 = vmatprep.subr.mxu0 0.0
      %1233 = vmatpush1.msra.mxu0 0.0
      %1234 = vmatprep.subr.mxu0 0.0
      %1235 = vmatpush1.msra.mxu0 0.0
      %1236 = vmatprep.subr.mxu0 0.0
      %1237 = vmatpush1.msra.mxu0 0.0
      %1238 = vmatprep.subr.mxu0 0.0
      %1239 = vmatpush1.msra.mxu0 0.0
      %1240 = vmatprep.subr.mxu0 0.0
      %1241 = vmatpush1.msra.mxu0 0.0
      %1242 = vmatprep.subr.mxu0 0.0
      %1243 = vmatpush1.msra.mxu0 0.0
      %1244 = vmatprep.subr.mxu0 0.0
      %1245 = vmatpush1.msra.mxu0 0.0
      %1246 = vmatprep.subr.mxu0 0.0
      %1247 = vmatpush1.msra.mxu0 0.0
      %1248 = vmatprep.subr.mxu0 0.0
      %1249 = vmatpush1.msra.mxu0 0.0
      %1250 = vmatprep.subr.mxu0 0.0
      %1251 = vmatpush1.msra.mxu0 0.0
      %1252 = vmatprep.subr.mxu0 0.0
      %1253 = vmatpush1.msra.mxu0 0.0
      %1254 = vmatprep.subr.mxu0 0.0
      %1255 = vmatpush1.msra.mxu0 0.0
      %1256 = vmatprep.subr.mxu0 0.0
      %1257 = vmatpush1.msra.mxu0 0.0
      %1258 = vmatprep.mubr.f32.mxu0 0.0
      %1259 = vmatmul.mubr.f32.gmra.mrb[0].mxu0 %v1192
      %v1260 = vpop.f32.mrb[0].mxu0
      %v1261 = vadd.f32 %v1188, %v1260
      %v1262 = vpop.f32.mrb[0].mxu0
      %v1263 = vadd.f32 %v1188, %v1262
      %1264 = vdwg.mxu0
      %1265 = vmatprep.subr.mxu0 %v1071
      %1266 = vmatpush1.msra.mxu0 %v1070
      %1267 = vmatprep.subr.mxu0 %v1084
      %1268 = vmatpush1.msra.mxu0 %v1083
      %1269 = vmatprep.subr.mxu0 %v1097
      %1270 = vmatpush1.msra.mxu0 %v1096
      %1271 = vmatprep.subr.mxu0 %v1110
      %1272 = vmatpush1.msra.mxu0 %v1109
      %1273 = vmatprep.subr.mxu0 %v1123
      %1274 = vmatpush1.msra.mxu0 %v1122
      %1275 = vmatprep.subr.mxu0 %v1136
      %1276 = vmatpush1.msra.mxu0 %v1135
      %1277 = vmatprep.subr.mxu0 %v1149
      %1278 = vmatpush1.msra.mxu0 %v1148
      %1279 = vmatprep.subr.mxu0 %v1162
      %1280 = vmatpush1.msra.mxu0 %v1161
      %1281 = vmatprep.subr.mxu0 %v1175
      %1282 = vmatpush1.msra.mxu0 %v1174
      %1283 = vmatprep.subr.mxu0 0.0
      %1284 = vmatpush1.msra.mxu0 0.0
      %1285 = vmatprep.subr.mxu0 0.0
      %1286 = vmatpush1.msra.mxu0 0.0
      %1287 = vmatprep.subr.mxu0 0.0
      %1288 = vmatpush1.msra.mxu0 0.0
      %1289 = vmatprep.subr.mxu0 0.0
      %1290 = vmatpush1.msra.mxu0 0.0
      %1291 = vmatprep.subr.mxu0 0.0
      %1292 = vmatpush1.msra.mxu0 0.0
      %1293 = vmatprep.subr.mxu0 0.0
      %1294 = vmatpush1.msra.mxu0 0.0
      %1295 = vmatprep.subr.mxu0 0.0
      %1296 = vmatpush1.msra.mxu0 0.0
      %1297 = vmatprep.subr.mxu0 0.0
      %1298 = vmatpush1.msra.mxu0 0.0
      %1299 = vmatprep.subr.mxu0 0.0
      %1300 = vmatpush1.msra.mxu0 0.0
      %1301 = vmatprep.subr.mxu0 0.0
      %1302 = vmatpush1.msra.mxu0 0.0
      %1303 = vmatprep.subr.mxu0 0.0
      %1304 = vmatpush1.msra.mxu0 0.0
      %1305 = vmatprep.subr.mxu0 0.0
      %1306 = vmatpush1.msra.mxu0 0.0
      %1307 = vmatprep.subr.mxu0 0.0
      %1308 = vmatpush1.msra.mxu0 0.0
      %1309 = vmatprep.subr.mxu0 0.0
      %1310 = vmatpush1.msra.mxu0 0.0
      %1311 = vmatprep.subr.mxu0 0.0
      %1312 = vmatpush1.msra.mxu0 0.0
      %1313 = vmatprep.subr.mxu0 0.0
      %1314 = vmatpush1.msra.mxu0 0.0
      %1315 = vmatprep.subr.mxu0 0.0
      %1316 = vmatpush1.msra.mxu0 0.0
      %1317 = vmatprep.subr.mxu0 0.0
      %1318 = vmatpush1.msra.mxu0 0.0
      %1319 = vmatprep.subr.mxu0 0.0
      %1320 = vmatpush1.msra.mxu0 0.0
      %1321 = vmatprep.subr.mxu0 0.0
      %1322 = vmatpush1.msra.mxu0 0.0
      %1323 = vmatprep.subr.mxu0 0.0
      %1324 = vmatpush1.msra.mxu0 0.0
      %1325 = vmatprep.subr.mxu0 0.0
      %1326 = vmatpush1.msra.mxu0 0.0
      %1327 = vmatprep.subr.mxu0 0.0
      %1328 = vmatpush1.msra.mxu0 0.0
      %1329 = vmatprep.mubr.f32.mxu0 0.0
      %1330 = vmatmul.mubr.f32.gmra.mrb[0].mxu0 %v1192
      %v1331 = vpop.f32.mrb[0].mxu0
      %v1332 = vadd.f32 %v1188, %v1331
      %v1333 = vpop.f32.mrb[0].mxu0
      %v1334 = vadd.f32 %v1188, %v1333
      %1335 = vdwg.mxu0
      %1336 = vmatprep.subr.mxu0 %v1073
      %1337 = vmatpush1.msra.mxu0 %v1072
      %1338 = vmatprep.subr.mxu0 %v1086
      %1339 = vmatpush1.msra.mxu0 %v1085
      %1340 = vmatprep.subr.mxu0 %v1099
      %1341 = vmatpush1.msra.mxu0 %v1098
      %1342 = vmatprep.subr.mxu0 %v1112
      %1343 = vmatpush1.msra.mxu0 %v1111
      %1344 = vmatprep.subr.mxu0 %v1125
      %1345 = vmatpush1.msra.mxu0 %v1124
      %1346 = vmatprep.subr.mxu0 %v1138
      %1347 = vmatpush1.msra.mxu0 %v1137
      %1348 = vmatprep.subr.mxu0 %v1151
      %1349 = vmatpush1.msra.mxu0 %v1150
      %1350 = vmatprep.subr.mxu0 %v1164
      %1351 = vmatpush1.msra.mxu0 %v1163
      %1352 = vmatprep.subr.mxu0 %v1177
      %1353 = vmatpush1.msra.mxu0 %v1176
      %1354 = vmatprep.subr.mxu0 0.0
      %1355 = vmatpush1.msra.mxu0 0.0
      %1356 = vmatprep.subr.mxu0 0.0
      %1357 = vmatpush1.msra.mxu0 0.0
      %1358 = vmatprep.subr.mxu0 0.0
      %1359 = vmatpush1.msra.mxu0 0.0
      %1360 = vmatprep.subr.mxu0 0.0
      %1361 = vmatpush1.msra.mxu0 0.0
      %1362 = vmatprep.subr.mxu0 0.0
      %1363 = vmatpush1.msra.mxu0 0.0
      %1364 = vmatprep.subr.mxu0 0.0
      %1365 = vmatpush1.msra.mxu0 0.0
      %1366 = vmatprep.subr.mxu0 0.0
      %1367 = vmatpush1.msra.mxu0 0.0
      %1368 = vmatprep.subr.mxu0 0.0
      %1369 = vmatpush1.msra.mxu0 0.0
      %1370 = vmatprep.subr.mxu0 0.0
      %1371 = vmatpush1.msra.mxu0 0.0
      %1372 = vmatprep.subr.mxu0 0.0
      %1373 = vmatpush1.msra.mxu0 0.0
      %1374 = vmatprep.subr.mxu0 0.0
      %1375 = vmatpush1.msra.mxu0 0.0
      %1376 = vmatprep.subr.mxu0 0.0
      %1377 = vmatpush1.msra.mxu0 0.0
      %1378 = vmatprep.subr.mxu0 0.0
      %1379 = vmatpush1.msra.mxu0 0.0
      %1380 = vmatprep.subr.mxu0 0.0
      %1381 = vmatpush1.msra.mxu0 0.0
      %1382 = vmatprep.subr.mxu0 0.0
      %1383 = vmatpush1.msra.mxu0 0.0
      %1384 = vmatprep.subr.mxu0 0.0
      %1385 = vmatpush1.msra.mxu0 0.0
      %1386 = vmatprep.subr.mxu0 0.0
      %1387 = vmatpush1.msra.mxu0 0.0
      %1388 = vmatprep.subr.mxu0 0.0
      %1389 = vmatpush1.msra.mxu0 0.0
      %1390 = vmatprep.subr.mxu0 0.0
      %1391 = vmatpush1.msra.mxu0 0.0
      %1392 = vmatprep.subr.mxu0 0.0
      %1393 = vmatpush1.msra.mxu0 0.0
      %1394 = vmatprep.subr.mxu0 0.0
      %1395 = vmatpush1.msra.mxu0 0.0
      %1396 = vmatprep.subr.mxu0 0.0
      %1397 = vmatpush1.msra.mxu0 0.0
      %1398 = vmatprep.subr.mxu0 0.0
      %1399 = vmatpush1.msra.mxu0 0.0
      %1400 = vmatprep.mubr.f32.mxu0 0.0
      %1401 = vmatmul.mubr.f32.gmra.mrb[0].mxu0 %v1192
      %v1402 = vpop.f32.mrb[0].mxu0
      %v1403 = vadd.f32 %v1188, %v1402
      %v1404 = vpop.f32.mrb[0].mxu0
      %v1405 = vadd.f32 %v1188, %v1404
      %1406 = vdwg.mxu0
      %1407 = vmatprep.subr.mxu0 %v1075
      %1408 = vmatpush1.msra.mxu0 %v1074
      %1409 = vmatprep.subr.mxu0 %v1088
      %1410 = vmatpush1.msra.mxu0 %v1087
      %1411 = vmatprep.subr.mxu0 %v1101
      %1412 = vmatpush1.msra.mxu0 %v1100
      %1413 = vmatprep.subr.mxu0 %v1114
      %1414 = vmatpush1.msra.mxu0 %v1113
      %1415 = vmatprep.subr.mxu0 %v1127
      %1416 = vmatpush1.msra.mxu0 %v1126
      %1417 = vmatprep.subr.mxu0 %v1140
      %1418 = vmatpush1.msra.mxu0 %v1139
      %1419 = vmatprep.subr.mxu0 %v1153
      %1420 = vmatpush1.msra.mxu0 %v1152
      %1421 = vmatprep.subr.mxu0 %v1166
      %1422 = vmatpush1.msra.mxu0 %v1165
      %1423 = vmatprep.subr.mxu0 %v1179
      %1424 = vmatpush1.msra.mxu0 %v1178
      %1425 = vmatprep.subr.mxu0 0.0
      %1426 = vmatpush1.msra.mxu0 0.0
      %1427 = vmatprep.subr.mxu0 0.0
      %1428 = vmatpush1.msra.mxu0 0.0
      %1429 = vmatprep.subr.mxu0 0.0
      %1430 = vmatpush1.msra.mxu0 0.0
      %1431 = vmatprep.subr.mxu0 0.0
      %1432 = vmatpush1.msra.mxu0 0.0
      %1433 = vmatprep.subr.mxu0 0.0
      %1434 = vmatpush1.msra.mxu0 0.0
      %1435 = vmatprep.subr.mxu0 0.0
      %1436 = vmatpush1.msra.mxu0 0.0
      %1437 = vmatprep.subr.mxu0 0.0
      %1438 = vmatpush1.msra.mxu0 0.0
      %1439 = vmatprep.subr.mxu0 0.0
      %1440 = vmatpush1.msra.mxu0 0.0
      %1441 = vmatprep.subr.mxu0 0.0
      %1442 = vmatpush1.msra.mxu0 0.0
      %1443 = vmatprep.subr.mxu0 0.0
      %1444 = vmatpush1.msra.mxu0 0.0
      %1445 = vmatprep.subr.mxu0 0.0
      %1446 = vmatpush1.msra.mxu0 0.0
      %1447 = vmatprep.subr.mxu0 0.0
      %1448 = vmatpush1.msra.mxu0 0.0
      %1449 = vmatprep.subr.mxu0 0.0
      %1450 = vmatpush1.msra.mxu0 0.0
      %1451 = vmatprep.subr.mxu0 0.0
      %1452 = vmatpush1.msra.mxu0 0.0
      %1453 = vmatprep.subr.mxu0 0.0
      %1454 = vmatpush1.msra.mxu0 0.0
      %1455 = vmatprep.subr.mxu0 0.0
      %1456 = vmatpush1.msra.mxu0 0.0
      %1457 = vmatprep.subr.mxu0 0.0
      %1458 = vmatpush1.msra.mxu0 0.0
      %1459 = vmatprep.subr.mxu0 0.0
      %1460 = vmatpush1.msra.mxu0 0.0
      %1461 = vmatprep.subr.mxu0 0.0
      %1462 = vmatpush1.msra.mxu0 0.0
      %1463 = vmatprep.subr.mxu0 0.0
      %1464 = vmatpush1.msra.mxu0 0.0
      %1465 = vmatprep.subr.mxu0 0.0
      %1466 = vmatpush1.msra.mxu0 0.0
      %1467 = vmatprep.subr.mxu0 0.0
      %1468 = vmatpush1.msra.mxu0 0.0
      %1469 = vmatprep.subr.mxu0 0.0
      %1470 = vmatpush1.msra.mxu0 0.0
      %1471 = vmatprep.mubr.f32.mxu0 0.0
      %1472 = vmatmul.mubr.f32.gmra.mrb[0].mxu0 %v1192
      %v1473 = vpop.f32.mrb[0].mxu0
      %v1474 = vadd.f32 %v1188, %v1473
      %v1475 = vpop.f32.mrb[0].mxu0
      %v1476 = vadd.f32 %v1188, %v1475
      %1477 = vdwg.mxu0
      %1478 = vmatprep.subr.mxu0 %v1077
      %1479 = vmatpush1.msra.mxu0 %v1076
      %1480 = vmatprep.subr.mxu0 %v1090
      %1481 = vmatpush1.msra.mxu0 %v1089
      %1482 = vmatprep.subr.mxu0 %v1103
      %1483 = vmatpush1.msra.mxu0 %v1102
      %1484 = vmatprep.subr.mxu0 %v1116
      %1485 = vmatpush1.msra.mxu0 %v1115
      %1486 = vmatprep.subr.mxu0 %v1129
      %1487 = vmatpush1.msra.mxu0 %v1128
      %1488 = vmatprep.subr.mxu0 %v1142
      %1489 = vmatpush1.msra.mxu0 %v1141
      %1490 = vmatprep.subr.mxu0 %v1155
      %1491 = vmatpush1.msra.mxu0 %v1154
      %1492 = vmatprep.subr.mxu0 %v1168
      %1493 = vmatpush1.msra.mxu0 %v1167
      %1494 = vmatprep.subr.mxu0 %v1181
      %1495 = vmatpush1.msra.mxu0 %v1180
      %1496 = vmatprep.subr.mxu0 0.0
      %1497 = vmatpush1.msra.mxu0 0.0
      %1498 = vmatprep.subr.mxu0 0.0
      %1499 = vmatpush1.msra.mxu0 0.0
      %1500 = vmatprep.subr.mxu0 0.0
      %1501 = vmatpush1.msra.mxu0 0.0
      %1502 = vmatprep.subr.mxu0 0.0
      %1503 = vmatpush1.msra.mxu0 0.0
      %1504 = vmatprep.subr.mxu0 0.0
      %1505 = vmatpush1.msra.mxu0 0.0
      %1506 = vmatprep.subr.mxu0 0.0
      %1507 = vmatpush1.msra.mxu0 0.0
      %1508 = vmatprep.subr.mxu0 0.0
      %1509 = vmatpush1.msra.mxu0 0.0
      %1510 = vmatprep.subr.mxu0 0.0
      %1511 = vmatpush1.msra.mxu0 0.0
      %1512 = vmatprep.subr.mxu0 0.0
      %1513 = vmatpush1.msra.mxu0 0.0
      %1514 = vmatprep.subr.mxu0 0.0
      %1515 = vmatpush1.msra.mxu0 0.0
      %1516 = vmatprep.subr.mxu0 0.0
      %1517 = vmatpush1.msra.mxu0 0.0
      %1518 = vmatprep.subr.mxu0 0.0
      %1519 = vmatpush1.msra.mxu0 0.0
      %1520 = vmatprep.subr.mxu0 0.0
      %1521 = vmatpush1.msra.mxu0 0.0
      %1522 = vmatprep.subr.mxu0 0.0
      %1523 = vmatpush1.msra.mxu0 0.0
      %1524 = vmatprep.subr.mxu0 0.0
      %1525 = vmatpush1.msra.mxu0 0.0
      %1526 = vmatprep.subr.mxu0 0.0
      %1527 = vmatpush1.msra.mxu0 0.0
      %1528 = vmatprep.subr.mxu0 0.0
      %1529 = vmatpush1.msra.mxu0 0.0
      %1530 = vmatprep.subr.mxu0 0.0
      %1531 = vmatpush1.msra.mxu0 0.0
      %1532 = vmatprep.subr.mxu0 0.0
      %1533 = vmatpush1.msra.mxu0 0.0
      %1534 = vmatprep.subr.mxu0 0.0
      %1535 = vmatpush1.msra.mxu0 0.0
      %1536 = vmatprep.subr.mxu0 0.0
      %1537 = vmatpush1.msra.mxu0 0.0
      %1538 = vmatprep.subr.mxu0 0.0
      %1539 = vmatpush1.msra.mxu0 0.0
      %1540 = vmatprep.subr.mxu0 0.0
      %1541 = vmatpush1.msra.mxu0 0.0
      %1542 = vmatprep.mubr.f32.mxu0 0.0
      %1543 = vmatmul.mubr.f32.gmra.mrb[0].mxu0 %v1192
      %v1544 = vpop.f32.mrb[0].mxu0
      %v1545 = vadd.f32 %v1188, %v1544
      %v1546 = vpop.f32.mrb[0].mxu0
      %v1547 = vadd.f32 %v1188, %v1546
      %1548 = vdwg.mxu0
      %1549 = vmatprep.subr.mxu0 %v1079
      %1550 = vmatpush1.msra.mxu0 %v1078
      %1551 = vmatprep.subr.mxu0 %v1092
      %1552 = vmatpush1.msra.mxu0 %v1091
      %1553 = vmatprep.subr.mxu0 %v1105
      %1554 = vmatpush1.msra.mxu0 %v1104
      %1555 = vmatprep.subr.mxu0 %v1118
      %1556 = vmatpush1.msra.mxu0 %v1117
      %1557 = vmatprep.subr.mxu0 %v1131
      %1558 = vmatpush1.msra.mxu0 %v1130
      %1559 = vmatprep.subr.mxu0 %v1144
      %1560 = vmatpush1.msra.mxu0 %v1143
      %1561 = vmatprep.subr.mxu0 %v1157
      %1562 = vmatpush1.msra.mxu0 %v1156
      %1563 = vmatprep.subr.mxu0 %v1170
      %1564 = vmatpush1.msra.mxu0 %v1169
      %1565 = vmatprep.subr.mxu0 %v1183
      %1566 = vmatpush1.msra.mxu0 %v1182
      %1567 = vmatprep.subr.mxu0 0.0
      %1568 = vmatpush1.msra.mxu0 0.0
      %1569 = vmatprep.subr.mxu0 0.0
      %1570 = vmatpush1.msra.mxu0 0.0
      %1571 = vmatprep.subr.mxu0 0.0
      %1572 = vmatpush1.msra.mxu0 0.0
      %1573 = vmatprep.subr.mxu0 0.0
      %1574 = vmatpush1.msra.mxu0 0.0
      %1575 = vmatprep.subr.mxu0 0.0
      %1576 = vmatpush1.msra.mxu0 0.0
      %1577 = vmatprep.subr.mxu0 0.0
      %1578 = vmatpush1.msra.mxu0 0.0
      %1579 = vmatprep.subr.mxu0 0.0
      %1580 = vmatpush1.msra.mxu0 0.0
      %1581 = vmatprep.subr.mxu0 0.0
      %1582 = vmatpush1.msra.mxu0 0.0
      %1583 = vmatprep.subr.mxu0 0.0
      %1584 = vmatpush1.msra.mxu0 0.0
      %1585 = vmatprep.subr.mxu0 0.0
      %1586 = vmatpush1.msra.mxu0 0.0
      %1587 = vmatprep.subr.mxu0 0.0
      %1588 = vmatpush1.msra.mxu0 0.0
      %1589 = vmatprep.subr.mxu0 0.0
      %1590 = vmatpush1.msra.mxu0 0.0
      %1591 = vmatprep.subr.mxu0 0.0
      %1592 = vmatpush1.msra.mxu0 0.0
      %1593 = vmatprep.subr.mxu0 0.0
      %1594 = vmatpush1.msra.mxu0 0.0
      %1595 = vmatprep.subr.mxu0 0.0
      %1596 = vmatpush1.msra.mxu0 0.0
      %1597 = vmatprep.subr.mxu0 0.0
      %1598 = vmatpush1.msra.mxu0 0.0
      %1599 = vmatprep.subr.mxu0 0.0
      %1600 = vmatpush1.msra.mxu0 0.0
      %1601 = vmatprep.subr.mxu0 0.0
      %1602 = vmatpush1.msra.mxu0 0.0
      %1603 = vmatprep.subr.mxu0 0.0
      %1604 = vmatpush1.msra.mxu0 0.0
      %1605 = vmatprep.subr.mxu0 0.0
      %1606 = vmatpush1.msra.mxu0 0.0
      %1607 = vmatprep.subr.mxu0 0.0
      %1608 = vmatpush1.msra.mxu0 0.0
      %1609 = vmatprep.subr.mxu0 0.0
      %1610 = vmatpush1.msra.mxu0 0.0
      %1611 = vmatprep.subr.mxu0 0.0
      %1612 = vmatpush1.msra.mxu0 0.0
      %1613 = vmatprep.mubr.f32.mxu0 0.0
      %1614 = vmatmul.mubr.f32.gmra.mrb[0].mxu0 %v1192
      %v1615 = vpop.f32.mrb[0].mxu0
      %v1616 = vadd.f32 %v1188, %v1615
      %v1617 = vpop.f32.mrb[0].mxu0
      %v1618 = vadd.f32 %v1188, %v1617
      %1619 = vdwg.mxu0
      %1620 = vmatprep.subr.mxu0 0.0
      %1621 = vmatpush1.msra.mxu0 %v1080
      %1622 = vmatprep.subr.mxu0 0.0
      %1623 = vmatpush1.msra.mxu0 %v1093
      %1624 = vmatprep.subr.mxu0 0.0
      %1625 = vmatpush1.msra.mxu0 %v1106
      %1626 = vmatprep.subr.mxu0 0.0
      %1627 = vmatpush1.msra.mxu0 %v1119
      %1628 = vmatprep.subr.mxu0 0.0
      %1629 = vmatpush1.msra.mxu0 %v1132
      %1630 = vmatprep.subr.mxu0 0.0
      %1631 = vmatpush1.msra.mxu0 %v1145
      %1632 = vmatprep.subr.mxu0 0.0
      %1633 = vmatpush1.msra.mxu0 %v1158
      %1634 = vmatprep.subr.mxu0 0.0
      %1635 = vmatpush1.msra.mxu0 %v1171
      %1636 = vmatprep.subr.mxu0 0.0
      %1637 = vmatpush1.msra.mxu0 %v1184
      %1638 = vmatprep.subr.mxu0 0.0
      %1639 = vmatpush1.msra.mxu0 0.0
      %1640 = vmatprep.subr.mxu0 0.0
      %1641 = vmatpush1.msra.mxu0 0.0
      %1642 = vmatprep.subr.mxu0 0.0
      %1643 = vmatpush1.msra.mxu0 0.0
      %1644 = vmatprep.subr.mxu0 0.0
      %1645 = vmatpush1.msra.mxu0 0.0
      %1646 = vmatprep.subr.mxu0 0.0
      %1647 = vmatpush1.msra.mxu0 0.0
      %1648 = vmatprep.subr.mxu0 0.0
      %1649 = vmatpush1.msra.mxu0 0.0
      %1650 = vmatprep.subr.mxu0 0.0
      %1651 = vmatpush1.msra.mxu0 0.0
      %1652 = vmatprep.subr.mxu0 0.0
      %1653 = vmatpush1.msra.mxu0 0.0
      %1654 = vmatprep.subr.mxu0 0.0
      %1655 = vmatpush1.msra.mxu0 0.0
      %1656 = vmatprep.subr.mxu0 0.0
      %1657 = vmatpush1.msra.mxu0 0.0
      %1658 = vmatprep.subr.mxu0 0.0
      %1659 = vmatpush1.msra.mxu0 0.0
      %1660 = vmatprep.subr.mxu0 0.0
      %1661 = vmatpush1.msra.mxu0 0.0
      %1662 = vmatprep.subr.mxu0 0.0
      %1663 = vmatpush1.msra.mxu0 0.0
      %1664 = vmatprep.subr.mxu0 0.0
      %1665 = vmatpush1.msra.mxu0 0.0
      %1666 = vmatprep.subr.mxu0 0.0
      %1667 = vmatpush1.msra.mxu0 0.0
      %1668 = vmatprep.subr.mxu0 0.0
      %1669 = vmatpush1.msra.mxu0 0.0
      %1670 = vmatprep.subr.mxu0 0.0
      %1671 = vmatpush1.msra.mxu0 0.0
      %1672 = vmatprep.subr.mxu0 0.0
      %1673 = vmatpush1.msra.mxu0 0.0
      %1674 = vmatprep.subr.mxu0 0.0
      %1675 = vmatpush1.msra.mxu0 0.0
      %1676 = vmatprep.subr.mxu0 0.0
      %1677 = vmatpush1.msra.mxu0 0.0
      %1678 = vmatprep.subr.mxu0 0.0
      %1679 = vmatpush1.msra.mxu0 0.0
      %1680 = vmatprep.subr.mxu0 0.0
      %1681 = vmatpush1.msra.mxu0 0.0
      %1682 = vmatprep.subr.mxu0 0.0
      %1683 = vmatpush1.msra.mxu0 0.0
      %1684 = vmatprep.mubr.f32.mxu0 0.0
      %1685 = vmatmul.mubr.f32.gmra.mrb[0].mxu0 %v1192
      %v1686 = vpop.f32.mrb[0].mxu0
      %v1687 = vadd.f32 %v1188, %v1686
      %v1688 = vpop.f32.mrb[0].mxu0
      %1689 = vdwg.mxu0
      %v1690 = vtanh.pop %v1261
      %v1691 = vtanh.pop %v1263
      %v1692 = vtanh.pop %v1332
      %v1693 = vtanh.pop %v1334
      %v1694 = vtanh.pop %v1403
      %v1695 = vtanh.pop %v1405
      %v1696 = vtanh.pop %v1474
      %v1697 = vtanh.pop %v1476
      %v1698 = vtanh.pop %v1545
      %v1699 = vtanh.pop %v1547
      %v1700 = vtanh.pop %v1616
      %v1701 = vtanh.pop %v1618
      %v1702 = vtanh.pop %v1687
      %1703 = vst [vmem:[#allocation3] sm:$0xff] %v1690
      %1704 = vst [vmem:[#allocation3 + $0x8] sm:$0xff] %v1691
      %1705 = vst [vmem:[#allocation3 + $0x10] sm:$0xff] %v1692
      %1706 = vst [vmem:[#allocation3 + $0x18] sm:$0xff] %v1693
      %1707 = vst [vmem:[#allocation3 + $0x20] sm:$0xff] %v1694
      %1708 = vst [vmem:[#allocation3 + $0x28] sm:$0xff] %v1695
      %1709 = vst [vmem:[#allocation3 + $0x30] sm:$0xff] %v1696
      %1710 = vst [vmem:[#allocation3 + $0x38] sm:$0xff] %v1697
      %1711 = vst [vmem:[#allocation3 + $0x40] sm:$0xff] %v1698
      %1712 = vst [vmem:[#allocation3 + $0x48] sm:$0xff] %v1699
      %1713 = vst [vmem:[#allocation3 + $0x50] sm:$0xff] %v1700
      %1714 = vst [vmem:[#allocation3 + $0x58] sm:$0xff] %v1701
      %1715 = vst.msk [vmem:[#allocation3 + $0x60] sm:$0xff] %vm336, %v1702
      %v1716 = vld [vmem:[#allocation3] sm:$0xff]
      %v1717 = vld [vmem:[#allocation3 + $0x8] sm:$0xff]
      %v1718 = vld [vmem:[#allocation3 + $0x10] sm:$0xff]
      %v1719 = vld [vmem:[#allocation3 + $0x18] sm:$0xff]
      %v1720 = vld [vmem:[#allocation3 + $0x20] sm:$0xff]
      %v1721 = vld [vmem:[#allocation3 + $0x28] sm:$0xff]
      %v1722 = vld [vmem:[#allocation3 + $0x30] sm:$0xff]
      %v1723 = vld [vmem:[#allocation3 + $0x38] sm:$0xff]
      %v1724 = vld [vmem:[#allocation3 + $0x40] sm:$0xff]
      %v1725 = vld [vmem:[#allocation3 + $0x48] sm:$0xff]
      %v1726 = vld [vmem:[#allocation3 + $0x50] sm:$0xff]
      %v1727 = vld [vmem:[#allocation3 + $0x58] sm:$0xff]
      %1728 = vst [vmem:[#allocation2] sm:$0xff] %v1716
      %1729 = vst [vmem:[#allocation2 + $0x8] sm:$0xff] %v1717
      %1730 = vst [vmem:[#allocation2 + $0x10] sm:$0xff] %v1718
      %1731 = vst [vmem:[#allocation2 + $0x18] sm:$0xff] %v1719
      %1732 = vst [vmem:[#allocation2 + $0x20] sm:$0xff] %v1720
      %1733 = vst [vmem:[#allocation2 + $0x28] sm:$0xff] %v1721
      %1734 = vst [vmem:[#allocation2 + $0x30] sm:$0xff] %v1722
      %1735 = vst [vmem:[#allocation2 + $0x38] sm:$0xff] %v1723
      %1736 = vst [vmem:[#allocation2 + $0x40] sm:$0xff] %v1724
      %1737 = vst [vmem:[#allocation2 + $0x48] sm:$0xff] %v1725
      %1738 = vst [vmem:[#allocation2 + $0x50] sm:$0xff] %v1726
      %1739 = vst.msk [vmem:[#allocation2 + $0x58] sm:$0xff] %vm572, %v1727
      %v1740 = vld [vmem:[#allocation3] sm:$0xff]
      %v1741 = vld [vmem:[#allocation3 + $0x8] sm:$0xff]
      %v1742 = vld [vmem:[#allocation3 + $0x10] sm:$0xff]
      %v1743 = vld [vmem:[#allocation3 + $0x18] sm:$0xff]
      %v1744 = vld [vmem:[#allocation3 + $0x20] sm:$0xff]
      %v1745 = vld [vmem:[#allocation3 + $0x28] sm:$0xff]
      %v1746 = vld [vmem:[#allocation3 + $0x30] sm:$0xff]
      %v1747 = vld [vmem:[#allocation3 + $0x38] sm:$0xff]
      %v1748 = vld [vmem:[#allocation3 + $0x40] sm:$0xff]
      %v1749 = vld [vmem:[#allocation3 + $0x48] sm:$0xff]
      %v1750 = vld [vmem:[#allocation3 + $0x50] sm:$0xff]
      %v1751 = vld [vmem:[#allocation3 + $0x58] sm:$0xff]
      %1764 = vrot.lane.b32.xlu0 %v1740, 127
      %v1765 = vpop.permute.xlu0 %1764
      %1766 = vrot.lane.b32.xlu0 %v1741, 127
      %v1767 = vpop.permute.xlu0 %1766
      %1768 = vrot.lane.b32.xlu0 %v1742, 127
      %v1769 = vpop.permute.xlu0 %1768
      %1770 = vrot.lane.b32.xlu0 %v1743, 127
      %v1771 = vpop.permute.xlu0 %1770
      %1772 = vrot.lane.b32.xlu0 %v1744, 127
      %v1773 = vpop.permute.xlu0 %1772
      %1774 = vrot.lane.b32.xlu0 %v1745, 127
      %v1775 = vpop.permute.xlu0 %1774
      %1776 = vrot.lane.b32.xlu0 %v1746, 127
      %v1777 = vpop.permute.xlu0 %1776
      %1778 = vrot.lane.b32.xlu0 %v1747, 127
      %v1779 = vpop.permute.xlu0 %1778
      %1780 = vrot.lane.b32.xlu0 %v1748, 127
      %v1781 = vpop.permute.xlu0 %1780
      %1782 = vrot.lane.b32.xlu0 %v1749, 127
      %v1783 = vpop.permute.xlu0 %1782
      %1784 = vrot.lane.b32.xlu0 %v1750, 127
      %v1785 = vpop.permute.xlu0 %1784
      %1786 = vrot.lane.b32.xlu0 %v1751, 127
      %v1787 = vpop.permute.xlu0 %1786
      %v1788 = vsel %vm390, %v1765, %v1767
      %v1789 = vsel %vm390, %v1767, %v1769
      %v1790 = vsel %vm390, %v1769, %v1771
      %v1791 = vsel %vm390, %v1771, %v1773
      %v1792 = vsel %vm390, %v1773, %v1775
      %v1793 = vsel %vm390, %v1775, %v1777
      %v1794 = vsel %vm390, %v1777, %v1779
      %v1795 = vsel %vm390, %v1779, %v1781
      %v1796 = vsel %vm390, %v1781, %v1783
      %v1797 = vsel %vm390, %v1783, %v1785
      %v1798 = vsel %vm390, %v1785, %v1787
      %1811 = vst [vmem:[#allocation2 + $0x68] sm:$0xff] %v1788
      %1812 = vst [vmem:[#allocation2 + $0x70] sm:$0xff] %v1789
      %1813 = vst [vmem:[#allocation2 + $0x78] sm:$0xff] %v1790
      %1814 = vst [vmem:[#allocation2 + $0x80] sm:$0xff] %v1791
      %1815 = vst [vmem:[#allocation2 + $0x88] sm:$0xff] %v1792
      %1816 = vst [vmem:[#allocation2 + $0x90] sm:$0xff] %v1793
      %1817 = vst [vmem:[#allocation2 + $0x98] sm:$0xff] %v1794
      %1818 = vst [vmem:[#allocation2 + $0xa0] sm:$0xff] %v1795
      %1819 = vst [vmem:[#allocation2 + $0xa8] sm:$0xff] %v1796
      %1820 = vst [vmem:[#allocation2 + $0xb0] sm:$0xff] %v1797
      %1821 = vst [vmem:[#allocation2 + $0xb8] sm:$0xff] %v1798
      %1822 = vst.msk [vmem:[#allocation2 + $0xc0] sm:$0xff] %vm572, %v1787
      %v1823 = vld [vmem:[#allocation3] sm:$0xff]
      %v1824 = vld [vmem:[#allocation3 + $0x8] sm:$0xff]
      %v1825 = vld [vmem:[#allocation3 + $0x10] sm:$0xff]
      %v1826 = vld [vmem:[#allocation3 + $0x18] sm:$0xff]
      %v1827 = vld [vmem:[#allocation3 + $0x20] sm:$0xff]
      %v1828 = vld [vmem:[#allocation3 + $0x28] sm:$0xff]
      %v1829 = vld [vmem:[#allocation3 + $0x30] sm:$0xff]
      %v1830 = vld [vmem:[#allocation3 + $0x38] sm:$0xff]
      %v1831 = vld [vmem:[#allocation3 + $0x40] sm:$0xff]
      %v1832 = vld [vmem:[#allocation3 + $0x48] sm:$0xff]
      %v1833 = vld [vmem:[#allocation3 + $0x50] sm:$0xff]
      %v1834 = vld [vmem:[#allocation3 + $0x58] sm:$0xff]
      %1847 = vrot.lane.b32.xlu0 %v1823, 126
      %v1848 = vpop.permute.xlu0 %1847
      %1849 = vrot.lane.b32.xlu0 %v1824, 126
      %v1850 = vpop.permute.xlu0 %1849
      %1851 = vrot.lane.b32.xlu0 %v1825, 126
      %v1852 = vpop.permute.xlu0 %1851
      %1853 = vrot.lane.b32.xlu0 %v1826, 126
      %v1854 = vpop.permute.xlu0 %1853
      %1855 = vrot.lane.b32.xlu0 %v1827, 126
      %v1856 = vpop.permute.xlu0 %1855
      %1857 = vrot.lane.b32.xlu0 %v1828, 126
      %v1858 = vpop.permute.xlu0 %1857
      %1859 = vrot.lane.b32.xlu0 %v1829, 126
      %v1860 = vpop.permute.xlu0 %1859
      %1861 = vrot.lane.b32.xlu0 %v1830, 126
      %v1862 = vpop.permute.xlu0 %1861
      %1863 = vrot.lane.b32.xlu0 %v1831, 126
      %v1864 = vpop.permute.xlu0 %1863
      %1865 = vrot.lane.b32.xlu0 %v1832, 126
      %v1866 = vpop.permute.xlu0 %1865
      %1867 = vrot.lane.b32.xlu0 %v1833, 126
      %v1868 = vpop.permute.xlu0 %1867
      %1869 = vrot.lane.b32.xlu0 %v1834, 126
      %v1870 = vpop.permute.xlu0 %1869
      %v1871 = vsel %vm481, %v1848, %v1850
      %v1872 = vsel %vm481, %v1850, %v1852
      %v1873 = vsel %vm481, %v1852, %v1854
      %v1874 = vsel %vm481, %v1854, %v1856
      %v1875 = vsel %vm481, %v1856, %v1858
      %v1876 = vsel %vm481, %v1858, %v1860
      %v1877 = vsel %vm481, %v1860, %v1862
      %v1878 = vsel %vm481, %v1862, %v1864
      %v1879 = vsel %vm481, %v1864, %v1866
      %v1880 = vsel %vm481, %v1866, %v1868
      %v1881 = vsel %vm481, %v1868, %v1870
      %1894 = vst [vmem:[#allocation2 + $0xd0] sm:$0xff] %v1871
      %1895 = vst [vmem:[#allocation2 + $0xd8] sm:$0xff] %v1872
      %1896 = vst [vmem:[#allocation2 + $0xe0] sm:$0xff] %v1873
      %1897 = vst [vmem:[#allocation2 + $0xe8] sm:$0xff] %v1874
      %1898 = vst [vmem:[#allocation2 + $0xf0] sm:$0xff] %v1875
      %1899 = vst [vmem:[#allocation2 + $0xf8] sm:$0xff] %v1876
      %1900 = vst [vmem:[#allocation2 + $0x100] sm:$0xff] %v1877
      %1901 = vst [vmem:[#allocation2 + $0x108] sm:$0xff] %v1878
      %1902 = vst [vmem:[#allocation2 + $0x110] sm:$0xff] %v1879
      %1903 = vst [vmem:[#allocation2 + $0x118] sm:$0xff] %v1880
      %1904 = vst [vmem:[#allocation2 + $0x120] sm:$0xff] %v1881
      %1905 = vst.msk [vmem:[#allocation2 + $0x128] sm:$0xff] %vm572, %v1870
      %v1906 = vld [vmem:[#allocation3] sm:$0xff]
      %v1907 = vld [vmem:[#allocation3 + $0x8] sm:$0xff]
      %v1908 = vld [vmem:[#allocation3 + $0x10] sm:$0xff]
      %v1909 = vld [vmem:[#allocation3 + $0x18] sm:$0xff]
      %v1910 = vld [vmem:[#allocation3 + $0x20] sm:$0xff]
      %v1911 = vld [vmem:[#allocation3 + $0x28] sm:$0xff]
      %v1912 = vld [vmem:[#allocation3 + $0x30] sm:$0xff]
      %v1913 = vld [vmem:[#allocation3 + $0x38] sm:$0xff]
      %v1914 = vld [vmem:[#allocation3 + $0x40] sm:$0xff]
      %v1915 = vld [vmem:[#allocation3 + $0x48] sm:$0xff]
      %v1916 = vld [vmem:[#allocation3 + $0x50] sm:$0xff]
      %v1917 = vld [vmem:[#allocation3 + $0x58] sm:$0xff]
      %1930 = vrot.lane.b32.xlu0 %v1906, 108
      %v1931 = vpop.permute.xlu0 %1930
      %1932 = vrot.lane.b32.xlu0 %v1907, 108
      %v1933 = vpop.permute.xlu0 %1932
      %1934 = vrot.lane.b32.xlu0 %v1908, 108
      %v1935 = vpop.permute.xlu0 %1934
      %1936 = vrot.lane.b32.xlu0 %v1909, 108
      %v1937 = vpop.permute.xlu0 %1936
      %1938 = vrot.lane.b32.xlu0 %v1910, 108
      %v1939 = vpop.permute.xlu0 %1938
      %1940 = vrot.lane.b32.xlu0 %v1911, 108
      %v1941 = vpop.permute.xlu0 %1940
      %1942 = vrot.lane.b32.xlu0 %v1912, 108
      %v1943 = vpop.permute.xlu0 %1942
      %1944 = vrot.lane.b32.xlu0 %v1913, 108
      %v1945 = vpop.permute.xlu0 %1944
      %1946 = vrot.lane.b32.xlu0 %v1914, 108
      %v1947 = vpop.permute.xlu0 %1946
      %1948 = vrot.lane.b32.xlu0 %v1915, 108
      %v1949 = vpop.permute.xlu0 %1948
      %1950 = vrot.lane.b32.xlu0 %v1916, 108
      %v1951 = vpop.permute.xlu0 %1950
      %1952 = vrot.lane.b32.xlu0 %v1917, 108
      %v1953 = vpop.permute.xlu0 %1952
      %v1954 = vsel %vm572, %v1931, %v1933
      %v1955 = vsel %vm572, %v1933, %v1935
      %v1956 = vsel %vm572, %v1935, %v1937
      %v1957 = vsel %vm572, %v1937, %v1939
      %v1958 = vsel %vm572, %v1939, %v1941
      %v1959 = vsel %vm572, %v1941, %v1943
      %v1960 = vsel %vm572, %v1943, %v1945
      %v1961 = vsel %vm572, %v1945, %v1947
      %v1962 = vsel %vm572, %v1947, %v1949
      %v1963 = vsel %vm572, %v1949, %v1951
      %v1964 = vsel %vm572, %v1951, %v1953
      %1977 = vst [vmem:[#allocation2 + $0x138] sm:$0xff] %v1954
      %1978 = vst [vmem:[#allocation2 + $0x140] sm:$0xff] %v1955
      %1979 = vst [vmem:[#allocation2 + $0x148] sm:$0xff] %v1956
      %1980 = vst [vmem:[#allocation2 + $0x150] sm:$0xff] %v1957
      %1981 = vst [vmem:[#allocation2 + $0x158] sm:$0xff] %v1958
      %1982 = vst [vmem:[#allocation2 + $0x160] sm:$0xff] %v1959
      %1983 = vst [vmem:[#allocation2 + $0x168] sm:$0xff] %v1960
      %1984 = vst [vmem:[#allocation2 + $0x170] sm:$0xff] %v1961
      %1985 = vst [vmem:[#allocation2 + $0x178] sm:$0xff] %v1962
      %1986 = vst [vmem:[#allocation2 + $0x180] sm:$0xff] %v1963
      %1987 = vst [vmem:[#allocation2 + $0x188] sm:$0xff] %v1964
      %1988 = vst.msk [vmem:[#allocation2 + $0x190] sm:$0xff] %vm572, %v1953
      %v1989 = vld [vmem:[#allocation3] sm:$0xff]
      %v1990 = vld [vmem:[#allocation3 + $0x8] sm:$0xff]
      %v1991 = vld [vmem:[#allocation3 + $0x10] sm:$0xff]
      %v1992 = vld [vmem:[#allocation3 + $0x18] sm:$0xff]
      %v1993 = vld [vmem:[#allocation3 + $0x20] sm:$0xff]
      %v1994 = vld [vmem:[#allocation3 + $0x28] sm:$0xff]
      %v1995 = vld [vmem:[#allocation3 + $0x30] sm:$0xff]
      %v1996 = vld [vmem:[#allocation3 + $0x38] sm:$0xff]
      %v1997 = vld [vmem:[#allocation3 + $0x40] sm:$0xff]
      %v1998 = vld [vmem:[#allocation3 + $0x48] sm:$0xff]
      %v1999 = vld [vmem:[#allocation3 + $0x50] sm:$0xff]
      %v2000 = vld [vmem:[#allocation3 + $0x58] sm:$0xff]
      %v2001 = vld [vmem:[#allocation3 + $0x60] sm:$0xff]
      %2015 = vrot.lane.b32.xlu0 %v1989, 107
      %v2016 = vpop.permute.xlu0 %2015
      %2017 = vrot.lane.b32.xlu0 %v1990, 107
      %v2018 = vpop.permute.xlu0 %2017
      %2019 = vrot.lane.b32.xlu0 %v1991, 107
      %v2020 = vpop.permute.xlu0 %2019
      %2021 = vrot.lane.b32.xlu0 %v1992, 107
      %v2022 = vpop.permute.xlu0 %2021
      %2023 = vrot.lane.b32.xlu0 %v1993, 107
      %v2024 = vpop.permute.xlu0 %2023
      %2025 = vrot.lane.b32.xlu0 %v1994, 107
      %v2026 = vpop.permute.xlu0 %2025
      %2027 = vrot.lane.b32.xlu0 %v1995, 107
      %v2028 = vpop.permute.xlu0 %2027
      %2029 = vrot.lane.b32.xlu0 %v1996, 107
      %v2030 = vpop.permute.xlu0 %2029
      %2031 = vrot.lane.b32.xlu0 %v1997, 107
      %v2032 = vpop.permute.xlu0 %2031
      %2033 = vrot.lane.b32.xlu0 %v1998, 107
      %v2034 = vpop.permute.xlu0 %2033
      %2035 = vrot.lane.b32.xlu0 %v1999, 107
      %v2036 = vpop.permute.xlu0 %2035
      %2037 = vrot.lane.b32.xlu0 %v2000, 107
      %v2038 = vpop.permute.xlu0 %2037
      %2039 = vrot.lane.b32.xlu0 %v2001, 107
      %v2040 = vpop.permute.xlu0 %2039
      %v2041 = vsel %vm663, %v2016, %v2018
      %v2042 = vsel %vm663, %v2018, %v2020
      %v2043 = vsel %vm663, %v2020, %v2022
      %v2044 = vsel %vm663, %v2022, %v2024
      %v2045 = vsel %vm663, %v2024, %v2026
      %v2046 = vsel %vm663, %v2026, %v2028
      %v2047 = vsel %vm663, %v2028, %v2030
      %v2048 = vsel %vm663, %v2030, %v2032
      %v2049 = vsel %vm663, %v2032, %v2034
      %v2050 = vsel %vm663, %v2034, %v2036
      %v2051 = vsel %vm663, %v2036, %v2038
      %v2052 = vsel %vm663, %v2038, %v2040
      %2065 = vst [vmem:[#allocation2 + $0x1a0] sm:$0xff] %v2041
      %2066 = vst [vmem:[#allocation2 + $0x1a8] sm:$0xff] %v2042
      %2067 = vst [vmem:[#allocation2 + $0x1b0] sm:$0xff] %v2043
      %2068 = vst [vmem:[#allocation2 + $0x1b8] sm:$0xff] %v2044
      %2069 = vst [vmem:[#allocation2 + $0x1c0] sm:$0xff] %v2045
      %2070 = vst [vmem:[#allocation2 + $0x1c8] sm:$0xff] %v2046
      %2071 = vst [vmem:[#allocation2 + $0x1d0] sm:$0xff] %v2047
      %2072 = vst [vmem:[#allocation2 + $0x1d8] sm:$0xff] %v2048
      %2073 = vst [vmem:[#allocation2 + $0x1e0] sm:$0xff] %v2049
      %2074 = vst [vmem:[#allocation2 + $0x1e8] sm:$0xff] %v2050
      %2075 = vst [vmem:[#allocation2 + $0x1f0] sm:$0xff] %v2051
      %2076 = vst.msk [vmem:[#allocation2 + $0x1f8] sm:$0xff] %vm572, %v2052
      %v2077 = vld [vmem:[#allocation3] sm:$0xff]
      %v2078 = vld [vmem:[#allocation3 + $0x8] sm:$0xff]
      %v2079 = vld [vmem:[#allocation3 + $0x10] sm:$0xff]
      %v2080 = vld [vmem:[#allocation3 + $0x18] sm:$0xff]
      %v2081 = vld [vmem:[#allocation3 + $0x20] sm:$0xff]
      %v2082 = vld [vmem:[#allocation3 + $0x28] sm:$0xff]
      %v2083 = vld [vmem:[#allocation3 + $0x30] sm:$0xff]
      %v2084 = vld [vmem:[#allocation3 + $0x38] sm:$0xff]
      %v2085 = vld [vmem:[#allocation3 + $0x40] sm:$0xff]
      %v2086 = vld [vmem:[#allocation3 + $0x48] sm:$0xff]
      %v2087 = vld [vmem:[#allocation3 + $0x50] sm:$0xff]
      %v2088 = vld [vmem:[#allocation3 + $0x58] sm:$0xff]
      %v2089 = vld [vmem:[#allocation3 + $0x60] sm:$0xff]
      %2103 = vrot.lane.b32.xlu0 %v2077, 106
      %v2104 = vpop.permute.xlu0 %2103
      %2105 = vrot.lane.b32.xlu0 %v2078, 106
      %v2106 = vpop.permute.xlu0 %2105
      %2107 = vrot.lane.b32.xlu0 %v2079, 106
      %v2108 = vpop.permute.xlu0 %2107
      %2109 = vrot.lane.b32.xlu0 %v2080, 106
      %v2110 = vpop.permute.xlu0 %2109
      %2111 = vrot.lane.b32.xlu0 %v2081, 106
      %v2112 = vpop.permute.xlu0 %2111
      %2113 = vrot.lane.b32.xlu0 %v2082, 106
      %v2114 = vpop.permute.xlu0 %2113
      %2115 = vrot.lane.b32.xlu0 %v2083, 106
      %v2116 = vpop.permute.xlu0 %2115
      %2117 = vrot.lane.b32.xlu0 %v2084, 106
      %v2118 = vpop.permute.xlu0 %2117
      %2119 = vrot.lane.b32.xlu0 %v2085, 106
      %v2120 = vpop.permute.xlu0 %2119
      %2121 = vrot.lane.b32.xlu0 %v2086, 106
      %v2122 = vpop.permute.xlu0 %2121
      %2123 = vrot.lane.b32.xlu0 %v2087, 106
      %v2124 = vpop.permute.xlu0 %2123
      %2125 = vrot.lane.b32.xlu0 %v2088, 106
      %v2126 = vpop.permute.xlu0 %2125
      %2127 = vrot.lane.b32.xlu0 %v2089, 106
      %v2128 = vpop.permute.xlu0 %2127
      %v2129 = vsel %vm754, %v2104, %v2106
      %v2130 = vsel %vm754, %v2106, %v2108
      %v2131 = vsel %vm754, %v2108, %v2110
      %v2132 = vsel %vm754, %v2110, %v2112
      %v2133 = vsel %vm754, %v2112, %v2114
      %v2134 = vsel %vm754, %v2114, %v2116
      %v2135 = vsel %vm754, %v2116, %v2118
      %v2136 = vsel %vm754, %v2118, %v2120
      %v2137 = vsel %vm754, %v2120, %v2122
      %v2138 = vsel %vm754, %v2122, %v2124
      %v2139 = vsel %vm754, %v2124, %v2126
      %v2140 = vsel %vm754, %v2126, %v2128
      %2153 = vst [vmem:[#allocation2 + $0x208] sm:$0xff] %v2129
      %2154 = vst [vmem:[#allocation2 + $0x210] sm:$0xff] %v2130
      %2155 = vst [vmem:[#allocation2 + $0x218] sm:$0xff] %v2131
      %2156 = vst [vmem:[#allocation2 + $0x220] sm:$0xff] %v2132
      %2157 = vst [vmem:[#allocation2 + $0x228] sm:$0xff] %v2133
      %2158 = vst [vmem:[#allocation2 + $0x230] sm:$0xff] %v2134
      %2159 = vst [vmem:[#allocation2 + $0x238] sm:$0xff] %v2135
      %2160 = vst [vmem:[#allocation2 + $0x240] sm:$0xff] %v2136
      %2161 = vst [vmem:[#allocation2 + $0x248] sm:$0xff] %v2137
      %2162 = vst [vmem:[#allocation2 + $0x250] sm:$0xff] %v2138
      %2163 = vst [vmem:[#allocation2 + $0x258] sm:$0xff] %v2139
      %2164 = vst.msk [vmem:[#allocation2 + $0x260] sm:$0xff] %vm572, %v2140
      %v2165 = vld [vmem:[#allocation3] sm:$0xff]
      %v2166 = vld [vmem:[#allocation3 + $0x8] sm:$0xff]
      %v2167 = vld [vmem:[#allocation3 + $0x10] sm:$0xff]
      %v2168 = vld [vmem:[#allocation3 + $0x18] sm:$0xff]
      %v2169 = vld [vmem:[#allocation3 + $0x20] sm:$0xff]
      %v2170 = vld [vmem:[#allocation3 + $0x28] sm:$0xff]
      %v2171 = vld [vmem:[#allocation3 + $0x30] sm:$0xff]
      %v2172 = vld [vmem:[#allocation3 + $0x38] sm:$0xff]
      %v2173 = vld [vmem:[#allocation3 + $0x40] sm:$0xff]
      %v2174 = vld [vmem:[#allocation3 + $0x48] sm:$0xff]
      %v2175 = vld [vmem:[#allocation3 + $0x50] sm:$0xff]
      %v2176 = vld [vmem:[#allocation3 + $0x58] sm:$0xff]
      %v2177 = vld [vmem:[#allocation3 + $0x60] sm:$0xff]
      %2191 = vrot.lane.b32.xlu0 %v2165, 88
      %v2192 = vpop.permute.xlu0 %2191
      %2193 = vrot.lane.b32.xlu0 %v2166, 88
      %v2194 = vpop.permute.xlu0 %2193
      %2195 = vrot.lane.b32.xlu0 %v2167, 88
      %v2196 = vpop.permute.xlu0 %2195
      %2197 = vrot.lane.b32.xlu0 %v2168, 88
      %v2198 = vpop.permute.xlu0 %2197
      %2199 = vrot.lane.b32.xlu0 %v2169, 88
      %v2200 = vpop.permute.xlu0 %2199
      %2201 = vrot.lane.b32.xlu0 %v2170, 88
      %v2202 = vpop.permute.xlu0 %2201
      %2203 = vrot.lane.b32.xlu0 %v2171, 88
      %v2204 = vpop.permute.xlu0 %2203
      %2205 = vrot.lane.b32.xlu0 %v2172, 88
      %v2206 = vpop.permute.xlu0 %2205
      %2207 = vrot.lane.b32.xlu0 %v2173, 88
      %v2208 = vpop.permute.xlu0 %2207
      %2209 = vrot.lane.b32.xlu0 %v2174, 88
      %v2210 = vpop.permute.xlu0 %2209
      %2211 = vrot.lane.b32.xlu0 %v2175, 88
      %v2212 = vpop.permute.xlu0 %2211
      %2213 = vrot.lane.b32.xlu0 %v2176, 88
      %v2214 = vpop.permute.xlu0 %2213
      %2215 = vrot.lane.b32.xlu0 %v2177, 88
      %v2216 = vpop.permute.xlu0 %2215
      %v2217 = vsel %vm845, %v2192, %v2194
      %v2218 = vsel %vm845, %v2194, %v2196
      %v2219 = vsel %vm845, %v2196, %v2198
      %v2220 = vsel %vm845, %v2198, %v2200
      %v2221 = vsel %vm845, %v2200, %v2202
      %v2222 = vsel %vm845, %v2202, %v2204
      %v2223 = vsel %vm845, %v2204, %v2206
      %v2224 = vsel %vm845, %v2206, %v2208
      %v2225 = vsel %vm845, %v2208, %v2210
      %v2226 = vsel %vm845, %v2210, %v2212
      %v2227 = vsel %vm845, %v2212, %v2214
      %v2228 = vsel %vm845, %v2214, %v2216
      %2241 = vst [vmem:[#allocation2 + $0x270] sm:$0xff] %v2217
      %2242 = vst [vmem:[#allocation2 + $0x278] sm:$0xff] %v2218
      %2243 = vst [vmem:[#allocation2 + $0x280] sm:$0xff] %v2219
      %2244 = vst [vmem:[#allocation2 + $0x288] sm:$0xff] %v2220
      %2245 = vst [vmem:[#allocation2 + $0x290] sm:$0xff] %v2221
      %2246 = vst [vmem:[#allocation2 + $0x298] sm:$0xff] %v2222
      %2247 = vst [vmem:[#allocation2 + $0x2a0] sm:$0xff] %v2223
      %2248 = vst [vmem:[#allocation2 + $0x2a8] sm:$0xff] %v2224
      %2249 = vst [vmem:[#allocation2 + $0x2b0] sm:$0xff] %v2225
      %2250 = vst [vmem:[#allocation2 + $0x2b8] sm:$0xff] %v2226
      %2251 = vst [vmem:[#allocation2 + $0x2c0] sm:$0xff] %v2227
      %2252 = vst.msk [vmem:[#allocation2 + $0x2c8] sm:$0xff] %vm572, %v2228
      %v2253 = vld [vmem:[#allocation3] sm:$0xff]
      %v2254 = vld [vmem:[#allocation3 + $0x8] sm:$0xff]
      %v2255 = vld [vmem:[#allocation3 + $0x10] sm:$0xff]
      %v2256 = vld [vmem:[#allocation3 + $0x18] sm:$0xff]
      %v2257 = vld [vmem:[#allocation3 + $0x20] sm:$0xff]
      %v2258 = vld [vmem:[#allocation3 + $0x28] sm:$0xff]
      %v2259 = vld [vmem:[#allocation3 + $0x30] sm:$0xff]
      %v2260 = vld [vmem:[#allocation3 + $0x38] sm:$0xff]
      %v2261 = vld [vmem:[#allocation3 + $0x40] sm:$0xff]
      %v2262 = vld [vmem:[#allocation3 + $0x48] sm:$0xff]
      %v2263 = vld [vmem:[#allocation3 + $0x50] sm:$0xff]
      %v2264 = vld [vmem:[#allocation3 + $0x58] sm:$0xff]
      %v2265 = vld [vmem:[#allocation3 + $0x60] sm:$0xff]
      %2279 = vrot.lane.b32.xlu0 %v2253, 87
      %v2280 = vpop.permute.xlu0 %2279
      %2281 = vrot.lane.b32.xlu0 %v2254, 87
      %v2282 = vpop.permute.xlu0 %2281
      %2283 = vrot.lane.b32.xlu0 %v2255, 87
      %v2284 = vpop.permute.xlu0 %2283
      %2285 = vrot.lane.b32.xlu0 %v2256, 87
      %v2286 = vpop.permute.xlu0 %2285
      %2287 = vrot.lane.b32.xlu0 %v2257, 87
      %v2288 = vpop.permute.xlu0 %2287
      %2289 = vrot.lane.b32.xlu0 %v2258, 87
      %v2290 = vpop.permute.xlu0 %2289
      %2291 = vrot.lane.b32.xlu0 %v2259, 87
      %v2292 = vpop.permute.xlu0 %2291
      %2293 = vrot.lane.b32.xlu0 %v2260, 87
      %v2294 = vpop.permute.xlu0 %2293
      %2295 = vrot.lane.b32.xlu0 %v2261, 87
      %v2296 = vpop.permute.xlu0 %2295
      %2297 = vrot.lane.b32.xlu0 %v2262, 87
      %v2298 = vpop.permute.xlu0 %2297
      %2299 = vrot.lane.b32.xlu0 %v2263, 87
      %v2300 = vpop.permute.xlu0 %2299
      %2301 = vrot.lane.b32.xlu0 %v2264, 87
      %v2302 = vpop.permute.xlu0 %2301
      %2303 = vrot.lane.b32.xlu0 %v2265, 87
      %v2304 = vpop.permute.xlu0 %2303
      %v2305 = vsel %vm936, %v2280, %v2282
      %v2306 = vsel %vm936, %v2282, %v2284
      %v2307 = vsel %vm936, %v2284, %v2286
      %v2308 = vsel %vm936, %v2286, %v2288
      %v2309 = vsel %vm936, %v2288, %v2290
      %v2310 = vsel %vm936, %v2290, %v2292
      %v2311 = vsel %vm936, %v2292, %v2294
      %v2312 = vsel %vm936, %v2294, %v2296
      %v2313 = vsel %vm936, %v2296, %v2298
      %v2314 = vsel %vm936, %v2298, %v2300
      %v2315 = vsel %vm936, %v2300, %v2302
      %v2316 = vsel %vm936, %v2302, %v2304
      %2329 = vst [vmem:[#allocation2 + $0x2d8] sm:$0xff] %v2305
      %2330 = vst [vmem:[#allocation2 + $0x2e0] sm:$0xff] %v2306
      %2331 = vst [vmem:[#allocation2 + $0x2e8] sm:$0xff] %v2307
      %2332 = vst [vmem:[#allocation2 + $0x2f0] sm:$0xff] %v2308
      %2333 = vst [vmem:[#allocation2 + $0x2f8] sm:$0xff] %v2309
      %2334 = vst [vmem:[#allocation2 + $0x300] sm:$0xff] %v2310
      %2335 = vst [vmem:[#allocation2 + $0x308] sm:$0xff] %v2311
      %2336 = vst [vmem:[#allocation2 + $0x310] sm:$0xff] %v2312
      %2337 = vst [vmem:[#allocation2 + $0x318] sm:$0xff] %v2313
      %2338 = vst [vmem:[#allocation2 + $0x320] sm:$0xff] %v2314
      %2339 = vst [vmem:[#allocation2 + $0x328] sm:$0xff] %v2315
      %2340 = vst.msk [vmem:[#allocation2 + $0x330] sm:$0xff] %vm572, %v2316
      %v2341 = vld [vmem:[#allocation3] sm:$0xff]
      %v2342 = vld [vmem:[#allocation3 + $0x8] sm:$0xff]
      %v2343 = vld [vmem:[#allocation3 + $0x10] sm:$0xff]
      %v2344 = vld [vmem:[#allocation3 + $0x18] sm:$0xff]
      %v2345 = vld [vmem:[#allocation3 + $0x20] sm:$0xff]
      %v2346 = vld [vmem:[#allocation3 + $0x28] sm:$0xff]
      %v2347 = vld [vmem:[#allocation3 + $0x30] sm:$0xff]
      %v2348 = vld [vmem:[#allocation3 + $0x38] sm:$0xff]
      %v2349 = vld [vmem:[#allocation3 + $0x40] sm:$0xff]
      %v2350 = vld [vmem:[#allocation3 + $0x48] sm:$0xff]
      %v2351 = vld [vmem:[#allocation3 + $0x50] sm:$0xff]
      %v2352 = vld [vmem:[#allocation3 + $0x58] sm:$0xff]
      %v2353 = vld [vmem:[#allocation3 + $0x60] sm:$0xff]
      %2367 = vrot.lane.b32.xlu0 %v2341, 86
      %v2368 = vpop.permute.xlu0 %2367
      %2369 = vrot.lane.b32.xlu0 %v2342, 86
      %v2370 = vpop.permute.xlu0 %2369
      %2371 = vrot.lane.b32.xlu0 %v2343, 86
      %v2372 = vpop.permute.xlu0 %2371
      %2373 = vrot.lane.b32.xlu0 %v2344, 86
      %v2374 = vpop.permute.xlu0 %2373
      %2375 = vrot.lane.b32.xlu0 %v2345, 86
      %v2376 = vpop.permute.xlu0 %2375
      %2377 = vrot.lane.b32.xlu0 %v2346, 86
      %v2378 = vpop.permute.xlu0 %2377
      %2379 = vrot.lane.b32.xlu0 %v2347, 86
      %v2380 = vpop.permute.xlu0 %2379
      %2381 = vrot.lane.b32.xlu0 %v2348, 86
      %v2382 = vpop.permute.xlu0 %2381
      %2383 = vrot.lane.b32.xlu0 %v2349, 86
      %v2384 = vpop.permute.xlu0 %2383
      %2385 = vrot.lane.b32.xlu0 %v2350, 86
      %v2386 = vpop.permute.xlu0 %2385
      %2387 = vrot.lane.b32.xlu0 %v2351, 86
      %v2388 = vpop.permute.xlu0 %2387
      %2389 = vrot.lane.b32.xlu0 %v2352, 86
      %v2390 = vpop.permute.xlu0 %2389
      %2391 = vrot.lane.b32.xlu0 %v2353, 86
      %v2392 = vpop.permute.xlu0 %2391
      %v2393 = vsel %vm1027, %v2368, %v2370
      %v2394 = vsel %vm1027, %v2370, %v2372
      %v2395 = vsel %vm1027, %v2372, %v2374
      %v2396 = vsel %vm1027, %v2374, %v2376
      %v2397 = vsel %vm1027, %v2376, %v2378
      %v2398 = vsel %vm1027, %v2378, %v2380
      %v2399 = vsel %vm1027, %v2380, %v2382
      %v2400 = vsel %vm1027, %v2382, %v2384
      %v2401 = vsel %vm1027, %v2384, %v2386
      %v2402 = vsel %vm1027, %v2386, %v2388
      %v2403 = vsel %vm1027, %v2388, %v2390
      %v2404 = vsel %vm1027, %v2390, %v2392
      %2417 = vst [vmem:[#allocation2 + $0x340] sm:$0xff] %v2393
      %2418 = vst [vmem:[#allocation2 + $0x348] sm:$0xff] %v2394
      %2419 = vst [vmem:[#allocation2 + $0x350] sm:$0xff] %v2395
      %2420 = vst [vmem:[#allocation2 + $0x358] sm:$0xff] %v2396
      %2421 = vst [vmem:[#allocation2 + $0x360] sm:$0xff] %v2397
      %2422 = vst [vmem:[#allocation2 + $0x368] sm:$0xff] %v2398
      %2423 = vst [vmem:[#allocation2 + $0x370] sm:$0xff] %v2399
      %2424 = vst [vmem:[#allocation2 + $0x378] sm:$0xff] %v2400
      %2425 = vst [vmem:[#allocation2 + $0x380] sm:$0xff] %v2401
      %2426 = vst [vmem:[#allocation2 + $0x388] sm:$0xff] %v2402
      %2427 = vst [vmem:[#allocation2 + $0x390] sm:$0xff] %v2403
      %2428 = vst.msk [vmem:[#allocation2 + $0x398] sm:$0xff] %vm572, %v2404
      %v2429 = vld [vmem:[%s3 + $0x8] sm:$0xff]
      %v2430 = vld [vmem:[%s4 + $0x8] sm:$0xff]
      %v2431 = vld [vmem:[#allocation2] sm:$0xff]
      %v2432 = vld [vmem:[#allocation2 + $0x8] sm:$0xff]
      %v2433 = vld [vmem:[#allocation2 + $0x10] sm:$0xff]
      %v2434 = vld [vmem:[#allocation2 + $0x18] sm:$0xff]
      %v2435 = vld [vmem:[#allocation2 + $0x20] sm:$0xff]
      %v2436 = vld [vmem:[#allocation2 + $0x28] sm:$0xff]
      %v2437 = vld [vmem:[#allocation2 + $0x30] sm:$0xff]
      %v2438 = vld [vmem:[#allocation2 + $0x38] sm:$0xff]
      %v2439 = vld [vmem:[#allocation2 + $0x40] sm:$0xff]
      %v2440 = vld [vmem:[#allocation2 + $0x48] sm:$0xff]
      %v2441 = vld [vmem:[#allocation2 + $0x50] sm:$0xff]
      %v2442 = vld [vmem:[#allocation2 + $0x58] sm:$0xff]
      %v2443 = vld [vmem:[#allocation2 + $0x68] sm:$0xff]
      %v2444 = vld [vmem:[#allocation2 + $0x70] sm:$0xff]
      %v2445 = vld [vmem:[#allocation2 + $0x78] sm:$0xff]
      %v2446 = vld [vmem:[#allocation2 + $0x80] sm:$0xff]
      %v2447 = vld [vmem:[#allocation2 + $0x88] sm:$0xff]
      %v2448 = vld [vmem:[#allocation2 + $0x90] sm:$0xff]
      %v2449 = vld [vmem:[#allocation2 + $0x98] sm:$0xff]
      %v2450 = vld [vmem:[#allocation2 + $0xa0] sm:$0xff]
      %v2451 = vld [vmem:[#allocation2 + $0xa8] sm:$0xff]
      %v2452 = vld [vmem:[#allocation2 + $0xb0] sm:$0xff]
      %v2453 = vld [vmem:[#allocation2 + $0xb8] sm:$0xff]
      %v2454 = vld [vmem:[#allocation2 + $0xc0] sm:$0xff]
      %v2455 = vld [vmem:[#allocation2 + $0xd0] sm:$0xff]
      %v2456 = vld [vmem:[#allocation2 + $0xd8] sm:$0xff]
      %v2457 = vld [vmem:[#allocation2 + $0xe0] sm:$0xff]
      %v2458 = vld [vmem:[#allocation2 + $0xe8] sm:$0xff]
      %v2459 = vld [vmem:[#allocation2 + $0xf0] sm:$0xff]
      %v2460 = vld [vmem:[#allocation2 + $0xf8] sm:$0xff]
      %v2461 = vld [vmem:[#allocation2 + $0x100] sm:$0xff]
      %v2462 = vld [vmem:[#allocation2 + $0x108] sm:$0xff]
      %v2463 = vld [vmem:[#allocation2 + $0x110] sm:$0xff]
      %v2464 = vld [vmem:[#allocation2 + $0x118] sm:$0xff]
      %v2465 = vld [vmem:[#allocation2 + $0x120] sm:$0xff]
      %v2466 = vld [vmem:[#allocation2 + $0x128] sm:$0xff]
      %v2467 = vld [vmem:[#allocation2 + $0x138] sm:$0xff]
      %v2468 = vld [vmem:[#allocation2 + $0x140] sm:$0xff]
      %v2469 = vld [vmem:[#allocation2 + $0x148] sm:$0xff]
      %v2470 = vld [vmem:[#allocation2 + $0x150] sm:$0xff]
      %v2471 = vld [vmem:[#allocation2 + $0x158] sm:$0xff]
      %v2472 = vld [vmem:[#allocation2 + $0x160] sm:$0xff]
      %v2473 = vld [vmem:[#allocation2 + $0x168] sm:$0xff]
      %v2474 = vld [vmem:[#allocation2 + $0x170] sm:$0xff]
      %v2475 = vld [vmem:[#allocation2 + $0x178] sm:$0xff]
      %v2476 = vld [vmem:[#allocation2 + $0x180] sm:$0xff]
      %v2477 = vld [vmem:[#allocation2 + $0x188] sm:$0xff]
      %v2478 = vld [vmem:[#allocation2 + $0x190] sm:$0xff]
      %v2479 = vld [vmem:[#allocation2 + $0x1a0] sm:$0xff]
      %v2480 = vld [vmem:[#allocation2 + $0x1a8] sm:$0xff]
      %v2481 = vld [vmem:[#allocation2 + $0x1b0] sm:$0xff]
      %v2482 = vld [vmem:[#allocation2 + $0x1b8] sm:$0xff]
      %v2483 = vld [vmem:[#allocation2 + $0x1c0] sm:$0xff]
      %v2484 = vld [vmem:[#allocation2 + $0x1c8] sm:$0xff]
      %v2485 = vld [vmem:[#allocation2 + $0x1d0] sm:$0xff]
      %v2486 = vld [vmem:[#allocation2 + $0x1d8] sm:$0xff]
      %v2487 = vld [vmem:[#allocation2 + $0x1e0] sm:$0xff]
      %v2488 = vld [vmem:[#allocation2 + $0x1e8] sm:$0xff]
      %v2489 = vld [vmem:[#allocation2 + $0x1f0] sm:$0xff]
      %v2490 = vld [vmem:[#allocation2 + $0x1f8] sm:$0xff]
      %v2491 = vld [vmem:[#allocation2 + $0x208] sm:$0xff]
      %v2492 = vld [vmem:[#allocation2 + $0x210] sm:$0xff]
      %v2493 = vld [vmem:[#allocation2 + $0x218] sm:$0xff]
      %v2494 = vld [vmem:[#allocation2 + $0x220] sm:$0xff]
      %v2495 = vld [vmem:[#allocation2 + $0x228] sm:$0xff]
      %v2496 = vld [vmem:[#allocation2 + $0x230] sm:$0xff]
      %v2497 = vld [vmem:[#allocation2 + $0x238] sm:$0xff]
      %v2498 = vld [vmem:[#allocation2 + $0x240] sm:$0xff]
      %v2499 = vld [vmem:[#allocation2 + $0x248] sm:$0xff]
      %v2500 = vld [vmem:[#allocation2 + $0x250] sm:$0xff]
      %v2501 = vld [vmem:[#allocation2 + $0x258] sm:$0xff]
      %v2502 = vld [vmem:[#allocation2 + $0x260] sm:$0xff]
      %v2503 = vld [vmem:[#allocation2 + $0x270] sm:$0xff]
      %v2504 = vld [vmem:[#allocation2 + $0x278] sm:$0xff]
      %v2505 = vld [vmem:[#allocation2 + $0x280] sm:$0xff]
      %v2506 = vld [vmem:[#allocation2 + $0x288] sm:$0xff]
      %v2507 = vld [vmem:[#allocation2 + $0x290] sm:$0xff]
      %v2508 = vld [vmem:[#allocation2 + $0x298] sm:$0xff]
      %v2509 = vld [vmem:[#allocation2 + $0x2a0] sm:$0xff]
      %v2510 = vld [vmem:[#allocation2 + $0x2a8] sm:$0xff]
      %v2511 = vld [vmem:[#allocation2 + $0x2b0] sm:$0xff]
      %v2512 = vld [vmem:[#allocation2 + $0x2b8] sm:$0xff]
      %v2513 = vld [vmem:[#allocation2 + $0x2c0] sm:$0xff]
      %v2514 = vld [vmem:[#allocation2 + $0x2c8] sm:$0xff]
      %v2515 = vld [vmem:[#allocation2 + $0x2d8] sm:$0xff]
      %v2516 = vld [vmem:[#allocation2 + $0x2e0] sm:$0xff]
      %v2517 = vld [vmem:[#allocation2 + $0x2e8] sm:$0xff]
      %v2518 = vld [vmem:[#allocation2 + $0x2f0] sm:$0xff]
      %v2519 = vld [vmem:[#allocation2 + $0x2f8] sm:$0xff]
      %v2520 = vld [vmem:[#allocation2 + $0x300] sm:$0xff]
      %v2521 = vld [vmem:[#allocation2 + $0x308] sm:$0xff]
      %v2522 = vld [vmem:[#allocation2 + $0x310] sm:$0xff]
      %v2523 = vld [vmem:[#allocation2 + $0x318] sm:$0xff]
      %v2524 = vld [vmem:[#allocation2 + $0x320] sm:$0xff]
      %v2525 = vld [vmem:[#allocation2 + $0x328] sm:$0xff]
      %v2526 = vld [vmem:[#allocation2 + $0x330] sm:$0xff]
      %v2527 = vld [vmem:[#allocation2 + $0x340] sm:$0xff]
      %v2528 = vld [vmem:[#allocation2 + $0x348] sm:$0xff]
      %v2529 = vld [vmem:[#allocation2 + $0x350] sm:$0xff]
      %v2530 = vld [vmem:[#allocation2 + $0x358] sm:$0xff]
      %v2531 = vld [vmem:[#allocation2 + $0x360] sm:$0xff]
      %v2532 = vld [vmem:[#allocation2 + $0x368] sm:$0xff]
      %v2533 = vld [vmem:[#allocation2 + $0x370] sm:$0xff]
      %v2534 = vld [vmem:[#allocation2 + $0x378] sm:$0xff]
      %v2535 = vld [vmem:[#allocation2 + $0x380] sm:$0xff]
      %v2536 = vld [vmem:[#allocation2 + $0x388] sm:$0xff]
      %v2537 = vld [vmem:[#allocation2 + $0x390] sm:$0xff]
      %v2538 = vld [vmem:[#allocation2 + $0x398] sm:$0xff]
      %2540 = vset.pattern.permute.xlu0 0
      %2541 = vperm.xlu0 %2540, %v2430
      %v2542 = vpop.permute.xlu0 %2541
      %v2545 = vsel %vm1190, %v2429, 0
      %2547 = vmatprep.subr.mxu0 %v2432
      %2548 = vmatpush1.msra.mxu0 %v2431
      %2549 = vmatprep.subr.mxu0 %v2444
      %2550 = vmatpush1.msra.mxu0 %v2443
      %2551 = vmatprep.subr.mxu0 %v2456
      %2552 = vmatpush1.msra.mxu0 %v2455
      %2553 = vmatprep.subr.mxu0 %v2468
      %2554 = vmatpush1.msra.mxu0 %v2467
      %2555 = vmatprep.subr.mxu0 %v2480
      %2556 = vmatpush1.msra.mxu0 %v2479
      %2557 = vmatprep.subr.mxu0 %v2492
      %2558 = vmatpush1.msra.mxu0 %v2491
      %2559 = vmatprep.subr.mxu0 %v2504
      %2560 = vmatpush1.msra.mxu0 %v2503
      %2561 = vmatprep.subr.mxu0 %v2516
      %2562 = vmatpush1.msra.mxu0 %v2515
      %2563 = vmatprep.subr.mxu0 %v2528
      %2564 = vmatpush1.msra.mxu0 %v2527
      %2565 = vmatprep.subr.mxu0 0.0
      %2566 = vmatpush1.msra.mxu0 0.0
      %2567 = vmatprep.subr.mxu0 0.0
      %2568 = vmatpush1.msra.mxu0 0.0
      %2569 = vmatprep.subr.mxu0 0.0
      %2570 = vmatpush1.msra.mxu0 0.0
      %2571 = vmatprep.subr.mxu0 0.0
      %2572 = vmatpush1.msra.mxu0 0.0
      %2573 = vmatprep.subr.mxu0 0.0
      %2574 = vmatpush1.msra.mxu0 0.0
      %2575 = vmatprep.subr.mxu0 0.0
      %2576 = vmatpush1.msra.mxu0 0.0
      %2577 = vmatprep.subr.mxu0 0.0
      %2578 = vmatpush1.msra.mxu0 0.0
      %2579 = vmatprep.subr.mxu0 0.0
      %2580 = vmatpush1.msra.mxu0 0.0
      %2581 = vmatprep.subr.mxu0 0.0
      %2582 = vmatpush1.msra.mxu0 0.0
      %2583 = vmatprep.subr.mxu0 0.0
      %2584 = vmatpush1.msra.mxu0 0.0
      %2585 = vmatprep.subr.mxu0 0.0
      %2586 = vmatpush1.msra.mxu0 0.0
      %2587 = vmatprep.subr.mxu0 0.0
      %2588 = vmatpush1.msra.mxu0 0.0
      %2589 = vmatprep.subr.mxu0 0.0
      %2590 = vmatpush1.msra.mxu0 0.0
      %2591 = vmatprep.subr.mxu0 0.0
      %2592 = vmatpush1.msra.mxu0 0.0
      %2593 = vmatprep.subr.mxu0 0.0
      %2594 = vmatpush1.msra.mxu0 0.0
      %2595 = vmatprep.subr.mxu0 0.0
      %2596 = vmatpush1.msra.mxu0 0.0
      %2597 = vmatprep.subr.mxu0 0.0
      %2598 = vmatpush1.msra.mxu0 0.0
      %2599 = vmatprep.subr.mxu0 0.0
      %2600 = vmatpush1.msra.mxu0 0.0
      %2601 = vmatprep.subr.mxu0 0.0
      %2602 = vmatpush1.msra.mxu0 0.0
      %2603 = vmatprep.subr.mxu0 0.0
      %2604 = vmatpush1.msra.mxu0 0.0
      %2605 = vmatprep.subr.mxu0 0.0
      %2606 = vmatpush1.msra.mxu0 0.0
      %2607 = vmatprep.subr.mxu0 0.0
      %2608 = vmatpush1.msra.mxu0 0.0
      %2609 = vmatprep.subr.mxu0 0.0
      %2610 = vmatpush1.msra.mxu0 0.0
      %2611 = vmatprep.mubr.f32.mxu0 0.0
      %2612 = vmatmul.mubr.f32.gmra.mrb[0].mxu0 %v2545
      %v2613 = vpop.f32.mrb[0].mxu0
      %v2614 = vadd.f32 %v2542, %v2613
      %v2615 = vpop.f32.mrb[0].mxu0
      %v2616 = vadd.f32 %v2542, %v2615
      %2617 = vdwg.mxu0
      %2618 = vmatprep.subr.mxu0 %v2434
      %2619 = vmatpush1.msra.mxu0 %v2433
      %2620 = vmatprep.subr.mxu0 %v2446
      %2621 = vmatpush1.msra.mxu0 %v2445
      %2622 = vmatprep.subr.mxu0 %v2458
      %2623 = vmatpush1.msra.mxu0 %v2457
      %2624 = vmatprep.subr.mxu0 %v2470
      %2625 = vmatpush1.msra.mxu0 %v2469
      %2626 = vmatprep.subr.mxu0 %v2482
      %2627 = vmatpush1.msra.mxu0 %v2481
      %2628 = vmatprep.subr.mxu0 %v2494
      %2629 = vmatpush1.msra.mxu0 %v2493
      %2630 = vmatprep.subr.mxu0 %v2506
      %2631 = vmatpush1.msra.mxu0 %v2505
      %2632 = vmatprep.subr.mxu0 %v2518
      %2633 = vmatpush1.msra.mxu0 %v2517
      %2634 = vmatprep.subr.mxu0 %v2530
      %2635 = vmatpush1.msra.mxu0 %v2529
      %2636 = vmatprep.subr.mxu0 0.0
      %2637 = vmatpush1.msra.mxu0 0.0
      %2638 = vmatprep.subr.mxu0 0.0
      %2639 = vmatpush1.msra.mxu0 0.0
      %2640 = vmatprep.subr.mxu0 0.0
      %2641 = vmatpush1.msra.mxu0 0.0
      %2642 = vmatprep.subr.mxu0 0.0
      %2643 = vmatpush1.msra.mxu0 0.0
      %2644 = vmatprep.subr.mxu0 0.0
      %2645 = vmatpush1.msra.mxu0 0.0
      %2646 = vmatprep.subr.mxu0 0.0
      %2647 = vmatpush1.msra.mxu0 0.0
      %2648 = vmatprep.subr.mxu0 0.0
      %2649 = vmatpush1.msra.mxu0 0.0
      %2650 = vmatprep.subr.mxu0 0.0
      %2651 = vmatpush1.msra.mxu0 0.0
      %2652 = vmatprep.subr.mxu0 0.0
      %2653 = vmatpush1.msra.mxu0 0.0
      %2654 = vmatprep.subr.mxu0 0.0
      %2655 = vmatpush1.msra.mxu0 0.0
      %2656 = vmatprep.subr.mxu0 0.0
      %2657 = vmatpush1.msra.mxu0 0.0
      %2658 = vmatprep.subr.mxu0 0.0
      %2659 = vmatpush1.msra.mxu0 0.0
      %2660 = vmatprep.subr.mxu0 0.0
      %2661 = vmatpush1.msra.mxu0 0.0
      %2662 = vmatprep.subr.mxu0 0.0
      %2663 = vmatpush1.msra.mxu0 0.0
      %2664 = vmatprep.subr.mxu0 0.0
      %2665 = vmatpush1.msra.mxu0 0.0
      %2666 = vmatprep.subr.mxu0 0.0
      %2667 = vmatpush1.msra.mxu0 0.0
      %2668 = vmatprep.subr.mxu0 0.0
      %2669 = vmatpush1.msra.mxu0 0.0
      %2670 = vmatprep.subr.mxu0 0.0
      %2671 = vmatpush1.msra.mxu0 0.0
      %2672 = vmatprep.subr.mxu0 0.0
      %2673 = vmatpush1.msra.mxu0 0.0
      %2674 = vmatprep.subr.mxu0 0.0
      %2675 = vmatpush1.msra.mxu0 0.0
      %2676 = vmatprep.subr.mxu0 0.0
      %2677 = vmatpush1.msra.mxu0 0.0
      %2678 = vmatprep.subr.mxu0 0.0
      %2679 = vmatpush1.msra.mxu0 0.0
      %2680 = vmatprep.subr.mxu0 0.0
      %2681 = vmatpush1.msra.mxu0 0.0
      %2682 = vmatprep.mubr.f32.mxu0 0.0
      %2683 = vmatmul.mubr.f32.gmra.mrb[0].mxu0 %v2545
      %v2684 = vpop.f32.mrb[0].mxu0
      %v2685 = vadd.f32 %v2542, %v2684
      %v2686 = vpop.f32.mrb[0].mxu0
      %v2687 = vadd.f32 %v2542, %v2686
      %2688 = vdwg.mxu0
      %2689 = vmatprep.subr.mxu0 %v2436
      %2690 = vmatpush1.msra.mxu0 %v2435
      %2691 = vmatprep.subr.mxu0 %v2448
      %2692 = vmatpush1.msra.mxu0 %v2447
      %2693 = vmatprep.subr.mxu0 %v2460
      %2694 = vmatpush1.msra.mxu0 %v2459
      %2695 = vmatprep.subr.mxu0 %v2472
      %2696 = vmatpush1.msra.mxu0 %v2471
      %2697 = vmatprep.subr.mxu0 %v2484
      %2698 = vmatpush1.msra.mxu0 %v2483
      %2699 = vmatprep.subr.mxu0 %v2496
      %2700 = vmatpush1.msra.mxu0 %v2495
      %2701 = vmatprep.subr.mxu0 %v2508
      %2702 = vmatpush1.msra.mxu0 %v2507
      %2703 = vmatprep.subr.mxu0 %v2520
      %2704 = vmatpush1.msra.mxu0 %v2519
      %2705 = vmatprep.subr.mxu0 %v2532
      %2706 = vmatpush1.msra.mxu0 %v2531
      %2707 = vmatprep.subr.mxu0 0.0
      %2708 = vmatpush1.msra.mxu0 0.0
      %2709 = vmatprep.subr.mxu0 0.0
      %2710 = vmatpush1.msra.mxu0 0.0
      %2711 = vmatprep.subr.mxu0 0.0
      %2712 = vmatpush1.msra.mxu0 0.0
      %2713 = vmatprep.subr.mxu0 0.0
      %2714 = vmatpush1.msra.mxu0 0.0
      %2715 = vmatprep.subr.mxu0 0.0
      %2716 = vmatpush1.msra.mxu0 0.0
      %2717 = vmatprep.subr.mxu0 0.0
      %2718 = vmatpush1.msra.mxu0 0.0
      %2719 = vmatprep.subr.mxu0 0.0
      %2720 = vmatpush1.msra.mxu0 0.0
      %2721 = vmatprep.subr.mxu0 0.0
      %2722 = vmatpush1.msra.mxu0 0.0
      %2723 = vmatprep.subr.mxu0 0.0
      %2724 = vmatpush1.msra.mxu0 0.0
      %2725 = vmatprep.subr.mxu0 0.0
      %2726 = vmatpush1.msra.mxu0 0.0
      %2727 = vmatprep.subr.mxu0 0.0
      %2728 = vmatpush1.msra.mxu0 0.0
      %2729 = vmatprep.subr.mxu0 0.0
      %2730 = vmatpush1.msra.mxu0 0.0
      %2731 = vmatprep.subr.mxu0 0.0
      %2732 = vmatpush1.msra.mxu0 0.0
      %2733 = vmatprep.subr.mxu0 0.0
      %2734 = vmatpush1.msra.mxu0 0.0
      %2735 = vmatprep.subr.mxu0 0.0
      %2736 = vmatpush1.msra.mxu0 0.0
      %2737 = vmatprep.subr.mxu0 0.0
      %2738 = vmatpush1.msra.mxu0 0.0
      %2739 = vmatprep.subr.mxu0 0.0
      %2740 = vmatpush1.msra.mxu0 0.0
      %2741 = vmatprep.subr.mxu0 0.0
      %2742 = vmatpush1.msra.mxu0 0.0
      %2743 = vmatprep.subr.mxu0 0.0
      %2744 = vmatpush1.msra.mxu0 0.0
      %2745 = vmatprep.subr.mxu0 0.0
      %2746 = vmatpush1.msra.mxu0 0.0
      %2747 = vmatprep.subr.mxu0 0.0
      %2748 = vmatpush1.msra.mxu0 0.0
      %2749 = vmatprep.subr.mxu0 0.0
      %2750 = vmatpush1.msra.mxu0 0.0
      %2751 = vmatprep.subr.mxu0 0.0
      %2752 = vmatpush1.msra.mxu0 0.0
      %2753 = vmatprep.mubr.f32.mxu0 0.0
      %2754 = vmatmul.mubr.f32.gmra.mrb[0].mxu0 %v2545
      %v2755 = vpop.f32.mrb[0].mxu0
      %v2756 = vadd.f32 %v2542, %v2755
      %v2757 = vpop.f32.mrb[0].mxu0
      %v2758 = vadd.f32 %v2542, %v2757
      %2759 = vdwg.mxu0
      %2760 = vmatprep.subr.mxu0 %v2438
      %2761 = vmatpush1.msra.mxu0 %v2437
      %2762 = vmatprep.subr.mxu0 %v2450
      %2763 = vmatpush1.msra.mxu0 %v2449
      %2764 = vmatprep.subr.mxu0 %v2462
      %2765 = vmatpush1.msra.mxu0 %v2461
      %2766 = vmatprep.subr.mxu0 %v2474
      %2767 = vmatpush1.msra.mxu0 %v2473
      %2768 = vmatprep.subr.mxu0 %v2486
      %2769 = vmatpush1.msra.mxu0 %v2485
      %2770 = vmatprep.subr.mxu0 %v2498
      %2771 = vmatpush1.msra.mxu0 %v2497
      %2772 = vmatprep.subr.mxu0 %v2510
      %2773 = vmatpush1.msra.mxu0 %v2509
      %2774 = vmatprep.subr.mxu0 %v2522
      %2775 = vmatpush1.msra.mxu0 %v2521
      %2776 = vmatprep.subr.mxu0 %v2534
      %2777 = vmatpush1.msra.mxu0 %v2533
      %2778 = vmatprep.subr.mxu0 0.0
      %2779 = vmatpush1.msra.mxu0 0.0
      %2780 = vmatprep.subr.mxu0 0.0
      %2781 = vmatpush1.msra.mxu0 0.0
      %2782 = vmatprep.subr.mxu0 0.0
      %2783 = vmatpush1.msra.mxu0 0.0
      %2784 = vmatprep.subr.mxu0 0.0
      %2785 = vmatpush1.msra.mxu0 0.0
      %2786 = vmatprep.subr.mxu0 0.0
      %2787 = vmatpush1.msra.mxu0 0.0
      %2788 = vmatprep.subr.mxu0 0.0
      %2789 = vmatpush1.msra.mxu0 0.0
      %2790 = vmatprep.subr.mxu0 0.0
      %2791 = vmatpush1.msra.mxu0 0.0
      %2792 = vmatprep.subr.mxu0 0.0
      %2793 = vmatpush1.msra.mxu0 0.0
      %2794 = vmatprep.subr.mxu0 0.0
      %2795 = vmatpush1.msra.mxu0 0.0
      %2796 = vmatprep.subr.mxu0 0.0
      %2797 = vmatpush1.msra.mxu0 0.0
      %2798 = vmatprep.subr.mxu0 0.0
      %2799 = vmatpush1.msra.mxu0 0.0
      %2800 = vmatprep.subr.mxu0 0.0
      %2801 = vmatpush1.msra.mxu0 0.0
      %2802 = vmatprep.subr.mxu0 0.0
      %2803 = vmatpush1.msra.mxu0 0.0
      %2804 = vmatprep.subr.mxu0 0.0
      %2805 = vmatpush1.msra.mxu0 0.0
      %2806 = vmatprep.subr.mxu0 0.0
      %2807 = vmatpush1.msra.mxu0 0.0
      %2808 = vmatprep.subr.mxu0 0.0
      %2809 = vmatpush1.msra.mxu0 0.0
      %2810 = vmatprep.subr.mxu0 0.0
      %2811 = vmatpush1.msra.mxu0 0.0
      %2812 = vmatprep.subr.mxu0 0.0
      %2813 = vmatpush1.msra.mxu0 0.0
      %2814 = vmatprep.subr.mxu0 0.0
      %2815 = vmatpush1.msra.mxu0 0.0
      %2816 = vmatprep.subr.mxu0 0.0
      %2817 = vmatpush1.msra.mxu0 0.0
      %2818 = vmatprep.subr.mxu0 0.0
      %2819 = vmatpush1.msra.mxu0 0.0
      %2820 = vmatprep.subr.mxu0 0.0
      %2821 = vmatpush1.msra.mxu0 0.0
      %2822 = vmatprep.subr.mxu0 0.0
      %2823 = vmatpush1.msra.mxu0 0.0
      %2824 = vmatprep.mubr.f32.mxu0 0.0
      %2825 = vmatmul.mubr.f32.gmra.mrb[0].mxu0 %v2545
      %v2826 = vpop.f32.mrb[0].mxu0
      %v2827 = vadd.f32 %v2542, %v2826
      %v2828 = vpop.f32.mrb[0].mxu0
      %v2829 = vadd.f32 %v2542, %v2828
      %2830 = vdwg.mxu0
      %2831 = vmatprep.subr.mxu0 %v2440
      %2832 = vmatpush1.msra.mxu0 %v2439
      %2833 = vmatprep.subr.mxu0 %v2452
      %2834 = vmatpush1.msra.mxu0 %v2451
      %2835 = vmatprep.subr.mxu0 %v2464
      %2836 = vmatpush1.msra.mxu0 %v2463
      %2837 = vmatprep.subr.mxu0 %v2476
      %2838 = vmatpush1.msra.mxu0 %v2475
      %2839 = vmatprep.subr.mxu0 %v2488
      %2840 = vmatpush1.msra.mxu0 %v2487
      %2841 = vmatprep.subr.mxu0 %v2500
      %2842 = vmatpush1.msra.mxu0 %v2499
      %2843 = vmatprep.subr.mxu0 %v2512
      %2844 = vmatpush1.msra.mxu0 %v2511
      %2845 = vmatprep.subr.mxu0 %v2524
      %2846 = vmatpush1.msra.mxu0 %v2523
      %2847 = vmatprep.subr.mxu0 %v2536
      %2848 = vmatpush1.msra.mxu0 %v2535
      %2849 = vmatprep.subr.mxu0 0.0
      %2850 = vmatpush1.msra.mxu0 0.0
      %2851 = vmatprep.subr.mxu0 0.0
      %2852 = vmatpush1.msra.mxu0 0.0
      %2853 = vmatprep.subr.mxu0 0.0
      %2854 = vmatpush1.msra.mxu0 0.0
      %2855 = vmatprep.subr.mxu0 0.0
      %2856 = vmatpush1.msra.mxu0 0.0
      %2857 = vmatprep.subr.mxu0 0.0
      %2858 = vmatpush1.msra.mxu0 0.0
      %2859 = vmatprep.subr.mxu0 0.0
      %2860 = vmatpush1.msra.mxu0 0.0
      %2861 = vmatprep.subr.mxu0 0.0
      %2862 = vmatpush1.msra.mxu0 0.0
      %2863 = vmatprep.subr.mxu0 0.0
      %2864 = vmatpush1.msra.mxu0 0.0
      %2865 = vmatprep.subr.mxu0 0.0
      %2866 = vmatpush1.msra.mxu0 0.0
      %2867 = vmatprep.subr.mxu0 0.0
      %2868 = vmatpush1.msra.mxu0 0.0
      %2869 = vmatprep.subr.mxu0 0.0
      %2870 = vmatpush1.msra.mxu0 0.0
      %2871 = vmatprep.subr.mxu0 0.0
      %2872 = vmatpush1.msra.mxu0 0.0
      %2873 = vmatprep.subr.mxu0 0.0
      %2874 = vmatpush1.msra.mxu0 0.0
      %2875 = vmatprep.subr.mxu0 0.0
      %2876 = vmatpush1.msra.mxu0 0.0
      %2877 = vmatprep.subr.mxu0 0.0
      %2878 = vmatpush1.msra.mxu0 0.0
      %2879 = vmatprep.subr.mxu0 0.0
      %2880 = vmatpush1.msra.mxu0 0.0
      %2881 = vmatprep.subr.mxu0 0.0
      %2882 = vmatpush1.msra.mxu0 0.0
      %2883 = vmatprep.subr.mxu0 0.0
      %2884 = vmatpush1.msra.mxu0 0.0
      %2885 = vmatprep.subr.mxu0 0.0
      %2886 = vmatpush1.msra.mxu0 0.0
      %2887 = vmatprep.subr.mxu0 0.0
      %2888 = vmatpush1.msra.mxu0 0.0
      %2889 = vmatprep.subr.mxu0 0.0
      %2890 = vmatpush1.msra.mxu0 0.0
      %2891 = vmatprep.subr.mxu0 0.0
      %2892 = vmatpush1.msra.mxu0 0.0
      %2893 = vmatprep.subr.mxu0 0.0
      %2894 = vmatpush1.msra.mxu0 0.0
      %2895 = vmatprep.mubr.f32.mxu0 0.0
      %2896 = vmatmul.mubr.f32.gmra.mrb[0].mxu0 %v2545
      %v2897 = vpop.f32.mrb[0].mxu0
      %v2898 = vadd.f32 %v2542, %v2897
      %v2899 = vpop.f32.mrb[0].mxu0
      %v2900 = vadd.f32 %v2542, %v2899
      %2901 = vdwg.mxu0
      %2902 = vmatprep.subr.mxu0 %v2442
      %2903 = vmatpush1.msra.mxu0 %v2441
      %2904 = vmatprep.subr.mxu0 %v2454
      %2905 = vmatpush1.msra.mxu0 %v2453
      %2906 = vmatprep.subr.mxu0 %v2466
      %2907 = vmatpush1.msra.mxu0 %v2465
      %2908 = vmatprep.subr.mxu0 %v2478
      %2909 = vmatpush1.msra.mxu0 %v2477
      %2910 = vmatprep.subr.mxu0 %v2490
      %2911 = vmatpush1.msra.mxu0 %v2489
      %2912 = vmatprep.subr.mxu0 %v2502
      %2913 = vmatpush1.msra.mxu0 %v2501
      %2914 = vmatprep.subr.mxu0 %v2514
      %2915 = vmatpush1.msra.mxu0 %v2513
      %2916 = vmatprep.subr.mxu0 %v2526
      %2917 = vmatpush1.msra.mxu0 %v2525
      %2918 = vmatprep.subr.mxu0 %v2538
      %2919 = vmatpush1.msra.mxu0 %v2537
      %2920 = vmatprep.subr.mxu0 0.0
      %2921 = vmatpush1.msra.mxu0 0.0
      %2922 = vmatprep.subr.mxu0 0.0
      %2923 = vmatpush1.msra.mxu0 0.0
      %2924 = vmatprep.subr.mxu0 0.0
      %2925 = vmatpush1.msra.mxu0 0.0
      %2926 = vmatprep.subr.mxu0 0.0
      %2927 = vmatpush1.msra.mxu0 0.0
      %2928 = vmatprep.subr.mxu0 0.0
      %2929 = vmatpush1.msra.mxu0 0.0
      %2930 = vmatprep.subr.mxu0 0.0
      %2931 = vmatpush1.msra.mxu0 0.0
      %2932 = vmatprep.subr.mxu0 0.0
      %2933 = vmatpush1.msra.mxu0 0.0
      %2934 = vmatprep.subr.mxu0 0.0
      %2935 = vmatpush1.msra.mxu0 0.0
      %2936 = vmatprep.subr.mxu0 0.0
      %2937 = vmatpush1.msra.mxu0 0.0
      %2938 = vmatprep.subr.mxu0 0.0
      %2939 = vmatpush1.msra.mxu0 0.0
      %2940 = vmatprep.subr.mxu0 0.0
      %2941 = vmatpush1.msra.mxu0 0.0
      %2942 = vmatprep.subr.mxu0 0.0
      %2943 = vmatpush1.msra.mxu0 0.0
      %2944 = vmatprep.subr.mxu0 0.0
      %2945 = vmatpush1.msra.mxu0 0.0
      %2946 = vmatprep.subr.mxu0 0.0
      %2947 = vmatpush1.msra.mxu0 0.0
      %2948 = vmatprep.subr.mxu0 0.0
      %2949 = vmatpush1.msra.mxu0 0.0
      %2950 = vmatprep.subr.mxu0 0.0
      %2951 = vmatpush1.msra.mxu0 0.0
      %2952 = vmatprep.subr.mxu0 0.0
      %2953 = vmatpush1.msra.mxu0 0.0
      %2954 = vmatprep.subr.mxu0 0.0
      %2955 = vmatpush1.msra.mxu0 0.0
      %2956 = vmatprep.subr.mxu0 0.0
      %2957 = vmatpush1.msra.mxu0 0.0
      %2958 = vmatprep.subr.mxu0 0.0
      %2959 = vmatpush1.msra.mxu0 0.0
      %2960 = vmatprep.subr.mxu0 0.0
      %2961 = vmatpush1.msra.mxu0 0.0
      %2962 = vmatprep.subr.mxu0 0.0
      %2963 = vmatpush1.msra.mxu0 0.0
      %2964 = vmatprep.subr.mxu0 0.0
      %2965 = vmatpush1.msra.mxu0 0.0
      %2966 = vmatprep.mubr.f32.mxu0 0.0
      %2967 = vmatmul.mubr.f32.gmra.mrb[0].mxu0 %v2545
      %v2968 = vpop.f32.mrb[0].mxu0
      %v2969 = vadd.f32 %v2542, %v2968
      %v2970 = vpop.f32.mrb[0].mxu0
      %v2971 = vadd.f32 %v2542, %v2970
      %2972 = vdwg.mxu0
      %v2973 = vtanh.pop %v2614
      %v2974 = vtanh.pop %v2616
      %v2975 = vtanh.pop %v2685
      %v2976 = vtanh.pop %v2687
      %v2977 = vtanh.pop %v2756
      %v2978 = vtanh.pop %v2758
      %v2979 = vtanh.pop %v2827
      %v2980 = vtanh.pop %v2829
      %v2981 = vtanh.pop %v2898
      %v2982 = vtanh.pop %v2900
      %v2983 = vtanh.pop %v2969
      %v2984 = vtanh.pop %v2971
      %v2985 = vld [vmem:[%s302] sm:$0xff]
      %v2986 = vld [vmem:[%s302 + $0x8] sm:$0xf]
      %v2989 = vlaneseq
      %v2990 = vshrl.u32 %v2989, 7
      %v2991 = vsub.s32 0, %v2990
      %v2992 = vrot.slane %v2985, %v2991
      %v2993 = vlaneseq
      %v2994 = vshrl.u32 %v2993, 7
      %v2995 = vsub.s32 1, %v2994
      %v2996 = vrot.slane %v2985, %v2995
      %v2997 = vlaneseq
      %v2998 = vshrl.u32 %v2997, 7
      %v2999 = vsub.s32 2, %v2998
      %v3000 = vrot.slane %v2985, %v2999
      %v3001 = vlaneseq
      %v3002 = vshrl.u32 %v3001, 7
      %v3003 = vsub.s32 3, %v3002
      %v3004 = vrot.slane %v2985, %v3003
      %v3005 = vlaneseq
      %v3006 = vshrl.u32 %v3005, 7
      %v3007 = vsub.s32 4, %v3006
      %v3008 = vrot.slane %v2985, %v3007
      %v3009 = vlaneseq
      %v3010 = vshrl.u32 %v3009, 7
      %v3011 = vsub.s32 5, %v3010
      %v3012 = vrot.slane %v2985, %v3011
      %v3013 = vlaneseq
      %v3014 = vshrl.u32 %v3013, 7
      %v3015 = vsub.s32 6, %v3014
      %v3016 = vrot.slane %v2985, %v3015
      %v3017 = vlaneseq
      %v3018 = vshrl.u32 %v3017, 7
      %v3019 = vsub.s32 7, %v3018
      %v3020 = vrot.slane %v2985, %v3019
      %v3021 = vlaneseq
      %v3022 = vshrl.u32 %v3021, 7
      %v3023 = vsub.s32 0, %v3022
      %v3024 = vrot.slane %v2986, %v3023
      %v3025 = vlaneseq
      %v3026 = vshrl.u32 %v3025, 7
      %v3027 = vsub.s32 1, %v3026
      %v3028 = vrot.slane %v2986, %v3027
      %v3029 = vlaneseq
      %v3030 = vshrl.u32 %v3029, 7
      %v3031 = vsub.s32 2, %v3030
      %v3032 = vrot.slane %v2986, %v3031
      %v3033 = vlaneseq
      %v3034 = vshrl.u32 %v3033, 7
      %v3035 = vsub.s32 3, %v3034
      %v3036 = vrot.slane %v2986, %v3035
      %v3049 = vmul.f32 %v2973, %v2992
      %v3050 = vmul.f32 %v2974, %v2996
      %v3051 = vmul.f32 %v2975, %v3000
      %v3052 = vmul.f32 %v2976, %v3004
      %v3053 = vmul.f32 %v2977, %v3008
      %v3054 = vmul.f32 %v2978, %v3012
      %v3055 = vmul.f32 %v2979, %v3016
      %v3056 = vmul.f32 %v2980, %v3020
      %v3057 = vmul.f32 %v2981, %v3024
      %v3058 = vmul.f32 %v2982, %v3028
      %v3059 = vmul.f32 %v2983, %v3032
      %v3060 = vmul.f32 %v2984, %v3036
      %3061 = vst [vmem:[#allocation4] sm:$0xff] %v3049
      %3062 = vst [vmem:[#allocation4 + $0x8] sm:$0xff] %v3050
      %3063 = vst [vmem:[#allocation4 + $0x10] sm:$0xff] %v3051
      %3064 = vst [vmem:[#allocation4 + $0x18] sm:$0xff] %v3052
      %3065 = vst [vmem:[#allocation4 + $0x20] sm:$0xff] %v3053
      %3066 = vst [vmem:[#allocation4 + $0x28] sm:$0xff] %v3054
      %3067 = vst [vmem:[#allocation4 + $0x30] sm:$0xff] %v3055
      %3068 = vst [vmem:[#allocation4 + $0x38] sm:$0xff] %v3056
      %3069 = vst [vmem:[#allocation4 + $0x40] sm:$0xff] %v3057
      %3070 = vst [vmem:[#allocation4 + $0x48] sm:$0xff] %v3058
      %3071 = vst [vmem:[#allocation4 + $0x50] sm:$0xff] %v3059
      %3072 = vst.msk [vmem:[#allocation4 + $0x58] sm:$0xff] %vm572, %v3060
      %v3073 = vld [vmem:[%s5] sm:$0xff]
      %v3074 = vld [vmem:[%s5 + $0x8] sm:$0xff]
      %v3075 = vld [vmem:[%s5 + $0x10] sm:$0xff]
      %v3076 = vld [vmem:[%s5 + $0x18] sm:$0xff]
      %v3077 = vld [vmem:[%s5 + $0x20] sm:$0xff]
      %v3078 = vld [vmem:[%s5 + $0x28] sm:$0xff]
      %v3079 = vld [vmem:[%s5 + $0x30] sm:$0xff]
      %v3080 = vld [vmem:[%s5 + $0x38] sm:$0xff]
      %v3081 = vld [vmem:[%s5 + $0x40] sm:$0xff]
      %v3082 = vld [vmem:[%s5 + $0x48] sm:$0xff]
      %v3083 = vld [vmem:[%s5 + $0x50] sm:$0xff]
      %v3084 = vld [vmem:[%s5 + $0x58] sm:$0xff]
      %v3085 = vld [vmem:[%s5 + $0x60] sm:$0xff]
      %v3086 = vld [vmem:[%s5 + $0x68] sm:$0xff]
      %v3087 = vld [vmem:[%s5 + $0x70] sm:$0xff]
      %v3088 = vld [vmem:[%s5 + $0x78] sm:$0xff]
      %v3089 = vld [vmem:[%s5 + $0x80] sm:$0xff]
      %v3090 = vld [vmem:[%s5 + $0x88] sm:$0xff]
      %v3091 = vld [vmem:[%s5 + $0x90] sm:$0xff]
      %v3092 = vld [vmem:[%s5 + $0x98] sm:$0xff]
      %v3093 = vld [vmem:[%s5 + $0xa0] sm:$0xff]
      %v3094 = vld [vmem:[%s5 + $0xa8] sm:$0xff]
      %v3095 = vld [vmem:[%s5 + $0xb0] sm:$0xff]
      %v3096 = vld [vmem:[%s5 + $0xb8] sm:$0xff]
      %v3097 = vld [vmem:[%s5 + $0xc0] sm:$0xff]
      %v3098 = vld [vmem:[%s5 + $0xc8] sm:$0xff]
      %v3099 = vld [vmem:[%s5 + $0xd0] sm:$0xff]
      %v3100 = vld [vmem:[%s5 + $0xd8] sm:$0xff]
      %v3101 = vld [vmem:[%s5 + $0xe0] sm:$0xff]
      %v3102 = vld [vmem:[%s5 + $0xe8] sm:$0xff]
      %v3103 = vld [vmem:[%s5 + $0xf0] sm:$0xff]
      %v3104 = vld [vmem:[%s5 + $0xf8] sm:$0xff]
      %v3105 = vld [vmem:[%s5 + $0x100] sm:$0xff]
      %v3106 = vld [vmem:[%s5 + $0x108] sm:$0xff]
      %v3107 = vld [vmem:[%s5 + $0x110] sm:$0xff]
      %v3108 = vld [vmem:[%s5 + $0x118] sm:$0xff]
      %v3109 = vld [vmem:[%s5 + $0x120] sm:$0xff]
      %v3110 = vld [vmem:[%s5 + $0x128] sm:$0xff]
      %v3111 = vld [vmem:[%s5 + $0x130] sm:$0xff]
      %v3112 = vld [vmem:[%s5 + $0x138] sm:$0xf]
      %v3113 = vld [vmem:[#allocation4] sm:$0xff]
      %v3114 = vld [vmem:[#allocation4 + $0x8] sm:$0xff]
      %v3115 = vld [vmem:[#allocation4 + $0x10] sm:$0xff]
      %vm3116 = vcmask 490496
      %v3118 = vsel %vm3116, %v3115, 0
      %vm3120 = vcmask 1043456
      %v3122 = vsel %vm3120, %v3112, 0
      %3124 = vmatprep.subr.mxu0 0.0
      %3125 = vmatpush1.msra.mxu0 %v3073
      %3126 = vmatprep.subr.mxu0 0.0
      %3127 = vmatpush1.msra.mxu0 %v3074
      %3128 = vmatprep.subr.mxu0 0.0
      %3129 = vmatpush1.msra.mxu0 %v3075
      %3130 = vmatprep.subr.mxu0 0.0
      %3131 = vmatpush1.msra.mxu0 %v3076
      %3132 = vmatprep.subr.mxu0 0.0
      %3133 = vmatpush1.msra.mxu0 %v3077
      %3134 = vmatprep.subr.mxu0 0.0
      %3135 = vmatpush1.msra.mxu0 %v3078
      %3136 = vmatprep.subr.mxu0 0.0
      %3137 = vmatpush1.msra.mxu0 %v3079
      %3138 = vmatprep.subr.mxu0 0.0
      %3139 = vmatpush1.msra.mxu0 %v3080
      %3140 = vmatprep.subr.mxu0 0.0
      %3141 = vmatpush1.msra.mxu0 %v3081
      %3142 = vmatprep.subr.mxu0 0.0
      %3143 = vmatpush1.msra.mxu0 %v3082
      %3144 = vmatprep.subr.mxu0 0.0
      %3145 = vmatpush1.msra.mxu0 %v3083
      %3146 = vmatprep.subr.mxu0 0.0
      %3147 = vmatpush1.msra.mxu0 %v3084
      %3148 = vmatprep.subr.mxu0 0.0
      %3149 = vmatpush1.msra.mxu0 %v3085
      %3150 = vmatprep.subr.mxu0 0.0
      %3151 = vmatpush1.msra.mxu0 %v3086
      %3152 = vmatprep.subr.mxu0 0.0
      %3153 = vmatpush1.msra.mxu0 %v3087
      %3154 = vmatprep.subr.mxu0 0.0
      %3155 = vmatpush1.msra.mxu0 %v3088
      %3156 = vmatprep.subr.mxu0 0.0
      %3157 = vmatpush1.msra.mxu0 %v3089
      %3158 = vmatprep.subr.mxu0 0.0
      %3159 = vmatpush1.msra.mxu0 %v3090
      %3160 = vmatprep.subr.mxu0 0.0
      %3161 = vmatpush1.msra.mxu0 %v3091
      %3162 = vmatprep.subr.mxu0 0.0
      %3163 = vmatpush1.msra.mxu0 %v3092
      %3164 = vmatprep.subr.mxu0 0.0
      %3165 = vmatpush1.msra.mxu0 %v3093
      %3166 = vmatprep.subr.mxu0 0.0
      %3167 = vmatpush1.msra.mxu0 %v3094
      %3168 = vmatprep.subr.mxu0 0.0
      %3169 = vmatpush1.msra.mxu0 %v3095
      %3170 = vmatprep.subr.mxu0 0.0
      %3171 = vmatpush1.msra.mxu0 %v3096
      %3172 = vmatprep.subr.mxu0 0.0
      %3173 = vmatpush1.msra.mxu0 %v3097
      %3174 = vmatprep.subr.mxu0 0.0
      %3175 = vmatpush1.msra.mxu0 %v3098
      %3176 = vmatprep.subr.mxu0 0.0
      %3177 = vmatpush1.msra.mxu0 %v3099
      %3178 = vmatprep.subr.mxu0 0.0
      %3179 = vmatpush1.msra.mxu0 %v3100
      %3180 = vmatprep.subr.mxu0 0.0
      %3181 = vmatpush1.msra.mxu0 %v3101
      %3182 = vmatprep.subr.mxu0 0.0
      %3183 = vmatpush1.msra.mxu0 %v3102
      %3184 = vmatprep.subr.mxu0 0.0
      %3185 = vmatpush1.msra.mxu0 %v3103
      %3186 = vmatprep.subr.mxu0 0.0
      %3187 = vmatpush1.msra.mxu0 %v3104
      %3188 = vmatprep.mubr.f32.mxu0 %v3114
      %3189 = vmatmul.mubr.f32.gmra.mrb[0].mxu0 %v3113
      %v3190 = vpop.f32.mrb[0].mxu0
      %v3191 = vadd.f32 0.0, %v3190
      %v3192 = vpop.f32.mrb[0].mxu0
      %3193 = vdwg.mxu0
      %3194 = vmatprep.subr.mxu0 0.0
      %3195 = vmatpush1.msra.mxu0 %v3105
      %3196 = vmatprep.subr.mxu0 0.0
      %3197 = vmatpush1.msra.mxu0 %v3106
      %3198 = vmatprep.subr.mxu0 0.0
      %3199 = vmatpush1.msra.mxu0 %v3107
      %3200 = vmatprep.subr.mxu0 0.0
      %3201 = vmatpush1.msra.mxu0 %v3108
      %3202 = vmatprep.subr.mxu0 0.0
      %3203 = vmatpush1.msra.mxu0 %v3109
      %3204 = vmatprep.subr.mxu0 0.0
      %3205 = vmatpush1.msra.mxu0 %v3110
      %3206 = vmatprep.subr.mxu0 0.0
      %3207 = vmatpush1.msra.mxu0 %v3111
      %3208 = vmatprep.subr.mxu0 0.0
      %3209 = vmatpush1.msra.mxu0 %v3122
      %3210 = vmatprep.subr.mxu0 0.0
      %3211 = vmatpush1.msra.mxu0 0.0
      %3212 = vmatprep.subr.mxu0 0.0
      %3213 = vmatpush1.msra.mxu0 0.0
      %3214 = vmatprep.subr.mxu0 0.0
      %3215 = vmatpush1.msra.mxu0 0.0
      %3216 = vmatprep.subr.mxu0 0.0
      %3217 = vmatpush1.msra.mxu0 0.0
      %3218 = vmatprep.subr.mxu0 0.0
      %3219 = vmatpush1.msra.mxu0 0.0
      %3220 = vmatprep.subr.mxu0 0.0
      %3221 = vmatpush1.msra.mxu0 0.0
      %3222 = vmatprep.subr.mxu0 0.0
      %3223 = vmatpush1.msra.mxu0 0.0
      %3224 = vmatprep.subr.mxu0 0.0
      %3225 = vmatpush1.msra.mxu0 0.0
      %3226 = vmatprep.subr.mxu0 0.0
      %3227 = vmatpush1.msra.mxu0 0.0
      %3228 = vmatprep.subr.mxu0 0.0
      %3229 = vmatpush1.msra.mxu0 0.0
      %3230 = vmatprep.subr.mxu0 0.0
      %3231 = vmatpush1.msra.mxu0 0.0
      %3232 = vmatprep.subr.mxu0 0.0
      %3233 = vmatpush1.msra.mxu0 0.0
      %3234 = vmatprep.subr.mxu0 0.0
      %3235 = vmatpush1.msra.mxu0 0.0
      %3236 = vmatprep.subr.mxu0 0.0
      %3237 = vmatpush1.msra.mxu0 0.0
      %3238 = vmatprep.subr.mxu0 0.0
      %3239 = vmatpush1.msra.mxu0 0.0
      %3240 = vmatprep.subr.mxu0 0.0
      %3241 = vmatpush1.msra.mxu0 0.0
      %3242 = vmatprep.subr.mxu0 0.0
      %3243 = vmatpush1.msra.mxu0 0.0
      %3244 = vmatprep.subr.mxu0 0.0
      %3245 = vmatpush1.msra.mxu0 0.0
      %3246 = vmatprep.subr.mxu0 0.0
      %3247 = vmatpush1.msra.mxu0 0.0
      %3248 = vmatprep.subr.mxu0 0.0
      %3249 = vmatpush1.msra.mxu0 0.0
      %3250 = vmatprep.subr.mxu0 0.0
      %3251 = vmatpush1.msra.mxu0 0.0
      %3252 = vmatprep.subr.mxu0 0.0
      %3253 = vmatpush1.msra.mxu0 0.0
      %3254 = vmatprep.subr.mxu0 0.0
      %3255 = vmatpush1.msra.mxu0 0.0
      %3256 = vmatprep.subr.mxu0 0.0
      %3257 = vmatpush1.msra.mxu0 0.0
      %3258 = vmatprep.mubr.f32.mxu0 0.0
      %3259 = vmatmul.mubr.f32.gmra.mrb[0].mxu0 %v3118
      %v3260 = vpop.f32.mrb[0].mxu0
      %v3261 = vadd.f32 %v3191, %v3260
      %v3262 = vpop.f32.mrb[0].mxu0
      %3263 = vdwg.mxu0
      %vm3264 = vcmask 818176
      %3265 = vst.msk [vmem:[#allocation5] sm:$0xff] %vm3264, %v3261
      %v3266 = vld [vmem:[#allocation4 + $0x18] sm:$0xff]
      %v3267 = vld [vmem:[#allocation4 + $0x20] sm:$0xff]
      %v3268 = vld [vmem:[#allocation4 + $0x28] sm:$0xff]
      %3272 = vrot.lane.b32.xlu0 %v3266, 112
      %v3273 = vpop.permute.xlu0 %3272
      %3274 = vrot.lane.b32.xlu0 %v3267, 112
      %v3275 = vpop.permute.xlu0 %3274
      %3276 = vrot.lane.b32.xlu0 %v3268, 112
      %v3277 = vpop.permute.xlu0 %3276
      %vm3278 = vcmask 916480
      %v3279 = vsel %vm3278, %v3273, %v3275
      %v3280 = vsel %vm3278, %v3275, %v3277
      %v3283 = vsel %vm3116, %v3277, 0
      %3285 = vmatprep.subr.mxu0 0.0
      %3286 = vmatpush1.msra.mxu0 %v3073
      %3287 = vmatprep.subr.mxu0 0.0
      %3288 = vmatpush1.msra.mxu0 %v3074
      %3289 = vmatprep.subr.mxu0 0.0
      %3290 = vmatpush1.msra.mxu0 %v3075
      %3291 = vmatprep.subr.mxu0 0.0
      %3292 = vmatpush1.msra.mxu0 %v3076
      %3293 = vmatprep.subr.mxu0 0.0
      %3294 = vmatpush1.msra.mxu0 %v3077
      %3295 = vmatprep.subr.mxu0 0.0
      %3296 = vmatpush1.msra.mxu0 %v3078
      %3297 = vmatprep.subr.mxu0 0.0
      %3298 = vmatpush1.msra.mxu0 %v3079
      %3299 = vmatprep.subr.mxu0 0.0
      %3300 = vmatpush1.msra.mxu0 %v3080
      %3301 = vmatprep.subr.mxu0 0.0
      %3302 = vmatpush1.msra.mxu0 %v3081
      %3303 = vmatprep.subr.mxu0 0.0
      %3304 = vmatpush1.msra.mxu0 %v3082
      %3305 = vmatprep.subr.mxu0 0.0
      %3306 = vmatpush1.msra.mxu0 %v3083
      %3307 = vmatprep.subr.mxu0 0.0
      %3308 = vmatpush1.msra.mxu0 %v3084
      %3309 = vmatprep.subr.mxu0 0.0
      %3310 = vmatpush1.msra.mxu0 %v3085
      %3311 = vmatprep.subr.mxu0 0.0
      %3312 = vmatpush1.msra.mxu0 %v3086
      %3313 = vmatprep.subr.mxu0 0.0
      %3314 = vmatpush1.msra.mxu0 %v3087
      %3315 = vmatprep.subr.mxu0 0.0
      %3316 = vmatpush1.msra.mxu0 %v3088
      %3317 = vmatprep.subr.mxu0 0.0
      %3318 = vmatpush1.msra.mxu0 %v3089
      %3319 = vmatprep.subr.mxu0 0.0
      %3320 = vmatpush1.msra.mxu0 %v3090
      %3321 = vmatprep.subr.mxu0 0.0
      %3322 = vmatpush1.msra.mxu0 %v3091
      %3323 = vmatprep.subr.mxu0 0.0
      %3324 = vmatpush1.msra.mxu0 %v3092
      %3325 = vmatprep.subr.mxu0 0.0
      %3326 = vmatpush1.msra.mxu0 %v3093
      %3327 = vmatprep.subr.mxu0 0.0
      %3328 = vmatpush1.msra.mxu0 %v3094
      %3329 = vmatprep.subr.mxu0 0.0
      %3330 = vmatpush1.msra.mxu0 %v3095
      %3331 = vmatprep.subr.mxu0 0.0
      %3332 = vmatpush1.msra.mxu0 %v3096
      %3333 = vmatprep.subr.mxu0 0.0
      %3334 = vmatpush1.msra.mxu0 %v3097
      %3335 = vmatprep.subr.mxu0 0.0
      %3336 = vmatpush1.msra.mxu0 %v3098
      %3337 = vmatprep.subr.mxu0 0.0
      %3338 = vmatpush1.msra.mxu0 %v3099
      %3339 = vmatprep.subr.mxu0 0.0
      %3340 = vmatpush1.msra.mxu0 %v3100
      %3341 = vmatprep.subr.mxu0 0.0
      %3342 = vmatpush1.msra.mxu0 %v3101
      %3343 = vmatprep.subr.mxu0 0.0
      %3344 = vmatpush1.msra.mxu0 %v3102
      %3345 = vmatprep.subr.mxu0 0.0
      %3346 = vmatpush1.msra.mxu0 %v3103
      %3347 = vmatprep.subr.mxu0 0.0
      %3348 = vmatpush1.msra.mxu0 %v3104
      %3349 = vmatprep.mubr.f32.mxu0 %v3280
      %3350 = vmatmul.mubr.f32.gmra.mrb[0].mxu0 %v3279
      %v3351 = vpop.f32.mrb[0].mxu0
      %v3352 = vadd.f32 0.0, %v3351
      %v3353 = vpop.f32.mrb[0].mxu0
      %3354 = vdwg.mxu0
      %3355 = vmatprep.subr.mxu0 0.0
      %3356 = vmatpush1.msra.mxu0 %v3105
      %3357 = vmatprep.subr.mxu0 0.0
      %3358 = vmatpush1.msra.mxu0 %v3106
      %3359 = vmatprep.subr.mxu0 0.0
      %3360 = vmatpush1.msra.mxu0 %v3107
      %3361 = vmatprep.subr.mxu0 0.0
      %3362 = vmatpush1.msra.mxu0 %v3108
      %3363 = vmatprep.subr.mxu0 0.0
      %3364 = vmatpush1.msra.mxu0 %v3109
      %3365 = vmatprep.subr.mxu0 0.0
      %3366 = vmatpush1.msra.mxu0 %v3110
      %3367 = vmatprep.subr.mxu0 0.0
      %3368 = vmatpush1.msra.mxu0 %v3111
      %3369 = vmatprep.subr.mxu0 0.0
      %3370 = vmatpush1.msra.mxu0 %v3122
      %3371 = vmatprep.subr.mxu0 0.0
      %3372 = vmatpush1.msra.mxu0 0.0
      %3373 = vmatprep.subr.mxu0 0.0
      %3374 = vmatpush1.msra.mxu0 0.0
      %3375 = vmatprep.subr.mxu0 0.0
      %3376 = vmatpush1.msra.mxu0 0.0
      %3377 = vmatprep.subr.mxu0 0.0
      %3378 = vmatpush1.msra.mxu0 0.0
      %3379 = vmatprep.subr.mxu0 0.0
      %3380 = vmatpush1.msra.mxu0 0.0
      %3381 = vmatprep.subr.mxu0 0.0
      %3382 = vmatpush1.msra.mxu0 0.0
      %3383 = vmatprep.subr.mxu0 0.0
      %3384 = vmatpush1.msra.mxu0 0.0
      %3385 = vmatprep.subr.mxu0 0.0
      %3386 = vmatpush1.msra.mxu0 0.0
      %3387 = vmatprep.subr.mxu0 0.0
      %3388 = vmatpush1.msra.mxu0 0.0
      %3389 = vmatprep.subr.mxu0 0.0
      %3390 = vmatpush1.msra.mxu0 0.0
      %3391 = vmatprep.subr.mxu0 0.0
      %3392 = vmatpush1.msra.mxu0 0.0
      %3393 = vmatprep.subr.mxu0 0.0
      %3394 = vmatpush1.msra.mxu0 0.0
      %3395 = vmatprep.subr.mxu0 0.0
      %3396 = vmatpush1.msra.mxu0 0.0
      %3397 = vmatprep.subr.mxu0 0.0
      %3398 = vmatpush1.msra.mxu0 0.0
      %3399 = vmatprep.subr.mxu0 0.0
      %3400 = vmatpush1.msra.mxu0 0.0
      %3401 = vmatprep.subr.mxu0 0.0
      %3402 = vmatpush1.msra.mxu0 0.0
      %3403 = vmatprep.subr.mxu0 0.0
      %3404 = vmatpush1.msra.mxu0 0.0
      %3405 = vmatprep.subr.mxu0 0.0
      %3406 = vmatpush1.msra.mxu0 0.0
      %3407 = vmatprep.subr.mxu0 0.0
      %3408 = vmatpush1.msra.mxu0 0.0
      %3409 = vmatprep.subr.mxu0 0.0
      %3410 = vmatpush1.msra.mxu0 0.0
      %3411 = vmatprep.subr.mxu0 0.0
      %3412 = vmatpush1.msra.mxu0 0.0
      %3413 = vmatprep.subr.mxu0 0.0
      %3414 = vmatpush1.msra.mxu0 0.0
      %3415 = vmatprep.subr.mxu0 0.0
      %3416 = vmatpush1.msra.mxu0 0.0
      %3417 = vmatprep.subr.mxu0 0.0
      %3418 = vmatpush1.msra.mxu0 0.0
      %3419 = vmatprep.mubr.f32.mxu0 0.0
      %3420 = vmatmul.mubr.f32.gmra.mrb[0].mxu0 %v3283
      %v3421 = vpop.f32.mrb[0].mxu0
      %v3422 = vadd.f32 %v3352, %v3421
      %v3423 = vpop.f32.mrb[0].mxu0
      %3424 = vdwg.mxu0
      %3426 = vrot.lane.b32.xlu0 %v3422, 100
      %v3427 = vpop.permute.xlu0 %3426
      %vm3429 = vcmask 1048352
      %3430 = vst.msk [vmem:[#allocation5] sm:$0xff] %vm3429, %v3427
      %3431 = vst.msk [vmem:[#allocation5 + $0x8] sm:$0xff] %vm1190, %v3427
      %v3432 = vld [vmem:[#allocation4 + $0x30] sm:$0xff]
      %v3433 = vld [vmem:[#allocation4 + $0x38] sm:$0xff]
      %v3434 = vld [vmem:[#allocation4 + $0x40] sm:$0xff]
      %3438 = vrot.lane.b32.xlu0 %v3432, 96
      %v3439 = vpop.permute.xlu0 %3438
      %3440 = vrot.lane.b32.xlu0 %v3433, 96
      %v3441 = vpop.permute.xlu0 %3440
      %3442 = vrot.lane.b32.xlu0 %v3434, 96
      %v3443 = vpop.permute.xlu0 %3442
      %vm3444 = vcmask 785408
      %v3445 = vsel %vm3444, %v3439, %v3441
      %v3446 = vsel %vm3444, %v3441, %v3443
      %v3449 = vsel %vm3116, %v3443, 0
      %3451 = vmatprep.subr.mxu0 0.0
      %3452 = vmatpush1.msra.mxu0 %v3073
      %3453 = vmatprep.subr.mxu0 0.0
      %3454 = vmatpush1.msra.mxu0 %v3074
      %3455 = vmatprep.subr.mxu0 0.0
      %3456 = vmatpush1.msra.mxu0 %v3075
      %3457 = vmatprep.subr.mxu0 0.0
      %3458 = vmatpush1.msra.mxu0 %v3076
      %3459 = vmatprep.subr.mxu0 0.0
      %3460 = vmatpush1.msra.mxu0 %v3077
      %3461 = vmatprep.subr.mxu0 0.0
      %3462 = vmatpush1.msra.mxu0 %v3078
      %3463 = vmatprep.subr.mxu0 0.0
      %3464 = vmatpush1.msra.mxu0 %v3079
      %3465 = vmatprep.subr.mxu0 0.0
      %3466 = vmatpush1.msra.mxu0 %v3080
      %3467 = vmatprep.subr.mxu0 0.0
      %3468 = vmatpush1.msra.mxu0 %v3081
      %3469 = vmatprep.subr.mxu0 0.0
      %3470 = vmatpush1.msra.mxu0 %v3082
      %3471 = vmatprep.subr.mxu0 0.0
      %3472 = vmatpush1.msra.mxu0 %v3083
      %3473 = vmatprep.subr.mxu0 0.0
      %3474 = vmatpush1.msra.mxu0 %v3084
      %3475 = vmatprep.subr.mxu0 0.0
      %3476 = vmatpush1.msra.mxu0 %v3085
      %3477 = vmatprep.subr.mxu0 0.0
      %3478 = vmatpush1.msra.mxu0 %v3086
      %3479 = vmatprep.subr.mxu0 0.0
      %3480 = vmatpush1.msra.mxu0 %v3087
      %3481 = vmatprep.subr.mxu0 0.0
      %3482 = vmatpush1.msra.mxu0 %v3088
      %3483 = vmatprep.subr.mxu0 0.0
      %3484 = vmatpush1.msra.mxu0 %v3089
      %3485 = vmatprep.subr.mxu0 0.0
      %3486 = vmatpush1.msra.mxu0 %v3090
      %3487 = vmatprep.subr.mxu0 0.0
      %3488 = vmatpush1.msra.mxu0 %v3091
      %3489 = vmatprep.subr.mxu0 0.0
      %3490 = vmatpush1.msra.mxu0 %v3092
      %3491 = vmatprep.subr.mxu0 0.0
      %3492 = vmatpush1.msra.mxu0 %v3093
      %3493 = vmatprep.subr.mxu0 0.0
      %3494 = vmatpush1.msra.mxu0 %v3094
      %3495 = vmatprep.subr.mxu0 0.0
      %3496 = vmatpush1.msra.mxu0 %v3095
      %3497 = vmatprep.subr.mxu0 0.0
      %3498 = vmatpush1.msra.mxu0 %v3096
      %3499 = vmatprep.subr.mxu0 0.0
      %3500 = vmatpush1.msra.mxu0 %v3097
      %3501 = vmatprep.subr.mxu0 0.0
      %3502 = vmatpush1.msra.mxu0 %v3098
      %3503 = vmatprep.subr.mxu0 0.0
      %3504 = vmatpush1.msra.mxu0 %v3099
      %3505 = vmatprep.subr.mxu0 0.0
      %3506 = vmatpush1.msra.mxu0 %v3100
      %3507 = vmatprep.subr.mxu0 0.0
      %3508 = vmatpush1.msra.mxu0 %v3101
      %3509 = vmatprep.subr.mxu0 0.0
      %3510 = vmatpush1.msra.mxu0 %v3102
      %3511 = vmatprep.subr.mxu0 0.0
      %3512 = vmatpush1.msra.mxu0 %v3103
      %3513 = vmatprep.subr.mxu0 0.0
      %3514 = vmatpush1.msra.mxu0 %v3104
      %3515 = vmatprep.mubr.f32.mxu0 %v3446
      %3516 = vmatmul.mubr.f32.gmra.mrb[0].mxu0 %v3445
      %v3517 = vpop.f32.mrb[0].mxu0
      %v3518 = vadd.f32 0.0, %v3517
      %v3519 = vpop.f32.mrb[0].mxu0
      %3520 = vdwg.mxu0
      %3521 = vmatprep.subr.mxu0 0.0
      %3522 = vmatpush1.msra.mxu0 %v3105
      %3523 = vmatprep.subr.mxu0 0.0
      %3524 = vmatpush1.msra.mxu0 %v3106
      %3525 = vmatprep.subr.mxu0 0.0
      %3526 = vmatpush1.msra.mxu0 %v3107
      %3527 = vmatprep.subr.mxu0 0.0
      %3528 = vmatpush1.msra.mxu0 %v3108
      %3529 = vmatprep.subr.mxu0 0.0
      %3530 = vmatpush1.msra.mxu0 %v3109
      %3531 = vmatprep.subr.mxu0 0.0
      %3532 = vmatpush1.msra.mxu0 %v3110
      %3533 = vmatprep.subr.mxu0 0.0
      %3534 = vmatpush1.msra.mxu0 %v3111
      %3535 = vmatprep.subr.mxu0 0.0
      %3536 = vmatpush1.msra.mxu0 %v3122
      %3537 = vmatprep.subr.mxu0 0.0
      %3538 = vmatpush1.msra.mxu0 0.0
      %3539 = vmatprep.subr.mxu0 0.0
      %3540 = vmatpush1.msra.mxu0 0.0
      %3541 = vmatprep.subr.mxu0 0.0
      %3542 = vmatpush1.msra.mxu0 0.0
      %3543 = vmatprep.subr.mxu0 0.0
      %3544 = vmatpush1.msra.mxu0 0.0
      %3545 = vmatprep.subr.mxu0 0.0
      %3546 = vmatpush1.msra.mxu0 0.0
      %3547 = vmatprep.subr.mxu0 0.0
      %3548 = vmatpush1.msra.mxu0 0.0
      %3549 = vmatprep.subr.mxu0 0.0
      %3550 = vmatpush1.msra.mxu0 0.0
      %3551 = vmatprep.subr.mxu0 0.0
      %3552 = vmatpush1.msra.mxu0 0.0
      %3553 = vmatprep.subr.mxu0 0.0
      %3554 = vmatpush1.msra.mxu0 0.0
      %3555 = vmatprep.subr.mxu0 0.0
      %3556 = vmatpush1.msra.mxu0 0.0
      %3557 = vmatprep.subr.mxu0 0.0
      %3558 = vmatpush1.msra.mxu0 0.0
      %3559 = vmatprep.subr.mxu0 0.0
      %3560 = vmatpush1.msra.mxu0 0.0
      %3561 = vmatprep.subr.mxu0 0.0
      %3562 = vmatpush1.msra.mxu0 0.0
      %3563 = vmatprep.subr.mxu0 0.0
      %3564 = vmatpush1.msra.mxu0 0.0
      %3565 = vmatprep.subr.mxu0 0.0
      %3566 = vmatpush1.msra.mxu0 0.0
      %3567 = vmatprep.subr.mxu0 0.0
      %3568 = vmatpush1.msra.mxu0 0.0
      %3569 = vmatprep.subr.mxu0 0.0
      %3570 = vmatpush1.msra.mxu0 0.0
      %3571 = vmatprep.subr.mxu0 0.0
      %3572 = vmatpush1.msra.mxu0 0.0
      %3573 = vmatprep.subr.mxu0 0.0
      %3574 = vmatpush1.msra.mxu0 0.0
      %3575 = vmatprep.subr.mxu0 0.0
      %3576 = vmatpush1.msra.mxu0 0.0
      %3577 = vmatprep.subr.mxu0 0.0
      %3578 = vmatpush1.msra.mxu0 0.0
      %3579 = vmatprep.subr.mxu0 0.0
      %3580 = vmatpush1.msra.mxu0 0.0
      %3581 = vmatprep.subr.mxu0 0.0
      %3582 = vmatpush1.msra.mxu0 0.0
      %3583 = vmatprep.subr.mxu0 0.0
      %3584 = vmatpush1.msra.mxu0 0.0
      %3585 = vmatprep.mubr.f32.mxu0 0.0
      %3586 = vmatmul.mubr.f32.gmra.mrb[0].mxu0 %v3449
      %v3587 = vpop.f32.mrb[0].mxu0
      %v3588 = vadd.f32 %v3518, %v3587
      %v3589 = vpop.f32.mrb[0].mxu0
      %3590 = vdwg.mxu0
      %3592 = vrot.lane.b32.xlu0 %v3588, 72
      %v3593 = vpop.permute.xlu0 %3592
      %vm3595 = vcmask 1048128
      %3596 = vst.msk [vmem:[#allocation5 + $0x8] sm:$0xff] %vm3595, %v3593
      %vm3597 = vcmask 359424
      %3598 = vst.msk [vmem:[#allocation5 + $0x10] sm:$0xff] %vm3597, %v3593
      %v3599 = vld [vmem:[#allocation4 + $0x48] sm:$0xff]
      %v3600 = vld [vmem:[#allocation4 + $0x50] sm:$0xff]
      %v3601 = vld [vmem:[#allocation4 + $0x58] sm:$0xff]
      %3605 = vrot.lane.b32.xlu0 %v3599, 80
      %v3606 = vpop.permute.xlu0 %3605
      %3607 = vrot.lane.b32.xlu0 %v3600, 80
      %v3608 = vpop.permute.xlu0 %3607
      %3609 = vrot.lane.b32.xlu0 %v3601, 80
      %v3610 = vpop.permute.xlu0 %3609
      %vm3611 = vcmask 654336
      %v3612 = vsel %vm3611, %v3606, %v3608
      %v3613 = vsel %vm3611, %v3608, %v3610
      %v3616 = vsel %vm3116, %v3610, 0
      %3618 = vmatprep.subr.mxu0 0.0
      %3619 = vmatpush1.msra.mxu0 %v3073
      %3620 = vmatprep.subr.mxu0 0.0
      %3621 = vmatpush1.msra.mxu0 %v3074
      %3622 = vmatprep.subr.mxu0 0.0
      %3623 = vmatpush1.msra.mxu0 %v3075
      %3624 = vmatprep.subr.mxu0 0.0
      %3625 = vmatpush1.msra.mxu0 %v3076
      %3626 = vmatprep.subr.mxu0 0.0
      %3627 = vmatpush1.msra.mxu0 %v3077
      %3628 = vmatprep.subr.mxu0 0.0
      %3629 = vmatpush1.msra.mxu0 %v3078
      %3630 = vmatprep.subr.mxu0 0.0
      %3631 = vmatpush1.msra.mxu0 %v3079
      %3632 = vmatprep.subr.mxu0 0.0
      %3633 = vmatpush1.msra.mxu0 %v3080
      %3634 = vmatprep.subr.mxu0 0.0
      %3635 = vmatpush1.msra.mxu0 %v3081
      %3636 = vmatprep.subr.mxu0 0.0
      %3637 = vmatpush1.msra.mxu0 %v3082
      %3638 = vmatprep.subr.mxu0 0.0
      %3639 = vmatpush1.msra.mxu0 %v3083
      %3640 = vmatprep.subr.mxu0 0.0
      %3641 = vmatpush1.msra.mxu0 %v3084
      %3642 = vmatprep.subr.mxu0 0.0
      %3643 = vmatpush1.msra.mxu0 %v3085
      %3644 = vmatprep.subr.mxu0 0.0
      %3645 = vmatpush1.msra.mxu0 %v3086
      %3646 = vmatprep.subr.mxu0 0.0
      %3647 = vmatpush1.msra.mxu0 %v3087
      %3648 = vmatprep.subr.mxu0 0.0
      %3649 = vmatpush1.msra.mxu0 %v3088
      %3650 = vmatprep.subr.mxu0 0.0
      %3651 = vmatpush1.msra.mxu0 %v3089
      %3652 = vmatprep.subr.mxu0 0.0
      %3653 = vmatpush1.msra.mxu0 %v3090
      %3654 = vmatprep.subr.mxu0 0.0
      %3655 = vmatpush1.msra.mxu0 %v3091
      %3656 = vmatprep.subr.mxu0 0.0
      %3657 = vmatpush1.msra.mxu0 %v3092
      %3658 = vmatprep.subr.mxu0 0.0
      %3659 = vmatpush1.msra.mxu0 %v3093
      %3660 = vmatprep.subr.mxu0 0.0
      %3661 = vmatpush1.msra.mxu0 %v3094
      %3662 = vmatprep.subr.mxu0 0.0
      %3663 = vmatpush1.msra.mxu0 %v3095
      %3664 = vmatprep.subr.mxu0 0.0
      %3665 = vmatpush1.msra.mxu0 %v3096
      %3666 = vmatprep.subr.mxu0 0.0
      %3667 = vmatpush1.msra.mxu0 %v3097
      %3668 = vmatprep.subr.mxu0 0.0
      %3669 = vmatpush1.msra.mxu0 %v3098
      %3670 = vmatprep.subr.mxu0 0.0
      %3671 = vmatpush1.msra.mxu0 %v3099
      %3672 = vmatprep.subr.mxu0 0.0
      %3673 = vmatpush1.msra.mxu0 %v3100
      %3674 = vmatprep.subr.mxu0 0.0
      %3675 = vmatpush1.msra.mxu0 %v3101
      %3676 = vmatprep.subr.mxu0 0.0
      %3677 = vmatpush1.msra.mxu0 %v3102
      %3678 = vmatprep.subr.mxu0 0.0
      %3679 = vmatpush1.msra.mxu0 %v3103
      %3680 = vmatprep.subr.mxu0 0.0
      %3681 = vmatpush1.msra.mxu0 %v3104
      %3682 = vmatprep.mubr.f32.mxu0 %v3613
      %3683 = vmatmul.mubr.f32.gmra.mrb[0].mxu0 %v3612
      %v3684 = vpop.f32.mrb[0].mxu0
      %v3685 = vadd.f32 0.0, %v3684
      %v3686 = vpop.f32.mrb[0].mxu0
      %3687 = vdwg.mxu0
      %3688 = vmatprep.subr.mxu0 0.0
      %3689 = vmatpush1.msra.mxu0 %v3105
      %3690 = vmatprep.subr.mxu0 0.0
      %3691 = vmatpush1.msra.mxu0 %v3106
      %3692 = vmatprep.subr.mxu0 0.0
      %3693 = vmatpush1.msra.mxu0 %v3107
      %3694 = vmatprep.subr.mxu0 0.0
      %3695 = vmatpush1.msra.mxu0 %v3108
      %3696 = vmatprep.subr.mxu0 0.0
      %3697 = vmatpush1.msra.mxu0 %v3109
      %3698 = vmatprep.subr.mxu0 0.0
      %3699 = vmatpush1.msra.mxu0 %v3110
      %3700 = vmatprep.subr.mxu0 0.0
      %3701 = vmatpush1.msra.mxu0 %v3111
      %3702 = vmatprep.subr.mxu0 0.0
      %3703 = vmatpush1.msra.mxu0 %v3122
      %3704 = vmatprep.subr.mxu0 0.0
      %3705 = vmatpush1.msra.mxu0 0.0
      %3706 = vmatprep.subr.mxu0 0.0
      %3707 = vmatpush1.msra.mxu0 0.0
      %3708 = vmatprep.subr.mxu0 0.0
      %3709 = vmatpush1.msra.mxu0 0.0
      %3710 = vmatprep.subr.mxu0 0.0
      %3711 = vmatpush1.msra.mxu0 0.0
      %3712 = vmatprep.subr.mxu0 0.0
      %3713 = vmatpush1.msra.mxu0 0.0
      %3714 = vmatprep.subr.mxu0 0.0
      %3715 = vmatpush1.msra.mxu0 0.0
      %3716 = vmatprep.subr.mxu0 0.0
      %3717 = vmatpush1.msra.mxu0 0.0
      %3718 = vmatprep.subr.mxu0 0.0
      %3719 = vmatpush1.msra.mxu0 0.0
      %3720 = vmatprep.subr.mxu0 0.0
      %3721 = vmatpush1.msra.mxu0 0.0
      %3722 = vmatprep.subr.mxu0 0.0
      %3723 = vmatpush1.msra.mxu0 0.0
      %3724 = vmatprep.subr.mxu0 0.0
      %3725 = vmatpush1.msra.mxu0 0.0
      %3726 = vmatprep.subr.mxu0 0.0
      %3727 = vmatpush1.msra.mxu0 0.0
      %3728 = vmatprep.subr.mxu0 0.0
      %3729 = vmatpush1.msra.mxu0 0.0
      %3730 = vmatprep.subr.mxu0 0.0
      %3731 = vmatpush1.msra.mxu0 0.0
      %3732 = vmatprep.subr.mxu0 0.0
      %3733 = vmatpush1.msra.mxu0 0.0
      %3734 = vmatprep.subr.mxu0 0.0
      %3735 = vmatpush1.msra.mxu0 0.0
      %3736 = vmatprep.subr.mxu0 0.0
      %3737 = vmatpush1.msra.mxu0 0.0
      %3738 = vmatprep.subr.mxu0 0.0
      %3739 = vmatpush1.msra.mxu0 0.0
      %3740 = vmatprep.subr.mxu0 0.0
      %3741 = vmatpush1.msra.mxu0 0.0
      %3742 = vmatprep.subr.mxu0 0.0
      %3743 = vmatpush1.msra.mxu0 0.0
      %3744 = vmatprep.subr.mxu0 0.0
      %3745 = vmatpush1.msra.mxu0 0.0
      %3746 = vmatprep.subr.mxu0 0.0
      %3747 = vmatpush1.msra.mxu0 0.0
      %3748 = vmatprep.subr.mxu0 0.0
      %3749 = vmatpush1.msra.mxu0 0.0
      %3750 = vmatprep.subr.mxu0 0.0
      %3751 = vmatpush1.msra.mxu0 0.0
      %3752 = vmatprep.mubr.f32.mxu0 0.0
      %3753 = vmatmul.mubr.f32.gmra.mrb[0].mxu0 %v3616
      %v3754 = vpop.f32.mrb[0].mxu0
      %v3755 = vadd.f32 %v3685, %v3754
      %v3756 = vpop.f32.mrb[0].mxu0
      %3757 = vdwg.mxu0
      %3759 = vrot.lane.b32.xlu0 %v3755, 44
      %v3760 = vpop.permute.xlu0 %3759
      %vm3762 = vcmask 1047904
      %3763 = vst.msk [vmem:[#allocation5 + $0x10] sm:$0xff] %vm3762, %v3760
      %vm3764 = vcmask 130048
      %3765 = vst.msk [vmem:[#allocation5 + $0x18] sm:$0xff] %vm3764, %v3760
      %v3766 = vld [vmem:[#allocation5] sm:$0xff]
      %v3767 = vld [vmem:[#allocation5 + $0x8] sm:$0xff]
      %v3768 = vld [vmem:[#allocation5 + $0x10] sm:$0xff]
      %3769 = vst [vmem:[#allocation2] sm:$0xff] %v3766
      %3770 = vst [vmem:[#allocation2 + $0x8] sm:$0xff] %v3767
      %vm3771 = vcmask 998400
      %3772 = vst.msk [vmem:[#allocation2 + $0x10] sm:$0xff] %vm3771, %v3768
      %v3773 = vld [vmem:[#allocation5] sm:$0xff]
      %v3774 = vld [vmem:[#allocation5 + $0x8] sm:$0xff]
      %v3775 = vld [vmem:[#allocation5 + $0x10] sm:$0xff]
      %3779 = vrot.lane.b32.xlu0 %v3773, 127
      %v3780 = vpop.permute.xlu0 %3779
      %3781 = vrot.lane.b32.xlu0 %v3774, 127
      %v3782 = vpop.permute.xlu0 %3781
      %3783 = vrot.lane.b32.xlu0 %v3775, 127
      %v3784 = vpop.permute.xlu0 %3783
      %v3785 = vsel %vm390, %v3780, %v3782
      %v3786 = vsel %vm390, %v3782, %v3784
      %3790 = vst [vmem:[#allocation2 + $0x68] sm:$0xff] %v3785
      %3791 = vst [vmem:[#allocation2 + $0x70] sm:$0xff] %v3786
      %3792 = vst.msk [vmem:[#allocation2 + $0x78] sm:$0xff] %vm3771, %v3784
      %v3793 = vld [vmem:[#allocation5] sm:$0xff]
      %v3794 = vld [vmem:[#allocation5 + $0x8] sm:$0xff]
      %v3795 = vld [vmem:[#allocation5 + $0x10] sm:$0xff]
      %3799 = vrot.lane.b32.xlu0 %v3793, 126
      %v3800 = vpop.permute.xlu0 %3799
      %3801 = vrot.lane.b32.xlu0 %v3794, 126
      %v3802 = vpop.permute.xlu0 %3801
      %3803 = vrot.lane.b32.xlu0 %v3795, 126
      %v3804 = vpop.permute.xlu0 %3803
      %v3805 = vsel %vm481, %v3800, %v3802
      %v3806 = vsel %vm481, %v3802, %v3804
      %3810 = vst [vmem:[#allocation2 + $0xd0] sm:$0xff] %v3805
      %3811 = vst [vmem:[#allocation2 + $0xd8] sm:$0xff] %v3806
      %3812 = vst.msk [vmem:[#allocation2 + $0xe0] sm:$0xff] %vm3771, %v3804
      %v3813 = vld [vmem:[#allocation5] sm:$0xff]
      %v3814 = vld [vmem:[#allocation5 + $0x8] sm:$0xff]
      %v3815 = vld [vmem:[#allocation5 + $0x10] sm:$0xff]
      %v3816 = vld [vmem:[#allocation5 + $0x18] sm:$0xff]
      %3821 = vrot.lane.b32.xlu0 %v3813, 118
      %v3822 = vpop.permute.xlu0 %3821
      %3823 = vrot.lane.b32.xlu0 %v3814, 118
      %v3824 = vpop.permute.xlu0 %3823
      %3825 = vrot.lane.b32.xlu0 %v3815, 118
      %v3826 = vpop.permute.xlu0 %3825
      %3827 = vrot.lane.b32.xlu0 %v3816, 118
      %v3828 = vpop.permute.xlu0 %3827
      %vm3829 = vcmask 965632
      %v3830 = vsel %vm3829, %v3822, %v3824
      %v3831 = vsel %vm3829, %v3824, %v3826
      %v3832 = vsel %vm3829, %v3826, %v3828
      %3836 = vst [vmem:[#allocation2 + $0x138] sm:$0xff] %v3830
      %3837 = vst [vmem:[#allocation2 + $0x140] sm:$0xff] %v3831
      %3838 = vst.msk [vmem:[#allocation2 + $0x148] sm:$0xff] %vm3771, %v3832
      %v3839 = vld [vmem:[#allocation5] sm:$0xff]
      %v3840 = vld [vmem:[#allocation5 + $0x8] sm:$0xff]
      %v3841 = vld [vmem:[#allocation5 + $0x10] sm:$0xff]
      %v3842 = vld [vmem:[#allocation5 + $0x18] sm:$0xff]
      %3847 = vrot.lane.b32.xlu0 %v3839, 117
      %v3848 = vpop.permute.xlu0 %3847
      %3849 = vrot.lane.b32.xlu0 %v3840, 117
      %v3850 = vpop.permute.xlu0 %3849
      %3851 = vrot.lane.b32.xlu0 %v3841, 117
      %v3852 = vpop.permute.xlu0 %3851
      %3853 = vrot.lane.b32.xlu0 %v3842, 117
      %v3854 = vpop.permute.xlu0 %3853
      %vm3855 = vcmask 957440
      %v3856 = vsel %vm3855, %v3848, %v3850
      %v3857 = vsel %vm3855, %v3850, %v3852
      %v3858 = vsel %vm3855, %v3852, %v3854
      %3862 = vst [vmem:[#allocation2 + $0x1a0] sm:$0xff] %v3856
      %3863 = vst [vmem:[#allocation2 + $0x1a8] sm:$0xff] %v3857
      %3864 = vst.msk [vmem:[#allocation2 + $0x1b0] sm:$0xff] %vm3771, %v3858
      %v3865 = vld [vmem:[#allocation5] sm:$0xff]
      %v3866 = vld [vmem:[#allocation5 + $0x8] sm:$0xff]
      %v3867 = vld [vmem:[#allocation5 + $0x10] sm:$0xff]
      %v3868 = vld [vmem:[#allocation5 + $0x18] sm:$0xff]
      %3873 = vrot.lane.b32.xlu0 %v3865, 116
      %v3874 = vpop.permute.xlu0 %3873
      %3875 = vrot.lane.b32.xlu0 %v3866, 116
      %v3876 = vpop.permute.xlu0 %3875
      %3877 = vrot.lane.b32.xlu0 %v3867, 116
      %v3878 = vpop.permute.xlu0 %3877
      %3879 = vrot.lane.b32.xlu0 %v3868, 116
      %v3880 = vpop.permute.xlu0 %3879
      %vm3881 = vcmask 949248
      %v3882 = vsel %vm3881, %v3874, %v3876
      %v3883 = vsel %vm3881, %v3876, %v3878
      %v3884 = vsel %vm3881, %v3878, %v3880
      %3888 = vst [vmem:[#allocation2 + $0x208] sm:$0xff] %v3882
      %3889 = vst [vmem:[#allocation2 + $0x210] sm:$0xff] %v3883
      %3890 = vst.msk [vmem:[#allocation2 + $0x218] sm:$0xff] %vm3771, %v3884
      %v3891 = vld [vmem:[#allocation5] sm:$0xff]
      %v3892 = vld [vmem:[#allocation5 + $0x8] sm:$0xff]
      %v3893 = vld [vmem:[#allocation5 + $0x10] sm:$0xff]
      %v3894 = vld [vmem:[#allocation5 + $0x18] sm:$0xff]
      %3899 = vrot.lane.b32.xlu0 %v3891, 108
      %v3900 = vpop.permute.xlu0 %3899
      %3901 = vrot.lane.b32.xlu0 %v3892, 108
      %v3902 = vpop.permute.xlu0 %3901
      %3903 = vrot.lane.b32.xlu0 %v3893, 108
      %v3904 = vpop.permute.xlu0 %3903
      %3905 = vrot.lane.b32.xlu0 %v3894, 108
      %v3906 = vpop.permute.xlu0 %3905
      %v3907 = vsel %vm572, %v3900, %v3902
      %v3908 = vsel %vm572, %v3902, %v3904
      %v3909 = vsel %vm572, %v3904, %v3906
      %3913 = vst [vmem:[#allocation2 + $0x270] sm:$0xff] %v3907
      %3914 = vst [vmem:[#allocation2 + $0x278] sm:$0xff] %v3908
      %3915 = vst.msk [vmem:[#allocation2 + $0x280] sm:$0xff] %vm3771, %v3909
      %v3916 = vld [vmem:[#allocation5] sm:$0xff]
      %v3917 = vld [vmem:[#allocation5 + $0x8] sm:$0xff]
      %v3918 = vld [vmem:[#allocation5 + $0x10] sm:$0xff]
      %v3919 = vld [vmem:[#allocation5 + $0x18] sm:$0xff]
      %3924 = vrot.lane.b32.xlu0 %v3916, 107
      %v3925 = vpop.permute.xlu0 %3924
      %3926 = vrot.lane.b32.xlu0 %v3917, 107
      %v3927 = vpop.permute.xlu0 %3926
      %3928 = vrot.lane.b32.xlu0 %v3918, 107
      %v3929 = vpop.permute.xlu0 %3928
      %3930 = vrot.lane.b32.xlu0 %v3919, 107
      %v3931 = vpop.permute.xlu0 %3930
      %v3932 = vsel %vm663, %v3925, %v3927
      %v3933 = vsel %vm663, %v3927, %v3929
      %v3934 = vsel %vm663, %v3929, %v3931
      %3938 = vst [vmem:[#allocation2 + $0x2d8] sm:$0xff] %v3932
      %3939 = vst [vmem:[#allocation2 + $0x2e0] sm:$0xff] %v3933
      %3940 = vst.msk [vmem:[#allocation2 + $0x2e8] sm:$0xff] %vm3771, %v3934
      %v3941 = vld [vmem:[#allocation5] sm:$0xff]
      %v3942 = vld [vmem:[#allocation5 + $0x8] sm:$0xff]
      %v3943 = vld [vmem:[#allocation5 + $0x10] sm:$0xff]
      %v3944 = vld [vmem:[#allocation5 + $0x18] sm:$0xff]
      %3949 = vrot.lane.b32.xlu0 %v3941, 106
      %v3950 = vpop.permute.xlu0 %3949
      %3951 = vrot.lane.b32.xlu0 %v3942, 106
      %v3952 = vpop.permute.xlu0 %3951
      %3953 = vrot.lane.b32.xlu0 %v3943, 106
      %v3954 = vpop.permute.xlu0 %3953
      %3955 = vrot.lane.b32.xlu0 %v3944, 106
      %v3956 = vpop.permute.xlu0 %3955
      %v3957 = vsel %vm754, %v3950, %v3952
      %v3958 = vsel %vm754, %v3952, %v3954
      %v3959 = vsel %vm754, %v3954, %v3956
      %3963 = vst [vmem:[#allocation2 + $0x340] sm:$0xff] %v3957
      %3964 = vst [vmem:[#allocation2 + $0x348] sm:$0xff] %v3958
      %3965 = vst.msk [vmem:[#allocation2 + $0x350] sm:$0xff] %vm3771, %v3959
      %v3966 = vld [vmem:[%s3 + $0x10] sm:$0xff]
      %v3967 = vld [vmem:[%s4 + $0x10] sm:$0xff]
      %v3968 = vld [vmem:[#allocation2] sm:$0xff]
      %v3969 = vld [vmem:[#allocation2 + $0x8] sm:$0xff]
      %v3970 = vld [vmem:[#allocation2 + $0x10] sm:$0xff]
      %v3971 = vld [vmem:[#allocation2 + $0x68] sm:$0xff]
      %v3972 = vld [vmem:[#allocation2 + $0x70] sm:$0xff]
      %v3973 = vld [vmem:[#allocation2 + $0x78] sm:$0xff]
      %v3974 = vld [vmem:[#allocation2 + $0xd0] sm:$0xff]
      %v3975 = vld [vmem:[#allocation2 + $0xd8] sm:$0xff]
      %v3976 = vld [vmem:[#allocation2 + $0xe0] sm:$0xff]
      %v3977 = vld [vmem:[#allocation2 + $0x138] sm:$0xff]
      %v3978 = vld [vmem:[#allocation2 + $0x140] sm:$0xff]
      %v3979 = vld [vmem:[#allocation2 + $0x148] sm:$0xff]
      %v3980 = vld [vmem:[#allocation2 + $0x1a0] sm:$0xff]
      %v3981 = vld [vmem:[#allocation2 + $0x1a8] sm:$0xff]
      %v3982 = vld [vmem:[#allocation2 + $0x1b0] sm:$0xff]
      %v3983 = vld [vmem:[#allocation2 + $0x208] sm:$0xff]
      %v3984 = vld [vmem:[#allocation2 + $0x210] sm:$0xff]
      %v3985 = vld [vmem:[#allocation2 + $0x218] sm:$0xff]
      %v3986 = vld [vmem:[#allocation2 + $0x270] sm:$0xff]
      %v3987 = vld [vmem:[#allocation2 + $0x278] sm:$0xff]
      %v3988 = vld [vmem:[#allocation2 + $0x280] sm:$0xff]
      %v3989 = vld [vmem:[#allocation2 + $0x2d8] sm:$0xff]
      %v3990 = vld [vmem:[#allocation2 + $0x2e0] sm:$0xff]
      %v3991 = vld [vmem:[#allocation2 + $0x2e8] sm:$0xff]
      %v3992 = vld [vmem:[#allocation2 + $0x340] sm:$0xff]
      %v3993 = vld [vmem:[#allocation2 + $0x348] sm:$0xff]
      %v3994 = vld [vmem:[#allocation2 + $0x350] sm:$0xff]
      %3996 = vset.pattern.permute.xlu0 0
      %3997 = vperm.xlu0 %3996, %v3967
      %v3998 = vpop.permute.xlu0 %3997
      %v4001 = vsel %vm1190, %v3966, 0
      %4003 = vmatprep.subr.mxu0 %v3969
      %4004 = vmatpush1.msra.mxu0 %v3968
      %4005 = vmatprep.subr.mxu0 %v3972
      %4006 = vmatpush1.msra.mxu0 %v3971
      %4007 = vmatprep.subr.mxu0 %v3975
      %4008 = vmatpush1.msra.mxu0 %v3974
      %4009 = vmatprep.subr.mxu0 %v3978
      %4010 = vmatpush1.msra.mxu0 %v3977
      %4011 = vmatprep.subr.mxu0 %v3981
      %4012 = vmatpush1.msra.mxu0 %v3980
      %4013 = vmatprep.subr.mxu0 %v3984
      %4014 = vmatpush1.msra.mxu0 %v3983
      %4015 = vmatprep.subr.mxu0 %v3987
      %4016 = vmatpush1.msra.mxu0 %v3986
      %4017 = vmatprep.subr.mxu0 %v3990
      %4018 = vmatpush1.msra.mxu0 %v3989
      %4019 = vmatprep.subr.mxu0 %v3993
      %4020 = vmatpush1.msra.mxu0 %v3992
      %4021 = vmatprep.subr.mxu0 0.0
      %4022 = vmatpush1.msra.mxu0 0.0
      %4023 = vmatprep.subr.mxu0 0.0
      %4024 = vmatpush1.msra.mxu0 0.0
      %4025 = vmatprep.subr.mxu0 0.0
      %4026 = vmatpush1.msra.mxu0 0.0
      %4027 = vmatprep.subr.mxu0 0.0
      %4028 = vmatpush1.msra.mxu0 0.0
      %4029 = vmatprep.subr.mxu0 0.0
      %4030 = vmatpush1.msra.mxu0 0.0
      %4031 = vmatprep.subr.mxu0 0.0
      %4032 = vmatpush1.msra.mxu0 0.0
      %4033 = vmatprep.subr.mxu0 0.0
      %4034 = vmatpush1.msra.mxu0 0.0
      %4035 = vmatprep.subr.mxu0 0.0
      %4036 = vmatpush1.msra.mxu0 0.0
      %4037 = vmatprep.subr.mxu0 0.0
      %4038 = vmatpush1.msra.mxu0 0.0
      %4039 = vmatprep.subr.mxu0 0.0
      %4040 = vmatpush1.msra.mxu0 0.0
      %4041 = vmatprep.subr.mxu0 0.0
      %4042 = vmatpush1.msra.mxu0 0.0
      %4043 = vmatprep.subr.mxu0 0.0
      %4044 = vmatpush1.msra.mxu0 0.0
      %4045 = vmatprep.subr.mxu0 0.0
      %4046 = vmatpush1.msra.mxu0 0.0
      %4047 = vmatprep.subr.mxu0 0.0
      %4048 = vmatpush1.msra.mxu0 0.0
      %4049 = vmatprep.subr.mxu0 0.0
      %4050 = vmatpush1.msra.mxu0 0.0
      %4051 = vmatprep.subr.mxu0 0.0
      %4052 = vmatpush1.msra.mxu0 0.0
      %4053 = vmatprep.subr.mxu0 0.0
      %4054 = vmatpush1.msra.mxu0 0.0
      %4055 = vmatprep.subr.mxu0 0.0
      %4056 = vmatpush1.msra.mxu0 0.0
      %4057 = vmatprep.subr.mxu0 0.0
      %4058 = vmatpush1.msra.mxu0 0.0
      %4059 = vmatprep.subr.mxu0 0.0
      %4060 = vmatpush1.msra.mxu0 0.0
      %4061 = vmatprep.subr.mxu0 0.0
      %4062 = vmatpush1.msra.mxu0 0.0
      %4063 = vmatprep.subr.mxu0 0.0
      %4064 = vmatpush1.msra.mxu0 0.0
      %4065 = vmatprep.subr.mxu0 0.0
      %4066 = vmatpush1.msra.mxu0 0.0
      %4067 = vmatprep.mubr.f32.mxu0 0.0
      %4068 = vmatmul.mubr.f32.gmra.mrb[0].mxu0 %v4001
      %v4069 = vpop.f32.mrb[0].mxu0
      %v4070 = vadd.f32 %v3998, %v4069
      %v4071 = vpop.f32.mrb[0].mxu0
      %v4072 = vadd.f32 %v3998, %v4071
      %4073 = vdwg.mxu0
      %4074 = vmatprep.subr.mxu0 0.0
      %4075 = vmatpush1.msra.mxu0 %v3970
      %4076 = vmatprep.subr.mxu0 0.0
      %4077 = vmatpush1.msra.mxu0 %v3973
      %4078 = vmatprep.subr.mxu0 0.0
      %4079 = vmatpush1.msra.mxu0 %v3976
      %4080 = vmatprep.subr.mxu0 0.0
      %4081 = vmatpush1.msra.mxu0 %v3979
      %4082 = vmatprep.subr.mxu0 0.0
      %4083 = vmatpush1.msra.mxu0 %v3982
      %4084 = vmatprep.subr.mxu0 0.0
      %4085 = vmatpush1.msra.mxu0 %v3985
      %4086 = vmatprep.subr.mxu0 0.0
      %4087 = vmatpush1.msra.mxu0 %v3988
      %4088 = vmatprep.subr.mxu0 0.0
      %4089 = vmatpush1.msra.mxu0 %v3991
      %4090 = vmatprep.subr.mxu0 0.0
      %4091 = vmatpush1.msra.mxu0 %v3994
      %4092 = vmatprep.subr.mxu0 0.0
      %4093 = vmatpush1.msra.mxu0 0.0
      %4094 = vmatprep.subr.mxu0 0.0
      %4095 = vmatpush1.msra.mxu0 0.0
      %4096 = vmatprep.subr.mxu0 0.0
      %4097 = vmatpush1.msra.mxu0 0.0
      %4098 = vmatprep.subr.mxu0 0.0
      %4099 = vmatpush1.msra.mxu0 0.0
      %4100 = vmatprep.subr.mxu0 0.0
      %4101 = vmatpush1.msra.mxu0 0.0
      %4102 = vmatprep.subr.mxu0 0.0
      %4103 = vmatpush1.msra.mxu0 0.0
      %4104 = vmatprep.subr.mxu0 0.0
      %4105 = vmatpush1.msra.mxu0 0.0
      %4106 = vmatprep.subr.mxu0 0.0
      %4107 = vmatpush1.msra.mxu0 0.0
      %4108 = vmatprep.subr.mxu0 0.0
      %4109 = vmatpush1.msra.mxu0 0.0
      %4110 = vmatprep.subr.mxu0 0.0
      %4111 = vmatpush1.msra.mxu0 0.0
      %4112 = vmatprep.subr.mxu0 0.0
      %4113 = vmatpush1.msra.mxu0 0.0
      %4114 = vmatprep.subr.mxu0 0.0
      %4115 = vmatpush1.msra.mxu0 0.0
      %4116 = vmatprep.subr.mxu0 0.0
      %4117 = vmatpush1.msra.mxu0 0.0
      %4118 = vmatprep.subr.mxu0 0.0
      %4119 = vmatpush1.msra.mxu0 0.0
      %4120 = vmatprep.subr.mxu0 0.0
      %4121 = vmatpush1.msra.mxu0 0.0
      %4122 = vmatprep.subr.mxu0 0.0
      %4123 = vmatpush1.msra.mxu0 0.0
      %4124 = vmatprep.subr.mxu0 0.0
      %4125 = vmatpush1.msra.mxu0 0.0
      %4126 = vmatprep.subr.mxu0 0.0
      %4127 = vmatpush1.msra.mxu0 0.0
      %4128 = vmatprep.subr.mxu0 0.0
      %4129 = vmatpush1.msra.mxu0 0.0
      %4130 = vmatprep.subr.mxu0 0.0
      %4131 = vmatpush1.msra.mxu0 0.0
      %4132 = vmatprep.subr.mxu0 0.0
      %4133 = vmatpush1.msra.mxu0 0.0
      %4134 = vmatprep.subr.mxu0 0.0
      %4135 = vmatpush1.msra.mxu0 0.0
      %4136 = vmatprep.subr.mxu0 0.0
      %4137 = vmatpush1.msra.mxu0 0.0
      %4138 = vmatprep.mubr.f32.mxu0 0.0
      %4139 = vmatmul.mubr.f32.gmra.mrb[0].mxu0 %v4001
      %v4140 = vpop.f32.mrb[0].mxu0
      %v4141 = vadd.f32 %v3998, %v4140
      %v4142 = vpop.f32.mrb[0].mxu0
      %4143 = vdwg.mxu0
      %v4144 = vtanh.pop %v4070
      %v4145 = vtanh.pop %v4072
      %v4146 = vtanh.pop %v4141
      %4147 = vst [vmem:[#allocation6] sm:$0xff] %v4144
      %4148 = vst [vmem:[#allocation6 + $0x8] sm:$0xff] %v4145
      %4149 = vst.msk [vmem:[#allocation6 + $0x10] sm:$0xff] %vm3771, %v4146
      %v4150 = vld [vmem:[#allocation6] sm:$0xff]
      %v4151 = vld [vmem:[#allocation6 + $0x8] sm:$0xff]
      %v4152 = vld [vmem:[#allocation6 + $0x10] sm:$0xff]
      %4153 = vst [vmem:[#allocation2] sm:$0xff] %v4150
      %4154 = vst [vmem:[#allocation2 + $0x8] sm:$0xff] %v4151
      %4155 = vst.msk [vmem:[#allocation2 + $0x10] sm:$0xff] %vm3264, %v4152
      %v4156 = vld [vmem:[#allocation6] sm:$0xff]
      %v4157 = vld [vmem:[#allocation6 + $0x8] sm:$0xff]
      %v4158 = vld [vmem:[#allocation6 + $0x10] sm:$0xff]
      %4162 = vrot.lane.b32.xlu0 %v4156, 127
      %v4163 = vpop.permute.xlu0 %4162
      %4164 = vrot.lane.b32.xlu0 %v4157, 127
      %v4165 = vpop.permute.xlu0 %4164
      %4166 = vrot.lane.b32.xlu0 %v4158, 127
      %v4167 = vpop.permute.xlu0 %4166
      %v4168 = vsel %vm390, %v4163, %v4165
      %v4169 = vsel %vm390, %v4165, %v4167
      %4173 = vst [vmem:[#allocation2 + $0x68] sm:$0xff] %v4168
      %4174 = vst [vmem:[#allocation2 + $0x70] sm:$0xff] %v4169
      %4175 = vst.msk [vmem:[#allocation2 + $0x78] sm:$0xff] %vm3264, %v4167
      %v4176 = vld [vmem:[#allocation6] sm:$0xff]
      %v4177 = vld [vmem:[#allocation6 + $0x8] sm:$0xff]
      %v4178 = vld [vmem:[#allocation6 + $0x10] sm:$0xff]
      %4182 = vrot.lane.b32.xlu0 %v4176, 126
      %v4183 = vpop.permute.xlu0 %4182
      %4184 = vrot.lane.b32.xlu0 %v4177, 126
      %v4185 = vpop.permute.xlu0 %4184
      %4186 = vrot.lane.b32.xlu0 %v4178, 126
      %v4187 = vpop.permute.xlu0 %4186
      %v4188 = vsel %vm481, %v4183, %v4185
      %v4189 = vsel %vm481, %v4185, %v4187
      %4193 = vst [vmem:[#allocation2 + $0xd0] sm:$0xff] %v4188
      %4194 = vst [vmem:[#allocation2 + $0xd8] sm:$0xff] %v4189
      %4195 = vst.msk [vmem:[#allocation2 + $0xe0] sm:$0xff] %vm3264, %v4187
      %v4196 = vld [vmem:[#allocation6] sm:$0xff]
      %v4197 = vld [vmem:[#allocation6 + $0x8] sm:$0xff]
      %v4198 = vld [vmem:[#allocation6 + $0x10] sm:$0xff]
      %4202 = vrot.lane.b32.xlu0 %v4196, 118
      %v4203 = vpop.permute.xlu0 %4202
      %4204 = vrot.lane.b32.xlu0 %v4197, 118
      %v4205 = vpop.permute.xlu0 %4204
      %4206 = vrot.lane.b32.xlu0 %v4198, 118
      %v4207 = vpop.permute.xlu0 %4206
      %v4208 = vsel %vm3829, %v4203, %v4205
      %v4209 = vsel %vm3829, %v4205, %v4207
      %4213 = vst [vmem:[#allocation2 + $0x138] sm:$0xff] %v4208
      %4214 = vst [vmem:[#allocation2 + $0x140] sm:$0xff] %v4209
      %4215 = vst.msk [vmem:[#allocation2 + $0x148] sm:$0xff] %vm3264, %v4207
      %v4216 = vld [vmem:[#allocation6] sm:$0xff]
      %v4217 = vld [vmem:[#allocation6 + $0x8] sm:$0xff]
      %v4218 = vld [vmem:[#allocation6 + $0x10] sm:$0xff]
      %4222 = vrot.lane.b32.xlu0 %v4216, 117
      %v4223 = vpop.permute.xlu0 %4222
      %4224 = vrot.lane.b32.xlu0 %v4217, 117
      %v4225 = vpop.permute.xlu0 %4224
      %4226 = vrot.lane.b32.xlu0 %v4218, 117
      %v4227 = vpop.permute.xlu0 %4226
      %v4228 = vsel %vm3855, %v4223, %v4225
      %v4229 = vsel %vm3855, %v4225, %v4227
      %4233 = vst [vmem:[#allocation2 + $0x1a0] sm:$0xff] %v4228
      %4234 = vst [vmem:[#allocation2 + $0x1a8] sm:$0xff] %v4229
      %4235 = vst.msk [vmem:[#allocation2 + $0x1b0] sm:$0xff] %vm3264, %v4227
      %v4236 = vld [vmem:[#allocation6] sm:$0xff]
      %v4237 = vld [vmem:[#allocation6 + $0x8] sm:$0xff]
      %v4238 = vld [vmem:[#allocation6 + $0x10] sm:$0xff]
      %4242 = vrot.lane.b32.xlu0 %v4236, 116
      %v4243 = vpop.permute.xlu0 %4242
      %4244 = vrot.lane.b32.xlu0 %v4237, 116
      %v4245 = vpop.permute.xlu0 %4244
      %4246 = vrot.lane.b32.xlu0 %v4238, 116
      %v4247 = vpop.permute.xlu0 %4246
      %v4248 = vsel %vm3881, %v4243, %v4245
      %v4249 = vsel %vm3881, %v4245, %v4247
      %4253 = vst [vmem:[#allocation2 + $0x208] sm:$0xff] %v4248
      %4254 = vst [vmem:[#allocation2 + $0x210] sm:$0xff] %v4249
      %4255 = vst.msk [vmem:[#allocation2 + $0x218] sm:$0xff] %vm3264, %v4247
      %v4256 = vld [vmem:[#allocation6] sm:$0xff]
      %v4257 = vld [vmem:[#allocation6 + $0x8] sm:$0xff]
      %v4258 = vld [vmem:[#allocation6 + $0x10] sm:$0xff]
      %4262 = vrot.lane.b32.xlu0 %v4256, 108
      %v4263 = vpop.permute.xlu0 %4262
      %4264 = vrot.lane.b32.xlu0 %v4257, 108
      %v4265 = vpop.permute.xlu0 %4264
      %4266 = vrot.lane.b32.xlu0 %v4258, 108
      %v4267 = vpop.permute.xlu0 %4266
      %v4268 = vsel %vm572, %v4263, %v4265
      %v4269 = vsel %vm572, %v4265, %v4267
      %4273 = vst [vmem:[#allocation2 + $0x270] sm:$0xff] %v4268
      %4274 = vst [vmem:[#allocation2 + $0x278] sm:$0xff] %v4269
      %4275 = vst.msk [vmem:[#allocation2 + $0x280] sm:$0xff] %vm3264, %v4267
      %v4276 = vld [vmem:[#allocation6] sm:$0xff]
      %v4277 = vld [vmem:[#allocation6 + $0x8] sm:$0xff]
      %v4278 = vld [vmem:[#allocation6 + $0x10] sm:$0xff]
      %4282 = vrot.lane.b32.xlu0 %v4276, 107
      %v4283 = vpop.permute.xlu0 %4282
      %4284 = vrot.lane.b32.xlu0 %v4277, 107
      %v4285 = vpop.permute.xlu0 %4284
      %4286 = vrot.lane.b32.xlu0 %v4278, 107
      %v4287 = vpop.permute.xlu0 %4286
      %v4288 = vsel %vm663, %v4283, %v4285
      %v4289 = vsel %vm663, %v4285, %v4287
      %4293 = vst [vmem:[#allocation2 + $0x2d8] sm:$0xff] %v4288
      %4294 = vst [vmem:[#allocation2 + $0x2e0] sm:$0xff] %v4289
      %4295 = vst.msk [vmem:[#allocation2 + $0x2e8] sm:$0xff] %vm3264, %v4287
      %v4296 = vld [vmem:[#allocation6] sm:$0xff]
      %v4297 = vld [vmem:[#allocation6 + $0x8] sm:$0xff]
      %v4298 = vld [vmem:[#allocation6 + $0x10] sm:$0xff]
      %4302 = vrot.lane.b32.xlu0 %v4296, 106
      %v4303 = vpop.permute.xlu0 %4302
      %4304 = vrot.lane.b32.xlu0 %v4297, 106
      %v4305 = vpop.permute.xlu0 %4304
      %4306 = vrot.lane.b32.xlu0 %v4298, 106
      %v4307 = vpop.permute.xlu0 %4306
      %v4308 = vsel %vm754, %v4303, %v4305
      %v4309 = vsel %vm754, %v4305, %v4307
      %4313 = vst [vmem:[#allocation2 + $0x340] sm:$0xff] %v4308
      %4314 = vst [vmem:[#allocation2 + $0x348] sm:$0xff] %v4309
      %4315 = vst.msk [vmem:[#allocation2 + $0x350] sm:$0xff] %vm3264, %v4307
      %v4316 = vld [vmem:[%s3 + $0x18] sm:$0xff]
      %v4317 = vld [vmem:[%s4 + $0x18] sm:$0xff]
      %v4318 = vld [vmem:[#allocation2] sm:$0xff]
      %v4319 = vld [vmem:[#allocation2 + $0x8] sm:$0xff]
      %v4320 = vld [vmem:[#allocation2 + $0x10] sm:$0xff]
      %v4321 = vld [vmem:[#allocation2 + $0x68] sm:$0xff]
      %v4322 = vld [vmem:[#allocation2 + $0x70] sm:$0xff]
      %v4323 = vld [vmem:[#allocation2 + $0x78] sm:$0xff]
      %v4324 = vld [vmem:[#allocation2 + $0xd0] sm:$0xff]
      %v4325 = vld [vmem:[#allocation2 + $0xd8] sm:$0xff]
      %v4326 = vld [vmem:[#allocation2 + $0xe0] sm:$0xff]
      %v4327 = vld [vmem:[#allocation2 + $0x138] sm:$0xff]
      %v4328 = vld [vmem:[#allocation2 + $0x140] sm:$0xff]
      %v4329 = vld [vmem:[#allocation2 + $0x148] sm:$0xff]
      %v4330 = vld [vmem:[#allocation2 + $0x1a0] sm:$0xff]
      %v4331 = vld [vmem:[#allocation2 + $0x1a8] sm:$0xff]
      %v4332 = vld [vmem:[#allocation2 + $0x1b0] sm:$0xff]
      %v4333 = vld [vmem:[#allocation2 + $0x208] sm:$0xff]
      %v4334 = vld [vmem:[#allocation2 + $0x210] sm:$0xff]
      %v4335 = vld [vmem:[#allocation2 + $0x218] sm:$0xff]
      %v4336 = vld [vmem:[#allocation2 + $0x270] sm:$0xff]
      %v4337 = vld [vmem:[#allocation2 + $0x278] sm:$0xff]
      %v4338 = vld [vmem:[#allocation2 + $0x280] sm:$0xff]
      %v4339 = vld [vmem:[#allocation2 + $0x2d8] sm:$0xff]
      %v4340 = vld [vmem:[#allocation2 + $0x2e0] sm:$0xff]
      %v4341 = vld [vmem:[#allocation2 + $0x2e8] sm:$0xff]
      %v4342 = vld [vmem:[#allocation2 + $0x340] sm:$0xff]
      %v4343 = vld [vmem:[#allocation2 + $0x348] sm:$0xff]
      %v4344 = vld [vmem:[#allocation2 + $0x350] sm:$0xff]
      %4346 = vset.pattern.permute.xlu0 0
      %4347 = vperm.xlu0 %4346, %v4317
      %v4348 = vpop.permute.xlu0 %4347
      %v4351 = vsel %vm1190, %v4316, 0
      %4353 = vmatprep.subr.mxu0 %v4319
      %4354 = vmatpush1.msra.mxu0 %v4318
      %4355 = vmatprep.subr.mxu0 %v4322
      %4356 = vmatpush1.msra.mxu0 %v4321
      %4357 = vmatprep.subr.mxu0 %v4325
      %4358 = vmatpush1.msra.mxu0 %v4324
      %4359 = vmatprep.subr.mxu0 %v4328
      %4360 = vmatpush1.msra.mxu0 %v4327
      %4361 = vmatprep.subr.mxu0 %v4331
      %4362 = vmatpush1.msra.mxu0 %v4330
      %4363 = vmatprep.subr.mxu0 %v4334
      %4364 = vmatpush1.msra.mxu0 %v4333
      %4365 = vmatprep.subr.mxu0 %v4337
      %4366 = vmatpush1.msra.mxu0 %v4336
      %4367 = vmatprep.subr.mxu0 %v4340
      %4368 = vmatpush1.msra.mxu0 %v4339
      %4369 = vmatprep.subr.mxu0 %v4343
      %4370 = vmatpush1.msra.mxu0 %v4342
      %4371 = vmatprep.subr.mxu0 0.0
      %4372 = vmatpush1.msra.mxu0 0.0
      %4373 = vmatprep.subr.mxu0 0.0
      %4374 = vmatpush1.msra.mxu0 0.0
      %4375 = vmatprep.subr.mxu0 0.0
      %4376 = vmatpush1.msra.mxu0 0.0
      %4377 = vmatprep.subr.mxu0 0.0
      %4378 = vmatpush1.msra.mxu0 0.0
      %4379 = vmatprep.subr.mxu0 0.0
      %4380 = vmatpush1.msra.mxu0 0.0
      %4381 = vmatprep.subr.mxu0 0.0
      %4382 = vmatpush1.msra.mxu0 0.0
      %4383 = vmatprep.subr.mxu0 0.0
      %4384 = vmatpush1.msra.mxu0 0.0
      %4385 = vmatprep.subr.mxu0 0.0
      %4386 = vmatpush1.msra.mxu0 0.0
      %4387 = vmatprep.subr.mxu0 0.0
      %4388 = vmatpush1.msra.mxu0 0.0
      %4389 = vmatprep.subr.mxu0 0.0
      %4390 = vmatpush1.msra.mxu0 0.0
      %4391 = vmatprep.subr.mxu0 0.0
      %4392 = vmatpush1.msra.mxu0 0.0
      %4393 = vmatprep.subr.mxu0 0.0
      %4394 = vmatpush1.msra.mxu0 0.0
      %4395 = vmatprep.subr.mxu0 0.0
      %4396 = vmatpush1.msra.mxu0 0.0
      %4397 = vmatprep.subr.mxu0 0.0
      %4398 = vmatpush1.msra.mxu0 0.0
      %4399 = vmatprep.subr.mxu0 0.0
      %4400 = vmatpush1.msra.mxu0 0.0
      %4401 = vmatprep.subr.mxu0 0.0
      %4402 = vmatpush1.msra.mxu0 0.0
      %4403 = vmatprep.subr.mxu0 0.0
      %4404 = vmatpush1.msra.mxu0 0.0
      %4405 = vmatprep.subr.mxu0 0.0
      %4406 = vmatpush1.msra.mxu0 0.0
      %4407 = vmatprep.subr.mxu0 0.0
      %4408 = vmatpush1.msra.mxu0 0.0
      %4409 = vmatprep.subr.mxu0 0.0
      %4410 = vmatpush1.msra.mxu0 0.0
      %4411 = vmatprep.subr.mxu0 0.0
      %4412 = vmatpush1.msra.mxu0 0.0
      %4413 = vmatprep.subr.mxu0 0.0
      %4414 = vmatpush1.msra.mxu0 0.0
      %4415 = vmatprep.subr.mxu0 0.0
      %4416 = vmatpush1.msra.mxu0 0.0
      %4417 = vmatprep.mubr.f32.mxu0 0.0
      %4418 = vmatmul.mubr.f32.gmra.mrb[0].mxu0 %v4351
      %v4419 = vpop.f32.mrb[0].mxu0
      %v4420 = vadd.f32 %v4348, %v4419
      %v4421 = vpop.f32.mrb[0].mxu0
      %v4422 = vadd.f32 %v4348, %v4421
      %4423 = vdwg.mxu0
      %4424 = vmatprep.subr.mxu0 0.0
      %4425 = vmatpush1.msra.mxu0 %v4320
      %4426 = vmatprep.subr.mxu0 0.0
      %4427 = vmatpush1.msra.mxu0 %v4323
      %4428 = vmatprep.subr.mxu0 0.0
      %4429 = vmatpush1.msra.mxu0 %v4326
      %4430 = vmatprep.subr.mxu0 0.0
      %4431 = vmatpush1.msra.mxu0 %v4329
      %4432 = vmatprep.subr.mxu0 0.0
      %4433 = vmatpush1.msra.mxu0 %v4332
      %4434 = vmatprep.subr.mxu0 0.0
      %4435 = vmatpush1.msra.mxu0 %v4335
      %4436 = vmatprep.subr.mxu0 0.0
      %4437 = vmatpush1.msra.mxu0 %v4338
      %4438 = vmatprep.subr.mxu0 0.0
      %4439 = vmatpush1.msra.mxu0 %v4341
      %4440 = vmatprep.subr.mxu0 0.0
      %4441 = vmatpush1.msra.mxu0 %v4344
      %4442 = vmatprep.subr.mxu0 0.0
      %4443 = vmatpush1.msra.mxu0 0.0
      %4444 = vmatprep.subr.mxu0 0.0
      %4445 = vmatpush1.msra.mxu0 0.0
      %4446 = vmatprep.subr.mxu0 0.0
      %4447 = vmatpush1.msra.mxu0 0.0
      %4448 = vmatprep.subr.mxu0 0.0
      %4449 = vmatpush1.msra.mxu0 0.0
      %4450 = vmatprep.subr.mxu0 0.0
      %4451 = vmatpush1.msra.mxu0 0.0
      %4452 = vmatprep.subr.mxu0 0.0
      %4453 = vmatpush1.msra.mxu0 0.0
      %4454 = vmatprep.subr.mxu0 0.0
      %4455 = vmatpush1.msra.mxu0 0.0
      %4456 = vmatprep.subr.mxu0 0.0
      %4457 = vmatpush1.msra.mxu0 0.0
      %4458 = vmatprep.subr.mxu0 0.0
      %4459 = vmatpush1.msra.mxu0 0.0
      %4460 = vmatprep.subr.mxu0 0.0
      %4461 = vmatpush1.msra.mxu0 0.0
      %4462 = vmatprep.subr.mxu0 0.0
      %4463 = vmatpush1.msra.mxu0 0.0
      %4464 = vmatprep.subr.mxu0 0.0
      %4465 = vmatpush1.msra.mxu0 0.0
      %4466 = vmatprep.subr.mxu0 0.0
      %4467 = vmatpush1.msra.mxu0 0.0
      %4468 = vmatprep.subr.mxu0 0.0
      %4469 = vmatpush1.msra.mxu0 0.0
      %4470 = vmatprep.subr.mxu0 0.0
      %4471 = vmatpush1.msra.mxu0 0.0
      %4472 = vmatprep.subr.mxu0 0.0
      %4473 = vmatpush1.msra.mxu0 0.0
      %4474 = vmatprep.subr.mxu0 0.0
      %4475 = vmatpush1.msra.mxu0 0.0
      %4476 = vmatprep.subr.mxu0 0.0
      %4477 = vmatpush1.msra.mxu0 0.0
      %4478 = vmatprep.subr.mxu0 0.0
      %4479 = vmatpush1.msra.mxu0 0.0
      %4480 = vmatprep.subr.mxu0 0.0
      %4481 = vmatpush1.msra.mxu0 0.0
      %4482 = vmatprep.subr.mxu0 0.0
      %4483 = vmatpush1.msra.mxu0 0.0
      %4484 = vmatprep.subr.mxu0 0.0
      %4485 = vmatpush1.msra.mxu0 0.0
      %4486 = vmatprep.subr.mxu0 0.0
      %4487 = vmatpush1.msra.mxu0 0.0
      %4488 = vmatprep.mubr.f32.mxu0 0.0
      %4489 = vmatmul.mubr.f32.gmra.mrb[0].mxu0 %v4351
      %v4490 = vpop.f32.mrb[0].mxu0
      %v4491 = vadd.f32 %v4348, %v4490
      %v4492 = vpop.f32.mrb[0].mxu0
      %4493 = vdwg.mxu0
      %v4494 = vtanh.pop %v4420
      %v4495 = vtanh.pop %v4422
      %v4496 = vtanh.pop %v4491
      %v4497 = vld [vmem:[%s306] sm:$0x7]
      %v4499 = vlaneseq
      %v4500 = vshrl.u32 %v4499, 7
      %v4501 = vsub.s32 0, %v4500
      %v4502 = vrot.slane %v4497, %v4501
      %v4503 = vlaneseq
      %v4504 = vshrl.u32 %v4503, 7
      %v4505 = vsub.s32 1, %v4504
      %v4506 = vrot.slane %v4497, %v4505
      %v4507 = vlaneseq
      %v4508 = vshrl.u32 %v4507, 7
      %v4509 = vsub.s32 2, %v4508
      %v4510 = vrot.slane %v4497, %v4509
      %v4514 = vmul.f32 %v4494, %v4502
      %v4515 = vmul.f32 %v4495, %v4506
      %v4516 = vmul.f32 %v4496, %v4510
      %4517 = vst [vmem:[#allocation7] sm:$0xff] %v4514
      %4518 = vst [vmem:[#allocation7 + $0x8] sm:$0xff] %v4515
      %4519 = vst.msk [vmem:[#allocation7 + $0x10] sm:$0xff] %vm3264, %v4516
      %v4520 = vld [vmem:[%s6] sm:$0xff]
      %v4521 = vld [vmem:[%s6 + $0x8] sm:$0xff]
      %v4522 = vld [vmem:[%s6 + $0x10] sm:$0xff]
      %v4523 = vld [vmem:[%s6 + $0x18] sm:$0xff]
      %v4524 = vld [vmem:[%s6 + $0x20] sm:$0xff]
      %v4525 = vld [vmem:[%s6 + $0x28] sm:$0xff]
      %v4526 = vld [vmem:[%s6 + $0x30] sm:$0xff]
      %v4527 = vld [vmem:[#allocation7] sm:$0xff]
      %vm4528 = vcmask 457728
      %v4530 = vsel %vm4528, %v4527, 0
      %4532 = vmatprep.subr.mxu0 0.0
      %4533 = vmatpush1.msra.mxu0 %v4520
      %4534 = vmatprep.subr.mxu0 0.0
      %4535 = vmatpush1.msra.mxu0 %v4521
      %4536 = vmatprep.subr.mxu0 0.0
      %4537 = vmatpush1.msra.mxu0 %v4522
      %4538 = vmatprep.subr.mxu0 0.0
      %4539 = vmatpush1.msra.mxu0 %v4523
      %4540 = vmatprep.subr.mxu0 0.0
      %4541 = vmatpush1.msra.mxu0 %v4524
      %4542 = vmatprep.subr.mxu0 0.0
      %4543 = vmatpush1.msra.mxu0 %v4525
      %4544 = vmatprep.subr.mxu0 0.0
      %4545 = vmatpush1.msra.mxu0 %v4526
      %4546 = vmatprep.subr.mxu0 0.0
      %4547 = vmatpush1.msra.mxu0 0.0
      %4548 = vmatprep.subr.mxu0 0.0
      %4549 = vmatpush1.msra.mxu0 0.0
      %4550 = vmatprep.subr.mxu0 0.0
      %4551 = vmatpush1.msra.mxu0 0.0
      %4552 = vmatprep.subr.mxu0 0.0
      %4553 = vmatpush1.msra.mxu0 0.0
      %4554 = vmatprep.subr.mxu0 0.0
      %4555 = vmatpush1.msra.mxu0 0.0
      %4556 = vmatprep.subr.mxu0 0.0
      %4557 = vmatpush1.msra.mxu0 0.0
      %4558 = vmatprep.subr.mxu0 0.0
      %4559 = vmatpush1.msra.mxu0 0.0
      %4560 = vmatprep.subr.mxu0 0.0
      %4561 = vmatpush1.msra.mxu0 0.0
      %4562 = vmatprep.subr.mxu0 0.0
      %4563 = vmatpush1.msra.mxu0 0.0
      %4564 = vmatprep.subr.mxu0 0.0
      %4565 = vmatpush1.msra.mxu0 0.0
      %4566 = vmatprep.subr.mxu0 0.0
      %4567 = vmatpush1.msra.mxu0 0.0
      %4568 = vmatprep.subr.mxu0 0.0
      %4569 = vmatpush1.msra.mxu0 0.0
      %4570 = vmatprep.subr.mxu0 0.0
      %4571 = vmatpush1.msra.mxu0 0.0
      %4572 = vmatprep.subr.mxu0 0.0
      %4573 = vmatpush1.msra.mxu0 0.0
      %4574 = vmatprep.subr.mxu0 0.0
      %4575 = vmatpush1.msra.mxu0 0.0
      %4576 = vmatprep.subr.mxu0 0.0
      %4577 = vmatpush1.msra.mxu0 0.0
      %4578 = vmatprep.subr.mxu0 0.0
      %4579 = vmatpush1.msra.mxu0 0.0
      %4580 = vmatprep.subr.mxu0 0.0
      %4581 = vmatpush1.msra.mxu0 0.0
      %4582 = vmatprep.subr.mxu0 0.0
      %4583 = vmatpush1.msra.mxu0 0.0
      %4584 = vmatprep.subr.mxu0 0.0
      %4585 = vmatpush1.msra.mxu0 0.0
      %4586 = vmatprep.subr.mxu0 0.0
      %4587 = vmatpush1.msra.mxu0 0.0
      %4588 = vmatprep.subr.mxu0 0.0
      %4589 = vmatpush1.msra.mxu0 0.0
      %4590 = vmatprep.subr.mxu0 0.0
      %4591 = vmatpush1.msra.mxu0 0.0
      %4592 = vmatprep.subr.mxu0 0.0
      %4593 = vmatpush1.msra.mxu0 0.0
      %4594 = vmatprep.subr.mxu0 0.0
      %4595 = vmatpush1.msra.mxu0 0.0
      %4596 = vmatprep.mubr.f32.mxu0 0.0
      %4597 = vmatmul.mubr.f32.gmra.mrb[0].mxu0 %v4530
      %v4598 = vpop.f32.mrb[0].mxu0
      %v4599 = vadd.f32 0.0, %v4598
      %v4600 = vpop.f32.mrb[0].mxu0
      %4601 = vdwg.mxu0
      %v4602 = vld [vmem:[#allocation7] sm:$0xff]
      %v4603 = vld [vmem:[#allocation7 + $0x8] sm:$0xff]
      %4606 = vrot.lane.b32.xlu0 %v4602, 28
      %v4607 = vpop.permute.xlu0 %4606
      %4608 = vrot.lane.b32.xlu0 %v4603, 28
      %v4609 = vpop.permute.xlu0 %4608
      %vm4610 = vcmask 228352
      %v4611 = vsel %vm4610, %v4607, %v4609
      %v4612 = vsel %vm4528, %v4611, 0
      %4614 = vmatprep.subr.mxu0 0.0
      %4615 = vmatpush1.msra.mxu0 %v4520
      %4616 = vmatprep.subr.mxu0 0.0
      %4617 = vmatpush1.msra.mxu0 %v4521
      %4618 = vmatprep.subr.mxu0 0.0
      %4619 = vmatpush1.msra.mxu0 %v4522
      %4620 = vmatprep.subr.mxu0 0.0
      %4621 = vmatpush1.msra.mxu0 %v4523
      %4622 = vmatprep.subr.mxu0 0.0
      %4623 = vmatpush1.msra.mxu0 %v4524
      %4624 = vmatprep.subr.mxu0 0.0
      %4625 = vmatpush1.msra.mxu0 %v4525
      %4626 = vmatprep.subr.mxu0 0.0
      %4627 = vmatpush1.msra.mxu0 %v4526
      %4628 = vmatprep.subr.mxu0 0.0
      %4629 = vmatpush1.msra.mxu0 0.0
      %4630 = vmatprep.subr.mxu0 0.0
      %4631 = vmatpush1.msra.mxu0 0.0
      %4632 = vmatprep.subr.mxu0 0.0
      %4633 = vmatpush1.msra.mxu0 0.0
      %4634 = vmatprep.subr.mxu0 0.0
      %4635 = vmatpush1.msra.mxu0 0.0
      %4636 = vmatprep.subr.mxu0 0.0
      %4637 = vmatpush1.msra.mxu0 0.0
      %4638 = vmatprep.subr.mxu0 0.0
      %4639 = vmatpush1.msra.mxu0 0.0
      %4640 = vmatprep.subr.mxu0 0.0
      %4641 = vmatpush1.msra.mxu0 0.0
      %4642 = vmatprep.subr.mxu0 0.0
      %4643 = vmatpush1.msra.mxu0 0.0
      %4644 = vmatprep.subr.mxu0 0.0
      %4645 = vmatpush1.msra.mxu0 0.0
      %4646 = vmatprep.subr.mxu0 0.0
      %4647 = vmatpush1.msra.mxu0 0.0
      %4648 = vmatprep.subr.mxu0 0.0
      %4649 = vmatpush1.msra.mxu0 0.0
      %4650 = vmatprep.subr.mxu0 0.0
      %4651 = vmatpush1.msra.mxu0 0.0
      %4652 = vmatprep.subr.mxu0 0.0
      %4653 = vmatpush1.msra.mxu0 0.0
      %4654 = vmatprep.subr.mxu0 0.0
      %4655 = vmatpush1.msra.mxu0 0.0
      %4656 = vmatprep.subr.mxu0 0.0
      %4657 = vmatpush1.msra.mxu0 0.0
      %4658 = vmatprep.subr.mxu0 0.0
      %4659 = vmatpush1.msra.mxu0 0.0
      %4660 = vmatprep.subr.mxu0 0.0
      %4661 = vmatpush1.msra.mxu0 0.0
      %4662 = vmatprep.subr.mxu0 0.0
      %4663 = vmatpush1.msra.mxu0 0.0
      %4664 = vmatprep.subr.mxu0 0.0
      %4665 = vmatpush1.msra.mxu0 0.0
      %4666 = vmatprep.subr.mxu0 0.0
      %4667 = vmatpush1.msra.mxu0 0.0
      %4668 = vmatprep.subr.mxu0 0.0
      %4669 = vmatpush1.msra.mxu0 0.0
      %4670 = vmatprep.subr.mxu0 0.0
      %4671 = vmatpush1.msra.mxu0 0.0
      %4672 = vmatprep.subr.mxu0 0.0
      %4673 = vmatpush1.msra.mxu0 0.0
      %4674 = vmatprep.subr.mxu0 0.0
      %4675 = vmatpush1.msra.mxu0 0.0
      %4676 = vmatprep.subr.mxu0 0.0
      %4677 = vmatpush1.msra.mxu0 0.0
      %4678 = vmatprep.mubr.f32.mxu0 0.0
      %4679 = vmatmul.mubr.f32.gmra.mrb[0].mxu0 %v4612
      %v4680 = vpop.f32.mrb[0].mxu0
      %v4681 = vadd.f32 0.0, %v4680
      %v4682 = vpop.f32.mrb[0].mxu0
      %4683 = vdwg.mxu0
      %4684 = vrot.lane.b32.xlu0 %v4603, 56
      %v4685 = vpop.permute.xlu0 %4684
      %v4686 = vsel %vm4528, %v4685, 0
      %4688 = vmatprep.subr.mxu0 0.0
      %4689 = vmatpush1.msra.mxu0 %v4520
      %4690 = vmatprep.subr.mxu0 0.0
      %4691 = vmatpush1.msra.mxu0 %v4521
      %4692 = vmatprep.subr.mxu0 0.0
      %4693 = vmatpush1.msra.mxu0 %v4522
      %4694 = vmatprep.subr.mxu0 0.0
      %4695 = vmatpush1.msra.mxu0 %v4523
      %4696 = vmatprep.subr.mxu0 0.0
      %4697 = vmatpush1.msra.mxu0 %v4524
      %4698 = vmatprep.subr.mxu0 0.0
      %4699 = vmatpush1.msra.mxu0 %v4525
      %4700 = vmatprep.subr.mxu0 0.0
      %4701 = vmatpush1.msra.mxu0 %v4526
      %4702 = vmatprep.subr.mxu0 0.0
      %4703 = vmatpush1.msra.mxu0 0.0
      %4704 = vmatprep.subr.mxu0 0.0
      %4705 = vmatpush1.msra.mxu0 0.0
      %4706 = vmatprep.subr.mxu0 0.0
      %4707 = vmatpush1.msra.mxu0 0.0
      %4708 = vmatprep.subr.mxu0 0.0
      %4709 = vmatpush1.msra.mxu0 0.0
      %4710 = vmatprep.subr.mxu0 0.0
      %4711 = vmatpush1.msra.mxu0 0.0
      %4712 = vmatprep.subr.mxu0 0.0
      %4713 = vmatpush1.msra.mxu0 0.0
      %4714 = vmatprep.subr.mxu0 0.0
      %4715 = vmatpush1.msra.mxu0 0.0
      %4716 = vmatprep.subr.mxu0 0.0
      %4717 = vmatpush1.msra.mxu0 0.0
      %4718 = vmatprep.subr.mxu0 0.0
      %4719 = vmatpush1.msra.mxu0 0.0
      %4720 = vmatprep.subr.mxu0 0.0
      %4721 = vmatpush1.msra.mxu0 0.0
      %4722 = vmatprep.subr.mxu0 0.0
      %4723 = vmatpush1.msra.mxu0 0.0
      %4724 = vmatprep.subr.mxu0 0.0
      %4725 = vmatpush1.msra.mxu0 0.0
      %4726 = vmatprep.subr.mxu0 0.0
      %4727 = vmatpush1.msra.mxu0 0.0
      %4728 = vmatprep.subr.mxu0 0.0
      %4729 = vmatpush1.msra.mxu0 0.0
      %4730 = vmatprep.subr.mxu0 0.0
      %4731 = vmatpush1.msra.mxu0 0.0
      %4732 = vmatprep.subr.mxu0 0.0
      %4733 = vmatpush1.msra.mxu0 0.0
      %4734 = vmatprep.subr.mxu0 0.0
      %4735 = vmatpush1.msra.mxu0 0.0
      %4736 = vmatprep.subr.mxu0 0.0
      %4737 = vmatpush1.msra.mxu0 0.0
      %4738 = vmatprep.subr.mxu0 0.0
      %4739 = vmatpush1.msra.mxu0 0.0
      %4740 = vmatprep.subr.mxu0 0.0
      %4741 = vmatpush1.msra.mxu0 0.0
      %4742 = vmatprep.subr.mxu0 0.0
      %4743 = vmatpush1.msra.mxu0 0.0
      %4744 = vmatprep.subr.mxu0 0.0
      %4745 = vmatpush1.msra.mxu0 0.0
      %4746 = vmatprep.subr.mxu0 0.0
      %4747 = vmatpush1.msra.mxu0 0.0
      %4748 = vmatprep.subr.mxu0 0.0
      %4749 = vmatpush1.msra.mxu0 0.0
      %4750 = vmatprep.subr.mxu0 0.0
      %4751 = vmatpush1.msra.mxu0 0.0
      %4752 = vmatprep.mubr.f32.mxu0 0.0
      %4753 = vmatmul.mubr.f32.gmra.mrb[0].mxu0 %v4686
      %v4754 = vpop.f32.mrb[0].mxu0
      %v4755 = vadd.f32 0.0, %v4754
      %v4756 = vpop.f32.mrb[0].mxu0
      %4757 = vdwg.mxu0
      %v4758 = vld [vmem:[#allocation7 + $0x10] sm:$0xff]
      %4760 = vrot.lane.b32.xlu0 %v4758, 84
      %v4761 = vpop.permute.xlu0 %4760
      %v4762 = vsel %vm4528, %v4761, 0
      %4764 = vmatprep.subr.mxu0 0.0
      %4765 = vmatpush1.msra.mxu0 %v4520
      %4766 = vmatprep.subr.mxu0 0.0
      %4767 = vmatpush1.msra.mxu0 %v4521
      %4768 = vmatprep.subr.mxu0 0.0
      %4769 = vmatpush1.msra.mxu0 %v4522
      %4770 = vmatprep.subr.mxu0 0.0
      %4771 = vmatpush1.msra.mxu0 %v4523
      %4772 = vmatprep.subr.mxu0 0.0
      %4773 = vmatpush1.msra.mxu0 %v4524
      %4774 = vmatprep.subr.mxu0 0.0
      %4775 = vmatpush1.msra.mxu0 %v4525
      %4776 = vmatprep.subr.mxu0 0.0
      %4777 = vmatpush1.msra.mxu0 %v4526
      %4778 = vmatprep.subr.mxu0 0.0
      %4779 = vmatpush1.msra.mxu0 0.0
      %4780 = vmatprep.subr.mxu0 0.0
      %4781 = vmatpush1.msra.mxu0 0.0
      %4782 = vmatprep.subr.mxu0 0.0
      %4783 = vmatpush1.msra.mxu0 0.0
      %4784 = vmatprep.subr.mxu0 0.0
      %4785 = vmatpush1.msra.mxu0 0.0
      %4786 = vmatprep.subr.mxu0 0.0
      %4787 = vmatpush1.msra.mxu0 0.0
      %4788 = vmatprep.subr.mxu0 0.0
      %4789 = vmatpush1.msra.mxu0 0.0
      %4790 = vmatprep.subr.mxu0 0.0
      %4791 = vmatpush1.msra.mxu0 0.0
      %4792 = vmatprep.subr.mxu0 0.0
      %4793 = vmatpush1.msra.mxu0 0.0
      %4794 = vmatprep.subr.mxu0 0.0
      %4795 = vmatpush1.msra.mxu0 0.0
      %4796 = vmatprep.subr.mxu0 0.0
      %4797 = vmatpush1.msra.mxu0 0.0
      %4798 = vmatprep.subr.mxu0 0.0
      %4799 = vmatpush1.msra.mxu0 0.0
      %4800 = vmatprep.subr.mxu0 0.0
      %4801 = vmatpush1.msra.mxu0 0.0
      %4802 = vmatprep.subr.mxu0 0.0
      %4803 = vmatpush1.msra.mxu0 0.0
      %4804 = vmatprep.subr.mxu0 0.0
      %4805 = vmatpush1.msra.mxu0 0.0
      %4806 = vmatprep.subr.mxu0 0.0
      %4807 = vmatpush1.msra.mxu0 0.0
      %4808 = vmatprep.subr.mxu0 0.0
      %4809 = vmatpush1.msra.mxu0 0.0
      %4810 = vmatprep.subr.mxu0 0.0
      %4811 = vmatpush1.msra.mxu0 0.0
      %4812 = vmatprep.subr.mxu0 0.0
      %4813 = vmatpush1.msra.mxu0 0.0
      %4814 = vmatprep.subr.mxu0 0.0
      %4815 = vmatpush1.msra.mxu0 0.0
      %4816 = vmatprep.subr.mxu0 0.0
      %4817 = vmatpush1.msra.mxu0 0.0
      %4818 = vmatprep.subr.mxu0 0.0
      %4819 = vmatpush1.msra.mxu0 0.0
      %4820 = vmatprep.subr.mxu0 0.0
      %4821 = vmatpush1.msra.mxu0 0.0
      %4822 = vmatprep.subr.mxu0 0.0
      %4823 = vmatpush1.msra.mxu0 0.0
      %4824 = vmatprep.subr.mxu0 0.0
      %4825 = vmatpush1.msra.mxu0 0.0
      %4826 = vmatprep.subr.mxu0 0.0
      %4827 = vmatpush1.msra.mxu0 0.0
      %4828 = vmatprep.mubr.f32.mxu0 0.0
      %4829 = vmatmul.mubr.f32.gmra.mrb[0].mxu0 %v4762
      %v4830 = vpop.f32.mrb[0].mxu0
      %v4831 = vadd.f32 0.0, %v4830
      %v4832 = vpop.f32.mrb[0].mxu0
      %4833 = vdwg.mxu0
      %4835 = vrot.lane.b32.xlu0 %v4681, 9
      %v4836 = vpop.permute.xlu0 %4835
      %4839 = vrot.lane.b32.xlu0 %v4755, 18
      %v4840 = vpop.permute.xlu0 %4839
      %4843 = vrot.lane.b32.xlu0 %v4831, 27
      %v4844 = vpop.permute.xlu0 %4843
      %vm4846 = vcmask 72704
      %v4847 = vsel %vm4846, %v4599, %v4836
      %vm4848 = vcmask 146432
      %v4849 = vsel %vm4848, %v4847, %v4840
      %vm4850 = vcmask 220160
      %v4851 = vsel %vm4850, %v4849, %v4844
      %vm4852 = vcmask 293888
      %4853 = vst.msk [vmem:[%s310] sm:$0xff] %vm4852, %v4851
      %p4854 = scmp.lt.s32.totalorder %s18, 1
      %s4855 = scalar_select %p4854, %s18, 1
      %s4856 = smul.addr %s4855, 8
      %s4857 = scalar_lea.vmem %s7, %s4856
      // Predicated region
      $region49: #{motion_model_forward.1} parent=47 // pred_check
        %p4858 = pneg %p198
      $region50: #{motion_model_forward.1} parent=47 // pred_check_branch
        %4860 = sbr.rel (%p4858) target = $region52
      $region51: #{motion_model_forward.1} parent=47 // pred_region
        _
      $region52: #{motion_model_forward.1} parent=47 // pred_fallthru
        _
    $region48: #{motion_model_forward.1} parent=5 // pred_fallthru
      _
    %p4861 = scmp.le.s32.totalorder 2, %s13
    // Predicated region
    $region53: #{motion_model_forward.1} parent=5 // pred_check
      %p4862 = pneg %p4861
    $region54: #{motion_model_forward.1} parent=5 // pred_check_branch
      %4864 = sbr.rel (%p4862) target = $region56
    $region55: #{motion_model_forward.1} parent=5 // pred_region
      %s4865 = ssub.s32 %s13, 2
      // Predicated region
      $region57: #{motion_model_forward.1} parent=55 // pred_check
        %p4866 = pneg %p204
      $region58: #{motion_model_forward.1} parent=55 // pred_check_branch
        %4868 = sbr.rel (%p4866) target = $region60
      $region59: #{motion_model_forward.1} parent=55 // pred_region
        %p4869 = scmp.lt.s32.totalorder %s19, 1
        %s4870 = scalar_select %p4869, %s19, 1
        %s4871 = smul.addr %s4870, 8
        %s4872 = scalar_lea.vmem %s7, %s4871
      $region60: #{motion_model_forward.1} parent=55 // pred_fallthru
        _
    $region56: #{motion_model_forward.1} parent=5 // pred_fallthru
      _
  $region6: #{motion_model_forward.1} parent=0 // loop_footer
    %s17 = sadd.s32 1, %s13
  $region7: #{motion_model_forward.1} parent=0 // loop_footer_branch
    %12 = sbr.rel target = $region3
  $region8: #{motion_model_forward.1} parent=0 // loop_exit
    _

</llo_original>
